<compile_context>
chip_gen: v7x
topology: tpu7x:2x2x1
jax: 0.10.0
libtpu: 0.0.40
codegen_flags: <defaults>
</compile_context>

<pallas_src>
import math

import jax
import jax.numpy as jnp
import numpy as np
from jax.experimental import pallas as pl
from jax.experimental.pallas import tpu as pltpu

BN_EPS = 1e-5


# ---------------------------------------------------------------------------
# Fused kernel: conv1+ReLU+BN -> conv2+ReLU+BN -> Linear -> log_softmax
# ---------------------------------------------------------------------------
def _fused_forward_kernel(x_ref, sel_ref, gsel_ref, w1_ref, w2_ref, w4_ref,
                          aff_ref, o_ref):
    rows = x_ref.shape[0]            # B * H * W   (row = b*9 + i*3 + j)
    inv_rows = 1.0 / rows
    taps = sel_ref.shape[0]          # 9 (3x3 kernel)
    cout = w1_ref.shape[2]           # 32

    def conv_relu_bn(inp, w_ref, bias, gamma, beta):
        # Conv2d(k=3, p=1) as a sum over the 9 taps of
        #   (shift/mask select) @ inp @ W[tap]   -- all MXU matmuls, in VMEM.
        acc = jnp.zeros((rows, w_ref.shape[2]), jnp.float32)
        for t in range(taps):
            shifted = jnp.dot(sel_ref[t], inp,
                              preferred_element_type=jnp.float32)
            acc = acc + jnp.dot(shifted, w_ref[t],
                                preferred_element_type=jnp.float32)
        h = jnp.maximum(acc + bias, 0.0)                       # bias + ReLU
        # BatchNorm2d, train-mode batch stats (biased var), single pass.
        mean = jnp.sum(h, axis=0, keepdims=True) * inv_rows
        var = jnp.sum(h * h, axis=0, keepdims=True) * inv_rows - mean * mean
        var = jnp.maximum(var, 0.0)
        return (h - mean) * jax.lax.rsqrt(var + BN_EPS) * gamma + beta

    h1 = conv_relu_bn(x_ref[...], w1_ref,
                      aff_ref[0:1, :cout], aff_ref[1:2, :cout],
                      aff_ref[2:3, :cout])
    h2 = conv_relu_bn(h1, w2_ref,
                      aff_ref[3:4, :cout], aff_ref[4:5, :cout],
                      aff_ref[5:6, :cout])

    # fc4 on the NCHW flatten (flat index = c*9 + p), computed directly from
    # the VMEM-resident row-layout h2 via per-position gather matmuls.
    bsz, ncls = o_ref.shape
    logits = jnp.zeros((bsz, ncls), jnp.float32) + aff_ref[6:7, :ncls]
    for p in range(gsel_ref.shape[0]):
        per_pos = jnp.dot(gsel_ref[p], h2,
                          preferred_element_type=jnp.float32)       # (B, 32)
        logits = logits + jnp.dot(per_pos, w4_ref[p],
                                  preferred_element_type=jnp.float32)

    # log_softmax over the 2 classes.
    m = jnp.max(logits, axis=1, keepdims=True)
    lse = m + jnp.log(jnp.sum(jnp.exp(logits - m), axis=1, keepdims=True))
    o_ref[...] = logits - lse


# ---------------------------------------------------------------------------
# Compile-time constant selection matrices (depend only on batch & spatial)
# ---------------------------------------------------------------------------
def _conv_shift_matrices(batch, s):
    """sel[t] @ x_rows == x shifted by tap t (3x3, pad=1), zeros outside."""
    pos = s * s
    r = batch * pos
    sel = np.zeros((9, r, r), np.float32)
    for kh in range(3):
        for kw in range(3):
            t = kh * 3 + kw
            dh, dw = kh - 1, kw - 1
            for b in range(batch):
                for i in range(s):
                    for j in range(s):
                        ii, jj = i + dh, j + dw
                        if 0 <= ii < s and 0 <= jj < s:
                            sel[t, b * pos + i * s + j,
                                b * pos + ii * s + jj] = 1.0
    return sel


def _row_gather_matrices(batch, s):
    """gsel[p] @ h_rows == h[:, :, p]  (one row per batch element)."""
    pos = s * s
    r = batch * pos
    g = np.zeros((pos, batch, r), np.float32)
    for p in range(pos):
        for b in range(batch):
            g[p, b, b * pos + p] = 1.0
    return g


# ---------------------------------------------------------------------------
# Parameters (PyTorch-shaped) and one-time repacking into kernel operands
# ---------------------------------------------------------------------------
def init_params(key):
    """Deterministic synthetic parameters with the module's PyTorch shapes."""
    k1, k2, k3, k4, k5, k6 = jax.random.split(key, 6)
    return {
        "w1": jax.random.normal(k1, (32, 64, 3, 3), jnp.float32) * 0.05,
        "b1": jax.random.normal(k2, (32,), jnp.float32) * 0.05,
        "g1": jnp.ones((32,), jnp.float32),      # BatchNorm2d(32) weight init
        "beta1": jnp.zeros((32,), jnp.float32),  # BatchNorm2d(32) bias init
        "w2": jax.random.normal(k3, (32, 32, 3, 3), jnp.float32) * 0.05,
        "b2": jax.random.normal(k4, (32,), jnp.float32) * 0.05,
        "g2": jnp.ones((32,), jnp.float32),
        "beta2": jnp.zeros((32,), jnp.float32),
        "w4": jax.random.normal(k5, (2, 288), jnp.float32) * 0.05,
        "b4": jax.random.normal(k6, (2,), jnp.float32) * 0.05,
    }


def pack_params(raw):
    """Repack PyTorch-shaped params into kernel operands (done once)."""
    pos = raw["w4"].shape[1] // raw["w2"].shape[0]                # 288/32 = 9
    # per-tap weight slabs: w*t[t, cin, cout] = W[cout, cin, kh, kw], t=kh*3+kw
    w1t = jnp.transpose(raw["w1"], (2, 3, 1, 0)).reshape(9, 64, 32)
    w2t = jnp.transpose(raw["w2"], (2, 3, 1, 0)).reshape(9, 32, 32)
    # fc4 reorganized for the NCHW flatten: w4t[p, c, k] = W4[k, c*9 + p]
    w4t = jnp.transpose(raw["w4"].reshape(2, 32, pos), (2, 1, 0))  # (9, 32, 2)
    # all affine params packed into one (8,128) slab
    aff = jnp.zeros((8, 128), jnp.float32)
    aff = aff.at[0, :32].set(raw["b1"])
    aff = aff.at[1, :32].set(raw["g1"])
    aff = aff.at[2, :32].set(raw["beta1"])
    aff = aff.at[3, :32].set(raw["b2"])
    aff = aff.at[4, :32].set(raw["g2"])
    aff = aff.at[5, :32].set(raw["beta2"])
    aff = aff.at[6, :2].set(raw["b4"])
    return {"w1t": w1t, "w2t": w2t, "w4t": w4t, "aff": aff}


# ---------------------------------------------------------------------------
# Forward wrapper (single pallas_call, whole problem VMEM-resident)
# ---------------------------------------------------------------------------
def dann_conv_source_discriminator_forward(x, packed):
    """Matches DANNConvSourceDiscriminator.forward (train-mode BatchNorm)."""
    b = x.shape[0]
    channel_size = 64
    x = x.reshape(b, channel_size, -1)
    wh = x.shape[2]
    s = int(math.sqrt(wh))
    x = x.reshape(b, channel_size, s, s)
    pos = s * s
    rows = b * pos

    # NCHW -> (rows, channels), row = b*pos + i*s + j  (one tiny copy; all
    # other layout work happens inside the kernel).
    x_rows = jnp.transpose(x.reshape(b, channel_size, pos),
                           (0, 2, 1)).reshape(rows, channel_size)

    sel = jnp.asarray(_conv_shift_matrices(b, s))     # compile-time constants
    gsel = jnp.asarray(_row_gather_matrices(b, s))

    ncls = packed["w4t"].shape[2]
    vmem_spec = lambda: pl.BlockSpec(memory_space=pltpu.MemorySpace.VMEM)
    return pl.pallas_call(
        _fused_forward_kernel,
        out_shape=jax.ShapeDtypeStruct((b, ncls), jnp.float32),
        in_specs=[vmem_spec() for _ in range(7)],
        out_specs=vmem_spec(),
    )(x_rows, sel, gsel, packed["w1t"], packed["w2t"], packed["w4t"],
      packed["aff"])


# ---------------------------------------------------------------------------
# Pure-JAX reference (same train-mode semantics) for a correctness check
# ---------------------------------------------------------------------------
def _reference_forward(x, raw):
    b = x.shape[0]
    h = x.reshape(b, 64, 3, 3)

    def conv_relu_bn(h, w, bias, gamma, beta):
        y = jax.lax.conv_general_dilated(
            h, w, window_strides=(1, 1), padding=((1, 1), (1, 1)),
            dimension_numbers=("NCHW", "OIHW", "NCHW"))
        y = jnp.maximum(y + bias.reshape(1, -1, 1, 1), 0.0)
        mean = jnp.mean(y, axis=(0, 2, 3), keepdims=True)
        var = jnp.mean((y - mean) ** 2, axis=(0, 2, 3), keepdims=True)
        y = (y - mean) * jax.lax.rsqrt(var + BN_EPS)
        return y * gamma.reshape(1, -1, 1, 1) + beta.reshape(1, -1, 1, 1)

    h = conv_relu_bn(h, raw["w1"], raw["b1"], raw["g1"], raw["beta1"])
    h = conv_relu_bn(h, raw["w2"], raw["b2"], raw["g2"], raw["beta2"])
    logits = h.reshape(b, -1) @ raw["w4"].T + raw["b4"]
    return jax.nn.log_softmax(logits, axis=1)


if __name__ == "__main__":
    key = jax.random.PRNGKey(0)
    pkey, xkey = jax.random.split(key)
    raw = init_params(pkey)
    packed = pack_params(raw)

    # Input consistent with the module: Linear(288,2) => 32*3*3 flatten,
    # i.e. (B, 64, 3, 3) input.
    x = jax.random.normal(xkey, (2, 64, 3, 3), jnp.float32)

    fwd = jax.jit(dann_conv_source_discriminator_forward)
    out = jax.block_until_ready(fwd(x, packed))
    assert out.shape == (2, 2)

    ref = jax.block_until_ready(_reference_forward(x, raw))
    np.testing.assert_allclose(np.asarray(out), np.asarray(ref),
                               rtol=1e-4, atol=1e-4)

    print("KERNEL_OK")
</pallas_src>

<mosaic_0001>
module attributes {stable_mosaic.version = 11 : i64} {
  func.func @_fused_forward_kernel(%arg0: memref<18x64xf32, #tpu.memory_space<vmem>>, %arg1: memref<9x18x18xf32, #tpu.memory_space<vmem>>, %arg2: memref<9x2x18xf32, #tpu.memory_space<vmem>>, %arg3: memref<9x64x32xf32, #tpu.memory_space<vmem>>, %arg4: memref<9x32x32xf32, #tpu.memory_space<vmem>>, %arg5: memref<9x32x2xf32, #tpu.memory_space<vmem>>, %arg6: memref<8x128xf32, #tpu.memory_space<vmem>>, %arg7: memref<2x2xf32, #tpu.memory_space<vmem>>) attributes {dimension_semantics = [], scalar_prefetch = 0 : i64, scratch_operands = 0 : i64, tpu.core_type = #tpu.core_type<tc>} {
    %c0 = arith.constant 0 : index
    %c0_0 = arith.constant 0 : index
    %0 = vector.load %arg0[%c0, %c0_0] : memref<18x64xf32, #tpu.memory_space<vmem>>, vector<18x64xf32>
    %c0_1 = arith.constant 0 : index
    %c0_2 = arith.constant 0 : index
    %1 = vector.load %arg6[%c0_1, %c0_2] : memref<8x128xf32, #tpu.memory_space<vmem>>, vector<1x32xf32>
    %c1 = arith.constant 1 : index
    %c0_3 = arith.constant 0 : index
    %2 = vector.load %arg6[%c1, %c0_3] : memref<8x128xf32, #tpu.memory_space<vmem>>, vector<1x32xf32>
    %c2 = arith.constant 2 : index
    %c0_4 = arith.constant 0 : index
    %3 = vector.load %arg6[%c2, %c0_4] : memref<8x128xf32, #tpu.memory_space<vmem>>, vector<1x32xf32>
    %cst = arith.constant 0.000000e+00 : f32
    %4 = vector.broadcast %cst : f32 to vector<18x32xf32>
    %c0_5 = arith.constant 0 : index
    %c0_6 = arith.constant 0 : index
    %c0_7 = arith.constant 0 : index
    %5 = vector.load %arg1[%c0_5, %c0_6, %c0_7] : memref<9x18x18xf32, #tpu.memory_space<vmem>>, vector<1x18x18xf32>
    %6 = vector.shape_cast %5 : vector<1x18x18xf32> to vector<18x18xf32>
    %cst_8 = arith.constant dense<0.000000e+00> : vector<18x64xf32>
    %7 = tpu.matmul %6, %0, %cst_8 {dimension_numbers = #tpu.dot_dimension_numbers<[1], [0], [0], [1], [0, 0, 1, 1], [], []>} : vector<18x18xf32>, vector<18x64xf32>, vector<18x64xf32> -> vector<18x64xf32>
    %c0_9 = arith.constant 0 : index
    %c0_10 = arith.constant 0 : index
    %c0_11 = arith.constant 0 : index
    %8 = vector.load %arg3[%c0_9, %c0_10, %c0_11] : memref<9x64x32xf32, #tpu.memory_space<vmem>>, vector<1x64x32xf32>
    %9 = vector.shape_cast %8 : vector<1x64x32xf32> to vector<64x32xf32>
    %cst_12 = arith.constant dense<0.000000e+00> : vector<18x32xf32>
    %10 = tpu.matmul %7, %9, %cst_12 {dimension_numbers = #tpu.dot_dimension_numbers<[1], [0], [0], [1], [0, 0, 1, 1], [], []>} : vector<18x64xf32>, vector<64x32xf32>, vector<18x32xf32> -> vector<18x32xf32>
    %11 = arith.addf %4, %10 : vector<18x32xf32>
    %c1_13 = arith.constant 1 : index
    %c0_14 = arith.constant 0 : index
    %c0_15 = arith.constant 0 : index
    %12 = vector.load %arg1[%c1_13, %c0_14, %c0_15] : memref<9x18x18xf32, #tpu.memory_space<vmem>>, vector<1x18x18xf32>
    %13 = vector.shape_cast %12 : vector<1x18x18xf32> to vector<18x18xf32>
    %cst_16 = arith.constant dense<0.000000e+00> : vector<18x64xf32>
    %14 = tpu.matmul %13, %0, %cst_16 {dimension_numbers = #tpu.dot_dimension_numbers<[1], [0], [0], [1], [0, 0, 1, 1], [], []>} : vector<18x18xf32>, vector<18x64xf32>, vector<18x64xf32> -> vector<18x64xf32>
    %c1_17 = arith.constant 1 : index
    %c0_18 = arith.constant 0 : index
    %c0_19 = arith.constant 0 : index
    %15 = vector.load %arg3[%c1_17, %c0_18, %c0_19] : memref<9x64x32xf32, #tpu.memory_space<vmem>>, vector<1x64x32xf32>
    %16 = vector.shape_cast %15 : vector<1x64x32xf32> to vector<64x32xf32>
    %cst_20 = arith.constant dense<0.000000e+00> : vector<18x32xf32>
    %17 = tpu.matmul %14, %16, %cst_20 {dimension_numbers = #tpu.dot_dimension_numbers<[1], [0], [0], [1], [0, 0, 1, 1], [], []>} : vector<18x64xf32>, vector<64x32xf32>, vector<18x32xf32> -> vector<18x32xf32>
    %18 = arith.addf %11, %17 : vector<18x32xf32>
    %c2_21 = arith.constant 2 : index
    %c0_22 = arith.constant 0 : index
    %c0_23 = arith.constant 0 : index
    %19 = vector.load %arg1[%c2_21, %c0_22, %c0_23] : memref<9x18x18xf32, #tpu.memory_space<vmem>>, vector<1x18x18xf32>
    %20 = vector.shape_cast %19 : vector<1x18x18xf32> to vector<18x18xf32>
    %cst_24 = arith.constant dense<0.000000e+00> : vector<18x64xf32>
    %21 = tpu.matmul %20, %0, %cst_24 {dimension_numbers = #tpu.dot_dimension_numbers<[1], [0], [0], [1], [0, 0, 1, 1], [], []>} : vector<18x18xf32>, vector<18x64xf32>, vector<18x64xf32> -> vector<18x64xf32>
    %c2_25 = arith.constant 2 : index
    %c0_26 = arith.constant 0 : index
    %c0_27 = arith.constant 0 : index
    %22 = vector.load %arg3[%c2_25, %c0_26, %c0_27] : memref<9x64x32xf32, #tpu.memory_space<vmem>>, vector<1x64x32xf32>
    %23 = vector.shape_cast %22 : vector<1x64x32xf32> to vector<64x32xf32>
    %cst_28 = arith.constant dense<0.000000e+00> : vector<18x32xf32>
    %24 = tpu.matmul %21, %23, %cst_28 {dimension_numbers = #tpu.dot_dimension_numbers<[1], [0], [0], [1], [0, 0, 1, 1], [], []>} : vector<18x64xf32>, vector<64x32xf32>, vector<18x32xf32> -> vector<18x32xf32>
    %25 = arith.addf %18, %24 : vector<18x32xf32>
    %c3 = arith.constant 3 : index
    %c0_29 = arith.constant 0 : index
    %c0_30 = arith.constant 0 : index
    %26 = vector.load %arg1[%c3, %c0_29, %c0_30] : memref<9x18x18xf32, #tpu.memory_space<vmem>>, vector<1x18x18xf32>
    %27 = vector.shape_cast %26 : vector<1x18x18xf32> to vector<18x18xf32>
    %cst_31 = arith.constant dense<0.000000e+00> : vector<18x64xf32>
    %28 = tpu.matmul %27, %0, %cst_31 {dimension_numbers = #tpu.dot_dimension_numbers<[1], [0], [0], [1], [0, 0, 1, 1], [], []>} : vector<18x18xf32>, vector<18x64xf32>, vector<18x64xf32> -> vector<18x64xf32>
    %c3_32 = arith.constant 3 : index
    %c0_33 = arith.constant 0 : index
    %c0_34 = arith.constant 0 : index
    %29 = vector.load %arg3[%c3_32, %c0_33, %c0_34] : memref<9x64x32xf32, #tpu.memory_space<vmem>>, vector<1x64x32xf32>
    %30 = vector.shape_cast %29 : vector<1x64x32xf32> to vector<64x32xf32>
    %cst_35 = arith.constant dense<0.000000e+00> : vector<18x32xf32>
    %31 = tpu.matmul %28, %30, %cst_35 {dimension_numbers = #tpu.dot_dimension_numbers<[1], [0], [0], [1], [0, 0, 1, 1], [], []>} : vector<18x64xf32>, vector<64x32xf32>, vector<18x32xf32> -> vector<18x32xf32>
    %32 = arith.addf %25, %31 : vector<18x32xf32>
    %c4 = arith.constant 4 : index
    %c0_36 = arith.constant 0 : index
    %c0_37 = arith.constant 0 : index
    %33 = vector.load %arg1[%c4, %c0_36, %c0_37] : memref<9x18x18xf32, #tpu.memory_space<vmem>>, vector<1x18x18xf32>
    %34 = vector.shape_cast %33 : vector<1x18x18xf32> to vector<18x18xf32>
    %cst_38 = arith.constant dense<0.000000e+00> : vector<18x64xf32>
    %35 = tpu.matmul %34, %0, %cst_38 {dimension_numbers = #tpu.dot_dimension_numbers<[1], [0], [0], [1], [0, 0, 1, 1], [], []>} : vector<18x18xf32>, vector<18x64xf32>, vector<18x64xf32> -> vector<18x64xf32>
    %c4_39 = arith.constant 4 : index
    %c0_40 = arith.constant 0 : index
    %c0_41 = arith.constant 0 : index
    %36 = vector.load %arg3[%c4_39, %c0_40, %c0_41] : memref<9x64x32xf32, #tpu.memory_space<vmem>>, vector<1x64x32xf32>
    %37 = vector.shape_cast %36 : vector<1x64x32xf32> to vector<64x32xf32>
    %cst_42 = arith.constant dense<0.000000e+00> : vector<18x32xf32>
    %38 = tpu.matmul %35, %37, %cst_42 {dimension_numbers = #tpu.dot_dimension_numbers<[1], [0], [0], [1], [0, 0, 1, 1], [], []>} : vector<18x64xf32>, vector<64x32xf32>, vector<18x32xf32> -> vector<18x32xf32>
    %39 = arith.addf %32, %38 : vector<18x32xf32>
    %c5 = arith.constant 5 : index
    %c0_43 = arith.constant 0 : index
    %c0_44 = arith.constant 0 : index
    %40 = vector.load %arg1[%c5, %c0_43, %c0_44] : memref<9x18x18xf32, #tpu.memory_space<vmem>>, vector<1x18x18xf32>
    %41 = vector.shape_cast %40 : vector<1x18x18xf32> to vector<18x18xf32>
    %cst_45 = arith.constant dense<0.000000e+00> : vector<18x64xf32>
    %42 = tpu.matmul %41, %0, %cst_45 {dimension_numbers = #tpu.dot_dimension_numbers<[1], [0], [0], [1], [0, 0, 1, 1], [], []>} : vector<18x18xf32>, vector<18x64xf32>, vector<18x64xf32> -> vector<18x64xf32>
    %c5_46 = arith.constant 5 : index
    %c0_47 = arith.constant 0 : index
    %c0_48 = arith.constant 0 : index
    %43 = vector.load %arg3[%c5_46, %c0_47, %c0_48] : memref<9x64x32xf32, #tpu.memory_space<vmem>>, vector<1x64x32xf32>
    %44 = vector.shape_cast %43 : vector<1x64x32xf32> to vector<64x32xf32>
    %cst_49 = arith.constant dense<0.000000e+00> : vector<18x32xf32>
    %45 = tpu.matmul %42, %44, %cst_49 {dimension_numbers = #tpu.dot_dimension_numbers<[1], [0], [0], [1], [0, 0, 1, 1], [], []>} : vector<18x64xf32>, vector<64x32xf32>, vector<18x32xf32> -> vector<18x32xf32>
    %46 = arith.addf %39, %45 : vector<18x32xf32>
    %c6 = arith.constant 6 : index
    %c0_50 = arith.constant 0 : index
    %c0_51 = arith.constant 0 : index
    %47 = vector.load %arg1[%c6, %c0_50, %c0_51] : memref<9x18x18xf32, #tpu.memory_space<vmem>>, vector<1x18x18xf32>
    %48 = vector.shape_cast %47 : vector<1x18x18xf32> to vector<18x18xf32>
    %cst_52 = arith.constant dense<0.000000e+00> : vector<18x64xf32>
    %49 = tpu.matmul %48, %0, %cst_52 {dimension_numbers = #tpu.dot_dimension_numbers<[1], [0], [0], [1], [0, 0, 1, 1], [], []>} : vector<18x18xf32>, vector<18x64xf32>, vector<18x64xf32> -> vector<18x64xf32>
    %c6_53 = arith.constant 6 : index
    %c0_54 = arith.constant 0 : index
    %c0_55 = arith.constant 0 : index
    %50 = vector.load %arg3[%c6_53, %c0_54, %c0_55] : memref<9x64x32xf32, #tpu.memory_space<vmem>>, vector<1x64x32xf32>
    %51 = vector.shape_cast %50 : vector<1x64x32xf32> to vector<64x32xf32>
    %cst_56 = arith.constant dense<0.000000e+00> : vector<18x32xf32>
    %52 = tpu.matmul %49, %51, %cst_56 {dimension_numbers = #tpu.dot_dimension_numbers<[1], [0], [0], [1], [0, 0, 1, 1], [], []>} : vector<18x64xf32>, vector<64x32xf32>, vector<18x32xf32> -> vector<18x32xf32>
    %53 = arith.addf %46, %52 : vector<18x32xf32>
    %c7 = arith.constant 7 : index
    %c0_57 = arith.constant 0 : index
    %c0_58 = arith.constant 0 : index
    %54 = vector.load %arg1[%c7, %c0_57, %c0_58] : memref<9x18x18xf32, #tpu.memory_space<vmem>>, vector<1x18x18xf32>
    %55 = vector.shape_cast %54 : vector<1x18x18xf32> to vector<18x18xf32>
    %cst_59 = arith.constant dense<0.000000e+00> : vector<18x64xf32>
    %56 = tpu.matmul %55, %0, %cst_59 {dimension_numbers = #tpu.dot_dimension_numbers<[1], [0], [0], [1], [0, 0, 1, 1], [], []>} : vector<18x18xf32>, vector<18x64xf32>, vector<18x64xf32> -> vector<18x64xf32>
    %c7_60 = arith.constant 7 : index
    %c0_61 = arith.constant 0 : index
    %c0_62 = arith.constant 0 : index
    %57 = vector.load %arg3[%c7_60, %c0_61, %c0_62] : memref<9x64x32xf32, #tpu.memory_space<vmem>>, vector<1x64x32xf32>
    %58 = vector.shape_cast %57 : vector<1x64x32xf32> to vector<64x32xf32>
    %cst_63 = arith.constant dense<0.000000e+00> : vector<18x32xf32>
    %59 = tpu.matmul %56, %58, %cst_63 {dimension_numbers = #tpu.dot_dimension_numbers<[1], [0], [0], [1], [0, 0, 1, 1], [], []>} : vector<18x64xf32>, vector<64x32xf32>, vector<18x32xf32> -> vector<18x32xf32>
    %60 = arith.addf %53, %59 : vector<18x32xf32>
    %c8 = arith.constant 8 : index
    %c0_64 = arith.constant 0 : index
    %c0_65 = arith.constant 0 : index
    %61 = vector.load %arg1[%c8, %c0_64, %c0_65] : memref<9x18x18xf32, #tpu.memory_space<vmem>>, vector<1x18x18xf32>
    %62 = vector.shape_cast %61 : vector<1x18x18xf32> to vector<18x18xf32>
    %cst_66 = arith.constant dense<0.000000e+00> : vector<18x64xf32>
    %63 = tpu.matmul %62, %0, %cst_66 {dimension_numbers = #tpu.dot_dimension_numbers<[1], [0], [0], [1], [0, 0, 1, 1], [], []>} : vector<18x18xf32>, vector<18x64xf32>, vector<18x64xf32> -> vector<18x64xf32>
    %c8_67 = arith.constant 8 : index
    %c0_68 = arith.constant 0 : index
    %c0_69 = arith.constant 0 : index
    %64 = vector.load %arg3[%c8_67, %c0_68, %c0_69] : memref<9x64x32xf32, #tpu.memory_space<vmem>>, vector<1x64x32xf32>
    %65 = vector.shape_cast %64 : vector<1x64x32xf32> to vector<64x32xf32>
    %cst_70 = arith.constant dense<0.000000e+00> : vector<18x32xf32>
    %66 = tpu.matmul %63, %65, %cst_70 {dimension_numbers = #tpu.dot_dimension_numbers<[1], [0], [0], [1], [0, 0, 1, 1], [], []>} : vector<18x64xf32>, vector<64x32xf32>, vector<18x32xf32> -> vector<18x32xf32>
    %67 = arith.addf %60, %66 : vector<18x32xf32>
    %68 = vector.broadcast %1 : vector<1x32xf32> to vector<18x32xf32>
    %69 = arith.addf %67, %68 : vector<18x32xf32>
    %cst_71 = arith.constant 0.000000e+00 : f32
    %70 = vector.broadcast %cst_71 : f32 to vector<18x32xf32>
    %71 = arith.maximumf %69, %70 : vector<18x32xf32>
    %cst_72 = arith.constant dense<0.000000e+00> : vector<32xf32>
    %72 = vector.multi_reduction <add>, %71, %cst_72 [0] : vector<18x32xf32> to vector<32xf32>
    %73 = vector.shape_cast %72 : vector<32xf32> to vector<1x32xf32>
    %cst_73 = arith.constant 0.055555556 : f32
    %74 = vector.broadcast %cst_73 : f32 to vector<1x32xf32>
    %75 = arith.mulf %73, %74 : vector<1x32xf32>
    %76 = arith.mulf %71, %71 : vector<18x32xf32>
    %cst_74 = arith.constant dense<0.000000e+00> : vector<32xf32>
    %77 = vector.multi_reduction <add>, %76, %cst_74 [0] : vector<18x32xf32> to vector<32xf32>
    %78 = vector.shape_cast %77 : vector<32xf32> to vector<1x32xf32>
    %cst_75 = arith.constant 0.055555556 : f32
    %79 = vector.broadcast %cst_75 : f32 to vector<1x32xf32>
    %80 = arith.mulf %78, %79 : vector<1x32xf32>
    %81 = arith.mulf %75, %75 : vector<1x32xf32>
    %82 = arith.subf %80, %81 : vector<1x32xf32>
    %cst_76 = arith.constant 0.000000e+00 : f32
    %83 = vector.broadcast %cst_76 : f32 to vector<1x32xf32>
    %84 = arith.maximumf %82, %83 : vector<1x32xf32>
    %85 = vector.broadcast %75 : vector<1x32xf32> to vector<18x32xf32>
    %86 = arith.subf %71, %85 : vector<18x32xf32>
    %cst_77 = arith.constant 9.99999974E-6 : f32
    %87 = vector.broadcast %cst_77 : f32 to vector<1x32xf32>
    %88 = arith.addf %84, %87 : vector<1x32xf32>
    %89 = math.rsqrt %88 : vector<1x32xf32>
    %90 = vector.broadcast %89 : vector<1x32xf32> to vector<18x32xf32>
    %91 = arith.mulf %86, %90 : vector<18x32xf32>
    %92 = vector.broadcast %2 : vector<1x32xf32> to vector<18x32xf32>
    %93 = arith.mulf %91, %92 : vector<18x32xf32>
    %94 = vector.broadcast %3 : vector<1x32xf32> to vector<18x32xf32>
    %95 = arith.addf %93, %94 : vector<18x32xf32>
    %c3_78 = arith.constant 3 : index
    %c0_79 = arith.constant 0 : index
    %96 = vector.load %arg6[%c3_78, %c0_79] : memref<8x128xf32, #tpu.memory_space<vmem>>, vector<1x32xf32>
    %c4_80 = arith.constant 4 : index
    %c0_81 = arith.constant 0 : index
    %97 = vector.load %arg6[%c4_80, %c0_81] : memref<8x128xf32, #tpu.memory_space<vmem>>, vector<1x32xf32>
    %c5_82 = arith.constant 5 : index
    %c0_83 = arith.constant 0 : index
    %98 = vector.load %arg6[%c5_82, %c0_83] : memref<8x128xf32, #tpu.memory_space<vmem>>, vector<1x32xf32>
    %cst_84 = arith.constant 0.000000e+00 : f32
    %99 = vector.broadcast %cst_84 : f32 to vector<18x32xf32>
    %c0_85 = arith.constant 0 : index
    %c0_86 = arith.constant 0 : index
    %c0_87 = arith.constant 0 : index
    %100 = vector.load %arg1[%c0_85, %c0_86, %c0_87] : memref<9x18x18xf32, #tpu.memory_space<vmem>>, vector<1x18x18xf32>
    %101 = vector.shape_cast %100 : vector<1x18x18xf32> to vector<18x18xf32>
    %cst_88 = arith.constant dense<0.000000e+00> : vector<18x32xf32>
    %102 = tpu.matmul %101, %95, %cst_88 {dimension_numbers = #tpu.dot_dimension_numbers<[1], [0], [0], [1], [0, 0, 1, 1], [], []>} : vector<18x18xf32>, vector<18x32xf32>, vector<18x32xf32> -> vector<18x32xf32>
    %c0_89 = arith.constant 0 : index
    %c0_90 = arith.constant 0 : index
    %c0_91 = arith.constant 0 : index
    %103 = vector.load %arg4[%c0_89, %c0_90, %c0_91] : memref<9x32x32xf32, #tpu.memory_space<vmem>>, vector<1x32x32xf32>
    %104 = vector.shape_cast %103 : vector<1x32x32xf32> to vector<32x32xf32>
    %cst_92 = arith.constant dense<0.000000e+00> : vector<18x32xf32>
    %105 = tpu.matmul %102, %104, %cst_92 {dimension_numbers = #tpu.dot_dimension_numbers<[1], [0], [0], [1], [0, 0, 1, 1], [], []>} : vector<18x32xf32>, vector<32x32xf32>, vector<18x32xf32> -> vector<18x32xf32>
    %106 = arith.addf %99, %105 : vector<18x32xf32>
    %c1_93 = arith.constant 1 : index
    %c0_94 = arith.constant 0 : index
    %c0_95 = arith.constant 0 : index
    %107 = vector.load %arg1[%c1_93, %c0_94, %c0_95] : memref<9x18x18xf32, #tpu.memory_space<vmem>>, vector<1x18x18xf32>
    %108 = vector.shape_cast %107 : vector<1x18x18xf32> to vector<18x18xf32>
    %cst_96 = arith.constant dense<0.000000e+00> : vector<18x32xf32>
    %109 = tpu.matmul %108, %95, %cst_96 {dimension_numbers = #tpu.dot_dimension_numbers<[1], [0], [0], [1], [0, 0, 1, 1], [], []>} : vector<18x18xf32>, vector<18x32xf32>, vector<18x32xf32> -> vector<18x32xf32>
    %c1_97 = arith.constant 1 : index
    %c0_98 = arith.constant 0 : index
    %c0_99 = arith.constant 0 : index
    %110 = vector.load %arg4[%c1_97, %c0_98, %c0_99] : memref<9x32x32xf32, #tpu.memory_space<vmem>>, vector<1x32x32xf32>
    %111 = vector.shape_cast %110 : vector<1x32x32xf32> to vector<32x32xf32>
    %cst_100 = arith.constant dense<0.000000e+00> : vector<18x32xf32>
    %112 = tpu.matmul %109, %111, %cst_100 {dimension_numbers = #tpu.dot_dimension_numbers<[1], [0], [0], [1], [0, 0, 1, 1], [], []>} : vector<18x32xf32>, vector<32x32xf32>, vector<18x32xf32> -> vector<18x32xf32>
    %113 = arith.addf %106, %112 : vector<18x32xf32>
    %c2_101 = arith.constant 2 : index
    %c0_102 = arith.constant 0 : index
    %c0_103 = arith.constant 0 : index
    %114 = vector.load %arg1[%c2_101, %c0_102, %c0_103] : memref<9x18x18xf32, #tpu.memory_space<vmem>>, vector<1x18x18xf32>
    %115 = vector.shape_cast %114 : vector<1x18x18xf32> to vector<18x18xf32>
    %cst_104 = arith.constant dense<0.000000e+00> : vector<18x32xf32>
    %116 = tpu.matmul %115, %95, %cst_104 {dimension_numbers = #tpu.dot_dimension_numbers<[1], [0], [0], [1], [0, 0, 1, 1], [], []>} : vector<18x18xf32>, vector<18x32xf32>, vector<18x32xf32> -> vector<18x32xf32>
    %c2_105 = arith.constant 2 : index
    %c0_106 = arith.constant 0 : index
    %c0_107 = arith.constant 0 : index
    %117 = vector.load %arg4[%c2_105, %c0_106, %c0_107] : memref<9x32x32xf32, #tpu.memory_space<vmem>>, vector<1x32x32xf32>
    %118 = vector.shape_cast %117 : vector<1x32x32xf32> to vector<32x32xf32>
    %cst_108 = arith.constant dense<0.000000e+00> : vector<18x32xf32>
    %119 = tpu.matmul %116, %118, %cst_108 {dimension_numbers = #tpu.dot_dimension_numbers<[1], [0], [0], [1], [0, 0, 1, 1], [], []>} : vector<18x32xf32>, vector<32x32xf32>, vector<18x32xf32> -> vector<18x32xf32>
    %120 = arith.addf %113, %119 : vector<18x32xf32>
    %c3_109 = arith.constant 3 : index
    %c0_110 = arith.constant 0 : index
    %c0_111 = arith.constant 0 : index
    %121 = vector.load %arg1[%c3_109, %c0_110, %c0_111] : memref<9x18x18xf32, #tpu.memory_space<vmem>>, vector<1x18x18xf32>
    %122 = vector.shape_cast %121 : vector<1x18x18xf32> to vector<18x18xf32>
    %cst_112 = arith.constant dense<0.000000e+00> : vector<18x32xf32>
    %123 = tpu.matmul %122, %95, %cst_112 {dimension_numbers = #tpu.dot_dimension_numbers<[1], [0], [0], [1], [0, 0, 1, 1], [], []>} : vector<18x18xf32>, vector<18x32xf32>, vector<18x32xf32> -> vector<18x32xf32>
    %c3_113 = arith.constant 3 : index
    %c0_114 = arith.constant 0 : index
    %c0_115 = arith.constant 0 : index
    %124 = vector.load %arg4[%c3_113, %c0_114, %c0_115] : memref<9x32x32xf32, #tpu.memory_space<vmem>>, vector<1x32x32xf32>
    %125 = vector.shape_cast %124 : vector<1x32x32xf32> to vector<32x32xf32>
    %cst_116 = arith.constant dense<0.000000e+00> : vector<18x32xf32>
    %126 = tpu.matmul %123, %125, %cst_116 {dimension_numbers = #tpu.dot_dimension_numbers<[1], [0], [0], [1], [0, 0, 1, 1], [], []>} : vector<18x32xf32>, vector<32x32xf32>, vector<18x32xf32> -> vector<18x32xf32>
    %127 = arith.addf %120, %126 : vector<18x32xf32>
    %c4_117 = arith.constant 4 : index
    %c0_118 = arith.constant 0 : index
    %c0_119 = arith.constant 0 : index
    %128 = vector.load %arg1[%c4_117, %c0_118, %c0_119] : memref<9x18x18xf32, #tpu.memory_space<vmem>>, vector<1x18x18xf32>
    %129 = vector.shape_cast %128 : vector<1x18x18xf32> to vector<18x18xf32>
    %cst_120 = arith.constant dense<0.000000e+00> : vector<18x32xf32>
    %130 = tpu.matmul %129, %95, %cst_120 {dimension_numbers = #tpu.dot_dimension_numbers<[1], [0], [0], [1], [0, 0, 1, 1], [], []>} : vector<18x18xf32>, vector<18x32xf32>, vector<18x32xf32> -> vector<18x32xf32>
    %c4_121 = arith.constant 4 : index
    %c0_122 = arith.constant 0 : index
    %c0_123 = arith.constant 0 : index
    %131 = vector.load %arg4[%c4_121, %c0_122, %c0_123] : memref<9x32x32xf32, #tpu.memory_space<vmem>>, vector<1x32x32xf32>
    %132 = vector.shape_cast %131 : vector<1x32x32xf32> to vector<32x32xf32>
    %cst_124 = arith.constant dense<0.000000e+00> : vector<18x32xf32>
    %133 = tpu.matmul %130, %132, %cst_124 {dimension_numbers = #tpu.dot_dimension_numbers<[1], [0], [0], [1], [0, 0, 1, 1], [], []>} : vector<18x32xf32>, vector<32x32xf32>, vector<18x32xf32> -> vector<18x32xf32>
    %134 = arith.addf %127, %133 : vector<18x32xf32>
    %c5_125 = arith.constant 5 : index
    %c0_126 = arith.constant 0 : index
    %c0_127 = arith.constant 0 : index
    %135 = vector.load %arg1[%c5_125, %c0_126, %c0_127] : memref<9x18x18xf32, #tpu.memory_space<vmem>>, vector<1x18x18xf32>
    %136 = vector.shape_cast %135 : vector<1x18x18xf32> to vector<18x18xf32>
    %cst_128 = arith.constant dense<0.000000e+00> : vector<18x32xf32>
    %137 = tpu.matmul %136, %95, %cst_128 {dimension_numbers = #tpu.dot_dimension_numbers<[1], [0], [0], [1], [0, 0, 1, 1], [], []>} : vector<18x18xf32>, vector<18x32xf32>, vector<18x32xf32> -> vector<18x32xf32>
    %c5_129 = arith.constant 5 : index
    %c0_130 = arith.constant 0 : index
    %c0_131 = arith.constant 0 : index
    %138 = vector.load %arg4[%c5_129, %c0_130, %c0_131] : memref<9x32x32xf32, #tpu.memory_space<vmem>>, vector<1x32x32xf32>
    %139 = vector.shape_cast %138 : vector<1x32x32xf32> to vector<32x32xf32>
    %cst_132 = arith.constant dense<0.000000e+00> : vector<18x32xf32>
    %140 = tpu.matmul %137, %139, %cst_132 {dimension_numbers = #tpu.dot_dimension_numbers<[1], [0], [0], [1], [0, 0, 1, 1], [], []>} : vector<18x32xf32>, vector<32x32xf32>, vector<18x32xf32> -> vector<18x32xf32>
    %141 = arith.addf %134, %140 : vector<18x32xf32>
    %c6_133 = arith.constant 6 : index
    %c0_134 = arith.constant 0 : index
    %c0_135 = arith.constant 0 : index
    %142 = vector.load %arg1[%c6_133, %c0_134, %c0_135] : memref<9x18x18xf32, #tpu.memory_space<vmem>>, vector<1x18x18xf32>
    %143 = vector.shape_cast %142 : vector<1x18x18xf32> to vector<18x18xf32>
    %cst_136 = arith.constant dense<0.000000e+00> : vector<18x32xf32>
    %144 = tpu.matmul %143, %95, %cst_136 {dimension_numbers = #tpu.dot_dimension_numbers<[1], [0], [0], [1], [0, 0, 1, 1], [], []>} : vector<18x18xf32>, vector<18x32xf32>, vector<18x32xf32> -> vector<18x32xf32>
    %c6_137 = arith.constant 6 : index
    %c0_138 = arith.constant 0 : index
    %c0_139 = arith.constant 0 : index
    %145 = vector.load %arg4[%c6_137, %c0_138, %c0_139] : memref<9x32x32xf32, #tpu.memory_space<vmem>>, vector<1x32x32xf32>
    %146 = vector.shape_cast %145 : vector<1x32x32xf32> to vector<32x32xf32>
    %cst_140 = arith.constant dense<0.000000e+00> : vector<18x32xf32>
    %147 = tpu.matmul %144, %146, %cst_140 {dimension_numbers = #tpu.dot_dimension_numbers<[1], [0], [0], [1], [0, 0, 1, 1], [], []>} : vector<18x32xf32>, vector<32x32xf32>, vector<18x32xf32> -> vector<18x32xf32>
    %148 = arith.addf %141, %147 : vector<18x32xf32>
    %c7_141 = arith.constant 7 : index
    %c0_142 = arith.constant 0 : index
    %c0_143 = arith.constant 0 : index
    %149 = vector.load %arg1[%c7_141, %c0_142, %c0_143] : memref<9x18x18xf32, #tpu.memory_space<vmem>>, vector<1x18x18xf32>
    %150 = vector.shape_cast %149 : vector<1x18x18xf32> to vector<18x18xf32>
    %cst_144 = arith.constant dense<0.000000e+00> : vector<18x32xf32>
    %151 = tpu.matmul %150, %95, %cst_144 {dimension_numbers = #tpu.dot_dimension_numbers<[1], [0], [0], [1], [0, 0, 1, 1], [], []>} : vector<18x18xf32>, vector<18x32xf32>, vector<18x32xf32> -> vector<18x32xf32>
    %c7_145 = arith.constant 7 : index
    %c0_146 = arith.constant 0 : index
    %c0_147 = arith.constant 0 : index
    %152 = vector.load %arg4[%c7_145, %c0_146, %c0_147] : memref<9x32x32xf32, #tpu.memory_space<vmem>>, vector<1x32x32xf32>
    %153 = vector.shape_cast %152 : vector<1x32x32xf32> to vector<32x32xf32>
    %cst_148 = arith.constant dense<0.000000e+00> : vector<18x32xf32>
    %154 = tpu.matmul %151, %153, %cst_148 {dimension_numbers = #tpu.dot_dimension_numbers<[1], [0], [0], [1], [0, 0, 1, 1], [], []>} : vector<18x32xf32>, vector<32x32xf32>, vector<18x32xf32> -> vector<18x32xf32>
    %155 = arith.addf %148, %154 : vector<18x32xf32>
    %c8_149 = arith.constant 8 : index
    %c0_150 = arith.constant 0 : index
    %c0_151 = arith.constant 0 : index
    %156 = vector.load %arg1[%c8_149, %c0_150, %c0_151] : memref<9x18x18xf32, #tpu.memory_space<vmem>>, vector<1x18x18xf32>
    %157 = vector.shape_cast %156 : vector<1x18x18xf32> to vector<18x18xf32>
    %cst_152 = arith.constant dense<0.000000e+00> : vector<18x32xf32>
    %158 = tpu.matmul %157, %95, %cst_152 {dimension_numbers = #tpu.dot_dimension_numbers<[1], [0], [0], [1], [0, 0, 1, 1], [], []>} : vector<18x18xf32>, vector<18x32xf32>, vector<18x32xf32> -> vector<18x32xf32>
    %c8_153 = arith.constant 8 : index
    %c0_154 = arith.constant 0 : index
    %c0_155 = arith.constant 0 : index
    %159 = vector.load %arg4[%c8_153, %c0_154, %c0_155] : memref<9x32x32xf32, #tpu.memory_space<vmem>>, vector<1x32x32xf32>
    %160 = vector.shape_cast %159 : vector<1x32x32xf32> to vector<32x32xf32>
    %cst_156 = arith.constant dense<0.000000e+00> : vector<18x32xf32>
    %161 = tpu.matmul %158, %160, %cst_156 {dimension_numbers = #tpu.dot_dimension_numbers<[1], [0], [0], [1], [0, 0, 1, 1], [], []>} : vector<18x32xf32>, vector<32x32xf32>, vector<18x32xf32> -> vector<18x32xf32>
    %162 = arith.addf %155, %161 : vector<18x32xf32>
    %163 = vector.broadcast %96 : vector<1x32xf32> to vector<18x32xf32>
    %164 = arith.addf %162, %163 : vector<18x32xf32>
    %cst_157 = arith.constant 0.000000e+00 : f32
    %165 = vector.broadcast %cst_157 : f32 to vector<18x32xf32>
    %166 = arith.maximumf %164, %165 : vector<18x32xf32>
    %cst_158 = arith.constant dense<0.000000e+00> : vector<32xf32>
    %167 = vector.multi_reduction <add>, %166, %cst_158 [0] : vector<18x32xf32> to vector<32xf32>
    %168 = vector.shape_cast %167 : vector<32xf32> to vector<1x32xf32>
    %cst_159 = arith.constant 0.055555556 : f32
    %169 = vector.broadcast %cst_159 : f32 to vector<1x32xf32>
    %170 = arith.mulf %168, %169 : vector<1x32xf32>
    %171 = arith.mulf %166, %166 : vector<18x32xf32>
    %cst_160 = arith.constant dense<0.000000e+00> : vector<32xf32>
    %172 = vector.multi_reduction <add>, %171, %cst_160 [0] : vector<18x32xf32> to vector<32xf32>
    %173 = vector.shape_cast %172 : vector<32xf32> to vector<1x32xf32>
    %cst_161 = arith.constant 0.055555556 : f32
    %174 = vector.broadcast %cst_161 : f32 to vector<1x32xf32>
    %175 = arith.mulf %173, %174 : vector<1x32xf32>
    %176 = arith.mulf %170, %170 : vector<1x32xf32>
    %177 = arith.subf %175, %176 : vector<1x32xf32>
    %cst_162 = arith.constant 0.000000e+00 : f32
    %178 = vector.broadcast %cst_162 : f32 to vector<1x32xf32>
    %179 = arith.maximumf %177, %178 : vector<1x32xf32>
    %180 = vector.broadcast %170 : vector<1x32xf32> to vector<18x32xf32>
    %181 = arith.subf %166, %180 : vector<18x32xf32>
    %cst_163 = arith.constant 9.99999974E-6 : f32
    %182 = vector.broadcast %cst_163 : f32 to vector<1x32xf32>
    %183 = arith.addf %179, %182 : vector<1x32xf32>
    %184 = math.rsqrt %183 : vector<1x32xf32>
    %185 = vector.broadcast %184 : vector<1x32xf32> to vector<18x32xf32>
    %186 = arith.mulf %181, %185 : vector<18x32xf32>
    %187 = vector.broadcast %97 : vector<1x32xf32> to vector<18x32xf32>
    %188 = arith.mulf %186, %187 : vector<18x32xf32>
    %189 = vector.broadcast %98 : vector<1x32xf32> to vector<18x32xf32>
    %190 = arith.addf %188, %189 : vector<18x32xf32>
    %cst_164 = arith.constant 0.000000e+00 : f32
    %191 = vector.broadcast %cst_164 : f32 to vector<2x2xf32>
    %c6_165 = arith.constant 6 : index
    %c0_166 = arith.constant 0 : index
    %192 = vector.load %arg6[%c6_165, %c0_166] : memref<8x128xf32, #tpu.memory_space<vmem>>, vector<1x2xf32>
    %193 = vector.broadcast %192 : vector<1x2xf32> to vector<2x2xf32>
    %194 = arith.addf %191, %193 : vector<2x2xf32>
    %c0_167 = arith.constant 0 : index
    %c0_168 = arith.constant 0 : index
    %c0_169 = arith.constant 0 : index
    %195 = vector.load %arg2[%c0_167, %c0_168, %c0_169] : memref<9x2x18xf32, #tpu.memory_space<vmem>>, vector<1x2x18xf32>
    %196 = vector.shape_cast %195 : vector<1x2x18xf32> to vector<2x18xf32>
    %cst_170 = arith.constant dense<0.000000e+00> : vector<2x32xf32>
    %197 = tpu.matmul %196, %190, %cst_170 {dimension_numbers = #tpu.dot_dimension_numbers<[1], [0], [0], [1], [0, 0, 1, 1], [], []>} : vector<2x18xf32>, vector<18x32xf32>, vector<2x32xf32> -> vector<2x32xf32>
    %c0_171 = arith.constant 0 : index
    %c0_172 = arith.constant 0 : index
    %c0_173 = arith.constant 0 : index
    %198 = vector.load %arg5[%c0_171, %c0_172, %c0_173] : memref<9x32x2xf32, #tpu.memory_space<vmem>>, vector<1x32x2xf32>
    %199 = vector.shape_cast %198 : vector<1x32x2xf32> to vector<32x2xf32>
    %cst_174 = arith.constant dense<0.000000e+00> : vector<2x2xf32>
    %200 = tpu.matmul %197, %199, %cst_174 {dimension_numbers = #tpu.dot_dimension_numbers<[1], [0], [0], [1], [0, 0, 1, 1], [], []>} : vector<2x32xf32>, vector<32x2xf32>, vector<2x2xf32> -> vector<2x2xf32>
    %201 = arith.addf %194, %200 : vector<2x2xf32>
    %c1_175 = arith.constant 1 : index
    %c0_176 = arith.constant 0 : index
    %c0_177 = arith.constant 0 : index
    %202 = vector.load %arg2[%c1_175, %c0_176, %c0_177] : memref<9x2x18xf32, #tpu.memory_space<vmem>>, vector<1x2x18xf32>
    %203 = vector.shape_cast %202 : vector<1x2x18xf32> to vector<2x18xf32>
    %cst_178 = arith.constant dense<0.000000e+00> : vector<2x32xf32>
    %204 = tpu.matmul %203, %190, %cst_178 {dimension_numbers = #tpu.dot_dimension_numbers<[1], [0], [0], [1], [0, 0, 1, 1], [], []>} : vector<2x18xf32>, vector<18x32xf32>, vector<2x32xf32> -> vector<2x32xf32>
    %c1_179 = arith.constant 1 : index
    %c0_180 = arith.constant 0 : index
    %c0_181 = arith.constant 0 : index
    %205 = vector.load %arg5[%c1_179, %c0_180, %c0_181] : memref<9x32x2xf32, #tpu.memory_space<vmem>>, vector<1x32x2xf32>
    %206 = vector.shape_cast %205 : vector<1x32x2xf32> to vector<32x2xf32>
    %cst_182 = arith.constant dense<0.000000e+00> : vector<2x2xf32>
    %207 = tpu.matmul %204, %206, %cst_182 {dimension_numbers = #tpu.dot_dimension_numbers<[1], [0], [0], [1], [0, 0, 1, 1], [], []>} : vector<2x32xf32>, vector<32x2xf32>, vector<2x2xf32> -> vector<2x2xf32>
    %208 = arith.addf %201, %207 : vector<2x2xf32>
    %c2_183 = arith.constant 2 : index
    %c0_184 = arith.constant 0 : index
    %c0_185 = arith.constant 0 : index
    %209 = vector.load %arg2[%c2_183, %c0_184, %c0_185] : memref<9x2x18xf32, #tpu.memory_space<vmem>>, vector<1x2x18xf32>
    %210 = vector.shape_cast %209 : vector<1x2x18xf32> to vector<2x18xf32>
    %cst_186 = arith.constant dense<0.000000e+00> : vector<2x32xf32>
    %211 = tpu.matmul %210, %190, %cst_186 {dimension_numbers = #tpu.dot_dimension_numbers<[1], [0], [0], [1], [0, 0, 1, 1], [], []>} : vector<2x18xf32>, vector<18x32xf32>, vector<2x32xf32> -> vector<2x32xf32>
    %c2_187 = arith.constant 2 : index
    %c0_188 = arith.constant 0 : index
    %c0_189 = arith.constant 0 : index
    %212 = vector.load %arg5[%c2_187, %c0_188, %c0_189] : memref<9x32x2xf32, #tpu.memory_space<vmem>>, vector<1x32x2xf32>
    %213 = vector.shape_cast %212 : vector<1x32x2xf32> to vector<32x2xf32>
    %cst_190 = arith.constant dense<0.000000e+00> : vector<2x2xf32>
    %214 = tpu.matmul %211, %213, %cst_190 {dimension_numbers = #tpu.dot_dimension_numbers<[1], [0], [0], [1], [0, 0, 1, 1], [], []>} : vector<2x32xf32>, vector<32x2xf32>, vector<2x2xf32> -> vector<2x2xf32>
    %215 = arith.addf %208, %214 : vector<2x2xf32>
    %c3_191 = arith.constant 3 : index
    %c0_192 = arith.constant 0 : index
    %c0_193 = arith.constant 0 : index
    %216 = vector.load %arg2[%c3_191, %c0_192, %c0_193] : memref<9x2x18xf32, #tpu.memory_space<vmem>>, vector<1x2x18xf32>
    %217 = vector.shape_cast %216 : vector<1x2x18xf32> to vector<2x18xf32>
    %cst_194 = arith.constant dense<0.000000e+00> : vector<2x32xf32>
    %218 = tpu.matmul %217, %190, %cst_194 {dimension_numbers = #tpu.dot_dimension_numbers<[1], [0], [0], [1], [0, 0, 1, 1], [], []>} : vector<2x18xf32>, vector<18x32xf32>, vector<2x32xf32> -> vector<2x32xf32>
    %c3_195 = arith.constant 3 : index
    %c0_196 = arith.constant 0 : index
    %c0_197 = arith.constant 0 : index
    %219 = vector.load %arg5[%c3_195, %c0_196, %c0_197] : memref<9x32x2xf32, #tpu.memory_space<vmem>>, vector<1x32x2xf32>
    %220 = vector.shape_cast %219 : vector<1x32x2xf32> to vector<32x2xf32>
    %cst_198 = arith.constant dense<0.000000e+00> : vector<2x2xf32>
    %221 = tpu.matmul %218, %220, %cst_198 {dimension_numbers = #tpu.dot_dimension_numbers<[1], [0], [0], [1], [0, 0, 1, 1], [], []>} : vector<2x32xf32>, vector<32x2xf32>, vector<2x2xf32> -> vector<2x2xf32>
    %222 = arith.addf %215, %221 : vector<2x2xf32>
    %c4_199 = arith.constant 4 : index
    %c0_200 = arith.constant 0 : index
    %c0_201 = arith.constant 0 : index
    %223 = vector.load %arg2[%c4_199, %c0_200, %c0_201] : memref<9x2x18xf32, #tpu.memory_space<vmem>>, vector<1x2x18xf32>
    %224 = vector.shape_cast %223 : vector<1x2x18xf32> to vector<2x18xf32>
    %cst_202 = arith.constant dense<0.000000e+00> : vector<2x32xf32>
    %225 = tpu.matmul %224, %190, %cst_202 {dimension_numbers = #tpu.dot_dimension_numbers<[1], [0], [0], [1], [0, 0, 1, 1], [], []>} : vector<2x18xf32>, vector<18x32xf32>, vector<2x32xf32> -> vector<2x32xf32>
    %c4_203 = arith.constant 4 : index
    %c0_204 = arith.constant 0 : index
    %c0_205 = arith.constant 0 : index
    %226 = vector.load %arg5[%c4_203, %c0_204, %c0_205] : memref<9x32x2xf32, #tpu.memory_space<vmem>>, vector<1x32x2xf32>
    %227 = vector.shape_cast %226 : vector<1x32x2xf32> to vector<32x2xf32>
    %cst_206 = arith.constant dense<0.000000e+00> : vector<2x2xf32>
    %228 = tpu.matmul %225, %227, %cst_206 {dimension_numbers = #tpu.dot_dimension_numbers<[1], [0], [0], [1], [0, 0, 1, 1], [], []>} : vector<2x32xf32>, vector<32x2xf32>, vector<2x2xf32> -> vector<2x2xf32>
    %229 = arith.addf %222, %228 : vector<2x2xf32>
    %c5_207 = arith.constant 5 : index
    %c0_208 = arith.constant 0 : index
    %c0_209 = arith.constant 0 : index
    %230 = vector.load %arg2[%c5_207, %c0_208, %c0_209] : memref<9x2x18xf32, #tpu.memory_space<vmem>>, vector<1x2x18xf32>
    %231 = vector.shape_cast %230 : vector<1x2x18xf32> to vector<2x18xf32>
    %cst_210 = arith.constant dense<0.000000e+00> : vector<2x32xf32>
    %232 = tpu.matmul %231, %190, %cst_210 {dimension_numbers = #tpu.dot_dimension_numbers<[1], [0], [0], [1], [0, 0, 1, 1], [], []>} : vector<2x18xf32>, vector<18x32xf32>, vector<2x32xf32> -> vector<2x32xf32>
    %c5_211 = arith.constant 5 : index
    %c0_212 = arith.constant 0 : index
    %c0_213 = arith.constant 0 : index
    %233 = vector.load %arg5[%c5_211, %c0_212, %c0_213] : memref<9x32x2xf32, #tpu.memory_space<vmem>>, vector<1x32x2xf32>
    %234 = vector.shape_cast %233 : vector<1x32x2xf32> to vector<32x2xf32>
    %cst_214 = arith.constant dense<0.000000e+00> : vector<2x2xf32>
    %235 = tpu.matmul %232, %234, %cst_214 {dimension_numbers = #tpu.dot_dimension_numbers<[1], [0], [0], [1], [0, 0, 1, 1], [], []>} : vector<2x32xf32>, vector<32x2xf32>, vector<2x2xf32> -> vector<2x2xf32>
    %236 = arith.addf %229, %235 : vector<2x2xf32>
    %c6_215 = arith.constant 6 : index
    %c0_216 = arith.constant 0 : index
    %c0_217 = arith.constant 0 : index
    %237 = vector.load %arg2[%c6_215, %c0_216, %c0_217] : memref<9x2x18xf32, #tpu.memory_space<vmem>>, vector<1x2x18xf32>
    %238 = vector.shape_cast %237 : vector<1x2x18xf32> to vector<2x18xf32>
    %cst_218 = arith.constant dense<0.000000e+00> : vector<2x32xf32>
    %239 = tpu.matmul %238, %190, %cst_218 {dimension_numbers = #tpu.dot_dimension_numbers<[1], [0], [0], [1], [0, 0, 1, 1], [], []>} : vector<2x18xf32>, vector<18x32xf32>, vector<2x32xf32> -> vector<2x32xf32>
    %c6_219 = arith.constant 6 : index
    %c0_220 = arith.constant 0 : index
    %c0_221 = arith.constant 0 : index
    %240 = vector.load %arg5[%c6_219, %c0_220, %c0_221] : memref<9x32x2xf32, #tpu.memory_space<vmem>>, vector<1x32x2xf32>
    %241 = vector.shape_cast %240 : vector<1x32x2xf32> to vector<32x2xf32>
    %cst_222 = arith.constant dense<0.000000e+00> : vector<2x2xf32>
    %242 = tpu.matmul %239, %241, %cst_222 {dimension_numbers = #tpu.dot_dimension_numbers<[1], [0], [0], [1], [0, 0, 1, 1], [], []>} : vector<2x32xf32>, vector<32x2xf32>, vector<2x2xf32> -> vector<2x2xf32>
    %243 = arith.addf %236, %242 : vector<2x2xf32>
    %c7_223 = arith.constant 7 : index
    %c0_224 = arith.constant 0 : index
    %c0_225 = arith.constant 0 : index
    %244 = vector.load %arg2[%c7_223, %c0_224, %c0_225] : memref<9x2x18xf32, #tpu.memory_space<vmem>>, vector<1x2x18xf32>
    %245 = vector.shape_cast %244 : vector<1x2x18xf32> to vector<2x18xf32>
    %cst_226 = arith.constant dense<0.000000e+00> : vector<2x32xf32>
    %246 = tpu.matmul %245, %190, %cst_226 {dimension_numbers = #tpu.dot_dimension_numbers<[1], [0], [0], [1], [0, 0, 1, 1], [], []>} : vector<2x18xf32>, vector<18x32xf32>, vector<2x32xf32> -> vector<2x32xf32>
    %c7_227 = arith.constant 7 : index
    %c0_228 = arith.constant 0 : index
    %c0_229 = arith.constant 0 : index
    %247 = vector.load %arg5[%c7_227, %c0_228, %c0_229] : memref<9x32x2xf32, #tpu.memory_space<vmem>>, vector<1x32x2xf32>
    %248 = vector.shape_cast %247 : vector<1x32x2xf32> to vector<32x2xf32>
    %cst_230 = arith.constant dense<0.000000e+00> : vector<2x2xf32>
    %249 = tpu.matmul %246, %248, %cst_230 {dimension_numbers = #tpu.dot_dimension_numbers<[1], [0], [0], [1], [0, 0, 1, 1], [], []>} : vector<2x32xf32>, vector<32x2xf32>, vector<2x2xf32> -> vector<2x2xf32>
    %250 = arith.addf %243, %249 : vector<2x2xf32>
    %c8_231 = arith.constant 8 : index
    %c0_232 = arith.constant 0 : index
    %c0_233 = arith.constant 0 : index
    %251 = vector.load %arg2[%c8_231, %c0_232, %c0_233] : memref<9x2x18xf32, #tpu.memory_space<vmem>>, vector<1x2x18xf32>
    %252 = vector.shape_cast %251 : vector<1x2x18xf32> to vector<2x18xf32>
    %cst_234 = arith.constant dense<0.000000e+00> : vector<2x32xf32>
    %253 = tpu.matmul %252, %190, %cst_234 {dimension_numbers = #tpu.dot_dimension_numbers<[1], [0], [0], [1], [0, 0, 1, 1], [], []>} : vector<2x18xf32>, vector<18x32xf32>, vector<2x32xf32> -> vector<2x32xf32>
    %c8_235 = arith.constant 8 : index
    %c0_236 = arith.constant 0 : index
    %c0_237 = arith.constant 0 : index
    %254 = vector.load %arg5[%c8_235, %c0_236, %c0_237] : memref<9x32x2xf32, #tpu.memory_space<vmem>>, vector<1x32x2xf32>
    %255 = vector.shape_cast %254 : vector<1x32x2xf32> to vector<32x2xf32>
    %cst_238 = arith.constant dense<0.000000e+00> : vector<2x2xf32>
    %256 = tpu.matmul %253, %255, %cst_238 {dimension_numbers = #tpu.dot_dimension_numbers<[1], [0], [0], [1], [0, 0, 1, 1], [], []>} : vector<2x32xf32>, vector<32x2xf32>, vector<2x2xf32> -> vector<2x2xf32>
    %257 = arith.addf %250, %256 : vector<2x2xf32>
    %cst_239 = arith.constant dense<0xFF800000> : vector<2xf32>
    %258 = vector.multi_reduction <maximumf>, %257, %cst_239 [1] : vector<2x2xf32> to vector<2xf32>
    %259 = vector.shape_cast %258 : vector<2xf32> to vector<2x1xf32>
    %260 = vector.broadcast %259 : vector<2x1xf32> to vector<2x2xf32>
    %261 = arith.subf %257, %260 : vector<2x2xf32>
    %262 = math.exp %261 : vector<2x2xf32>
    %cst_240 = arith.constant dense<0.000000e+00> : vector<2xf32>
    %263 = vector.multi_reduction <add>, %262, %cst_240 [1] : vector<2x2xf32> to vector<2xf32>
    %264 = vector.shape_cast %263 : vector<2xf32> to vector<2x1xf32>
    %265 = math.log %264 : vector<2x1xf32>
    %266 = arith.addf %259, %265 : vector<2x1xf32>
    %267 = vector.broadcast %266 : vector<2x1xf32> to vector<2x2xf32>
    %268 = arith.subf %257, %267 : vector<2x2xf32>
    %c0_241 = arith.constant 0 : index
    %c0_242 = arith.constant 0 : index
    %269 = vector.load %arg7[%c0_241, %c0_242] : memref<2x2xf32, #tpu.memory_space<vmem>>, vector<2x2xf32>
    tpu.vector_store %arg7[%c0_241, %c0_242], %268 {strides = array<i32>} : memref<2x2xf32, #tpu.memory_space<vmem>>, vector<2x2xf32>,
    return
  }
}

</mosaic_0001>

<llo_original>
// kernel: dann_conv_source_discriminator_forward.1
$region0: #{dann_conv_source_discriminator_forward.1}
  #allocation0 [shape = 'u32[]', space=smem, size = 0x4, offset = 0x4, fixed_abs, tag = 'smem constant byte address 0x4 - core index']
  #allocation1 [shape = 'u32[144,128]{1,0:T(1,128)}', space=vmem, size = 0x12000, scoped, tag = 'internal scratch']
  %s0 = inlined_call_operand.vmem [shape: f32[18,64], index: 0, kind: input, shape index: {}]
  %s1 = inlined_call_operand.vmem [shape: f32[9,18,18], index: 1, kind: input, shape index: {}]
  %s2 = inlined_call_operand.vmem [shape: f32[9,2,18], index: 2, kind: input, shape index: {}]
  %s3 = inlined_call_operand.vmem [shape: f32[9,64,32], index: 3, kind: input, shape index: {}]
  %s4 = inlined_call_operand.vmem [shape: f32[9,32,32], index: 4, kind: input, shape index: {}]
  %s5 = inlined_call_operand.vmem [shape: f32[9,32,2], index: 5, kind: input, shape index: {}]
  %s6 = inlined_call_operand.vmem [shape: f32[8,128], index: 6, kind: input, shape index: {}]
  %s7 = inlined_call_operand.hbm [shape: f32[2,2], index: 7, kind: output, shape index: {}]
  %s8 = sld [smem:[#allocation0]]
  $region38: #{dann_conv_source_discriminator_forward.1} parent=0
    _
  %s10 = ssub.s32 1, %s8
  %s11 = scalar_select 0, %s10, %s8
  $region1: #{dann_conv_source_discriminator_forward.1} parent=0
    #allocation2 [shape = 'u8[1024]{0}', space=vmem, size = 0x400, scoped, tag = 'output window, operand 0, single buffered']
    #allocation3 [shape = 's32[1]{0}', space=sflag, size = 0x4, scoped, tag = 'scoped memory for dann_conv_source_discriminator_forward.1']
    %12 = vsyncpa [#allocation3], 0
    // Predicated region
    $region2: #{dann_conv_source_discriminator_forward.1} parent=1 // pred_check
      _
    $region3: #{dann_conv_source_discriminator_forward.1} parent=1 // pred_check_branch
      %14 = sbr.rel (0) target = $region5
    $region4: #{dann_conv_source_discriminator_forward.1} parent=1 // pred_region
      _
    $region5: #{dann_conv_source_discriminator_forward.1} parent=1 // pred_fallthru
      _
    // Predicated region
    $region6: #{dann_conv_source_discriminator_forward.1} parent=1 // pred_check
      _
    $region7: #{dann_conv_source_discriminator_forward.1} parent=1 // pred_check_branch
      %16 = sbr.rel (0) target = $region9
    $region8: #{dann_conv_source_discriminator_forward.1} parent=1 // pred_region
      _
    $region9: #{dann_conv_source_discriminator_forward.1} parent=1 // pred_fallthru
      _
    // Predicated region
    $region10: #{dann_conv_source_discriminator_forward.1} parent=1 // pred_check
      _
    $region11: #{dann_conv_source_discriminator_forward.1} parent=1 // pred_check_branch
      %18 = sbr.rel (0) target = $region13
    $region12: #{dann_conv_source_discriminator_forward.1} parent=1 // pred_region
      _
    $region13: #{dann_conv_source_discriminator_forward.1} parent=1 // pred_fallthru
      _
    // Predicated region
    $region14: #{dann_conv_source_discriminator_forward.1} parent=1 // pred_check
      _
    $region15: #{dann_conv_source_discriminator_forward.1} parent=1 // pred_check_branch
      %20 = sbr.rel (0) target = $region17
    $region16: #{dann_conv_source_discriminator_forward.1} parent=1 // pred_region
      _
    $region17: #{dann_conv_source_discriminator_forward.1} parent=1 // pred_fallthru
      _
    // Predicated region
    $region18: #{dann_conv_source_discriminator_forward.1} parent=1 // pred_check
      _
    $region19: #{dann_conv_source_discriminator_forward.1} parent=1 // pred_check_branch
      %22 = sbr.rel (0) target = $region21
    $region20: #{dann_conv_source_discriminator_forward.1} parent=1 // pred_region
      _
    $region21: #{dann_conv_source_discriminator_forward.1} parent=1 // pred_fallthru
      _
    // Predicated region
    $region22: #{dann_conv_source_discriminator_forward.1} parent=1 // pred_check
      _
    $region23: #{dann_conv_source_discriminator_forward.1} parent=1 // pred_check_branch
      %24 = sbr.rel (0) target = $region25
    $region24: #{dann_conv_source_discriminator_forward.1} parent=1 // pred_region
      _
    $region25: #{dann_conv_source_discriminator_forward.1} parent=1 // pred_fallthru
      _
    // Predicated region
    $region26: #{dann_conv_source_discriminator_forward.1} parent=1 // pred_check
      _
    $region27: #{dann_conv_source_discriminator_forward.1} parent=1 // pred_check_branch
      %26 = sbr.rel (0) target = $region29
    $region28: #{dann_conv_source_discriminator_forward.1} parent=1 // pred_region
      _
    $region29: #{dann_conv_source_discriminator_forward.1} parent=1 // pred_fallthru
      _
    %v27 = vld [vmem:[%s0] sm:$0xff]
    %v28 = vld [vmem:[%s0 + $0x8] sm:$0xff]
    %v29 = vld [vmem:[%s0 + $0x10] sm:$0x3]
    %v30 = vld [vmem:[%s6] sm:$0x1]
    %v31 = vld [vmem:[%s6 + $0x1] sm:$0x1]
    %v32 = vld [vmem:[%s6 + $0x2] sm:$0x1]
    %v33 = vld [vmem:[%s1] sm:$0xff]
    %v34 = vld [vmem:[%s1 + $0x8] sm:$0xff]
    %v35 = vld [vmem:[%s1 + $0x10] sm:$0x3]
    %vm36 = vcmask 146432
    %v38 = vsel %vm36, %v33, 0
    %v41 = vsel %vm36, %v34, 0
    %v44 = vsel %vm36, %v35, 0
    %vm46 = vcmask 1041408
    %v48 = vsel %vm46, %v29, 0
    %50 = vmatprep.subr.mxu0 0.0
    %51 = vmatpush1.msra.mxu0 %v27
    %52 = vmatprep.subr.mxu0 0.0
    %53 = vmatpush1.msra.mxu0 %v28
    %54 = vmatprep.subr.mxu0 0.0
    %55 = vmatpush1.msra.mxu0 %v48
    %56 = vmatprep.subr.mxu0 0.0
    %57 = vmatpush1.msra.mxu0 0.0
    %58 = vmatprep.subr.mxu0 0.0
    %59 = vmatpush1.msra.mxu0 0.0
    %60 = vmatprep.subr.mxu0 0.0
    %61 = vmatpush1.msra.mxu0 0.0
    %62 = vmatprep.subr.mxu0 0.0
    %63 = vmatpush1.msra.mxu0 0.0
    %64 = vmatprep.subr.mxu0 0.0
    %65 = vmatpush1.msra.mxu0 0.0
    %66 = vmatprep.subr.mxu0 0.0
    %67 = vmatpush1.msra.mxu0 0.0
    %68 = vmatprep.subr.mxu0 0.0
    %69 = vmatpush1.msra.mxu0 0.0
    %70 = vmatprep.subr.mxu0 0.0
    %71 = vmatpush1.msra.mxu0 0.0
    %72 = vmatprep.subr.mxu0 0.0
    %73 = vmatpush1.msra.mxu0 0.0
    %74 = vmatprep.subr.mxu0 0.0
    %75 = vmatpush1.msra.mxu0 0.0
    %76 = vmatprep.subr.mxu0 0.0
    %77 = vmatpush1.msra.mxu0 0.0
    %78 = vmatprep.subr.mxu0 0.0
    %79 = vmatpush1.msra.mxu0 0.0
    %80 = vmatprep.subr.mxu0 0.0
    %81 = vmatpush1.msra.mxu0 0.0
    %82 = vmatprep.subr.mxu0 0.0
    %83 = vmatpush1.msra.mxu0 0.0
    %84 = vmatprep.subr.mxu0 0.0
    %85 = vmatpush1.msra.mxu0 0.0
    %86 = vmatprep.subr.mxu0 0.0
    %87 = vmatpush1.msra.mxu0 0.0
    %88 = vmatprep.subr.mxu0 0.0
    %89 = vmatpush1.msra.mxu0 0.0
    %90 = vmatprep.subr.mxu0 0.0
    %91 = vmatpush1.msra.mxu0 0.0
    %92 = vmatprep.subr.mxu0 0.0
    %93 = vmatpush1.msra.mxu0 0.0
    %94 = vmatprep.subr.mxu0 0.0
    %95 = vmatpush1.msra.mxu0 0.0
    %96 = vmatprep.subr.mxu0 0.0
    %97 = vmatpush1.msra.mxu0 0.0
    %98 = vmatprep.subr.mxu0 0.0
    %99 = vmatpush1.msra.mxu0 0.0
    %100 = vmatprep.subr.mxu0 0.0
    %101 = vmatpush1.msra.mxu0 0.0
    %102 = vmatprep.subr.mxu0 0.0
    %103 = vmatpush1.msra.mxu0 0.0
    %104 = vmatprep.subr.mxu0 0.0
    %105 = vmatpush1.msra.mxu0 0.0
    %106 = vmatprep.subr.mxu0 0.0
    %107 = vmatpush1.msra.mxu0 0.0
    %108 = vmatprep.subr.mxu0 0.0
    %109 = vmatpush1.msra.mxu0 0.0
    %110 = vmatprep.subr.mxu0 0.0
    %111 = vmatpush1.msra.mxu0 0.0
    %112 = vmatprep.subr.mxu0 0.0
    %113 = vmatpush1.msra.mxu0 0.0
    %114 = vmatprep.mubr.f32.mxu0 0.0
    %115 = vmatmul.mubr.f32.gmra.mrb[0].mxu0 %v38
    %v116 = vpop.f32.mrb[0].mxu0
    %v117 = vadd.f32 0.0, %v116
    %v118 = vpop.f32.mrb[0].mxu0
    %119 = vmatprep.mubr.f32.mxu0 0.0
    %120 = vmatmul.mubr.f32.gmra.mrb[0].mxu0 %v41
    %v121 = vpop.f32.mrb[0].mxu0
    %v122 = vadd.f32 0.0, %v121
    %v123 = vpop.f32.mrb[0].mxu0
    %124 = vmatprep.mubr.f32.mxu0 0.0
    %125 = vmatmul.mubr.f32.gmra.mrb[0].mxu0 %v44
    %v126 = vpop.f32.mrb[0].mxu0
    %v127 = vadd.f32 0.0, %v126
    %v128 = vpop.f32.mrb[0].mxu0
    %129 = vdwg.mxu0
    %v130 = vld [vmem:[%s3] sm:$0xff]
    %v131 = vld [vmem:[%s3 + $0x8] sm:$0xff]
    %v132 = vld [vmem:[%s3 + $0x10] sm:$0xff]
    %v133 = vld [vmem:[%s3 + $0x18] sm:$0xff]
    %v134 = vld [vmem:[%s3 + $0x20] sm:$0xff]
    %v135 = vld [vmem:[%s3 + $0x28] sm:$0xff]
    %v136 = vld [vmem:[%s3 + $0x30] sm:$0xff]
    %v137 = vld [vmem:[%s3 + $0x38] sm:$0xff]
    %s138 = scalar_lea.vmem %s1, 24
    %v139 = vld [vmem:[%s138] sm:$0xff]
    %v140 = vld [vmem:[%s138 + $0x8] sm:$0xff]
    %v141 = vld [vmem:[%s138 + $0x10] sm:$0x3]
    %v143 = vsel %vm36, %v139, 0
    %v146 = vsel %vm36, %v140, 0
    %v149 = vsel %vm36, %v141, 0
    %151 = vmatprep.subr.mxu0 0.0
    %152 = vmatpush1.msra.mxu0 %v27
    %153 = vmatprep.subr.mxu0 0.0
    %154 = vmatpush1.msra.mxu0 %v28
    %155 = vmatprep.subr.mxu0 0.0
    %156 = vmatpush1.msra.mxu0 %v48
    %157 = vmatprep.subr.mxu0 0.0
    %158 = vmatpush1.msra.mxu0 0.0
    %159 = vmatprep.subr.mxu0 0.0
    %160 = vmatpush1.msra.mxu0 0.0
    %161 = vmatprep.subr.mxu0 0.0
    %162 = vmatpush1.msra.mxu0 0.0
    %163 = vmatprep.subr.mxu0 0.0
    %164 = vmatpush1.msra.mxu0 0.0
    %165 = vmatprep.subr.mxu0 0.0
    %166 = vmatpush1.msra.mxu0 0.0
    %167 = vmatprep.subr.mxu0 0.0
    %168 = vmatpush1.msra.mxu0 0.0
    %169 = vmatprep.subr.mxu0 0.0
    %170 = vmatpush1.msra.mxu0 0.0
    %171 = vmatprep.subr.mxu0 0.0
    %172 = vmatpush1.msra.mxu0 0.0
    %173 = vmatprep.subr.mxu0 0.0
    %174 = vmatpush1.msra.mxu0 0.0
    %175 = vmatprep.subr.mxu0 0.0
    %176 = vmatpush1.msra.mxu0 0.0
    %177 = vmatprep.subr.mxu0 0.0
    %178 = vmatpush1.msra.mxu0 0.0
    %179 = vmatprep.subr.mxu0 0.0
    %180 = vmatpush1.msra.mxu0 0.0
    %181 = vmatprep.subr.mxu0 0.0
    %182 = vmatpush1.msra.mxu0 0.0
    %183 = vmatprep.subr.mxu0 0.0
    %184 = vmatpush1.msra.mxu0 0.0
    %185 = vmatprep.subr.mxu0 0.0
    %186 = vmatpush1.msra.mxu0 0.0
    %187 = vmatprep.subr.mxu0 0.0
    %188 = vmatpush1.msra.mxu0 0.0
    %189 = vmatprep.subr.mxu0 0.0
    %190 = vmatpush1.msra.mxu0 0.0
    %191 = vmatprep.subr.mxu0 0.0
    %192 = vmatpush1.msra.mxu0 0.0
    %193 = vmatprep.subr.mxu0 0.0
    %194 = vmatpush1.msra.mxu0 0.0
    %195 = vmatprep.subr.mxu0 0.0
    %196 = vmatpush1.msra.mxu0 0.0
    %197 = vmatprep.subr.mxu0 0.0
    %198 = vmatpush1.msra.mxu0 0.0
    %199 = vmatprep.subr.mxu0 0.0
    %200 = vmatpush1.msra.mxu0 0.0
    %201 = vmatprep.subr.mxu0 0.0
    %202 = vmatpush1.msra.mxu0 0.0
    %203 = vmatprep.subr.mxu0 0.0
    %204 = vmatpush1.msra.mxu0 0.0
    %205 = vmatprep.subr.mxu0 0.0
    %206 = vmatpush1.msra.mxu0 0.0
    %207 = vmatprep.subr.mxu0 0.0
    %208 = vmatpush1.msra.mxu0 0.0
    %209 = vmatprep.subr.mxu0 0.0
    %210 = vmatpush1.msra.mxu0 0.0
    %211 = vmatprep.subr.mxu0 0.0
    %212 = vmatpush1.msra.mxu0 0.0
    %213 = vmatprep.subr.mxu0 0.0
    %214 = vmatpush1.msra.mxu0 0.0
    %215 = vmatprep.mubr.f32.mxu0 0.0
    %216 = vmatmul.mubr.f32.gmra.mrb[0].mxu0 %v143
    %v217 = vpop.f32.mrb[0].mxu0
    %v218 = vadd.f32 0.0, %v217
    %v219 = vpop.f32.mrb[0].mxu0
    %220 = vmatprep.mubr.f32.mxu0 0.0
    %221 = vmatmul.mubr.f32.gmra.mrb[0].mxu0 %v146
    %v222 = vpop.f32.mrb[0].mxu0
    %v223 = vadd.f32 0.0, %v222
    %v224 = vpop.f32.mrb[0].mxu0
    %225 = vmatprep.mubr.f32.mxu0 0.0
    %226 = vmatmul.mubr.f32.gmra.mrb[0].mxu0 %v149
    %v227 = vpop.f32.mrb[0].mxu0
    %v228 = vadd.f32 0.0, %v227
    %v229 = vpop.f32.mrb[0].mxu0
    %230 = vdwg.mxu0
    %s231 = scalar_lea.vmem %s3, 64
    %v232 = vld [vmem:[%s231] sm:$0xff]
    %v233 = vld [vmem:[%s231 + $0x8] sm:$0xff]
    %v234 = vld [vmem:[%s231 + $0x10] sm:$0xff]
    %v235 = vld [vmem:[%s231 + $0x18] sm:$0xff]
    %v236 = vld [vmem:[%s231 + $0x20] sm:$0xff]
    %v237 = vld [vmem:[%s231 + $0x28] sm:$0xff]
    %v238 = vld [vmem:[%s231 + $0x30] sm:$0xff]
    %v239 = vld [vmem:[%s231 + $0x38] sm:$0xff]
    %vm240 = vcmask 523264
    %v242 = vsel %vm240, %v218, 0
    %v245 = vsel %vm240, %v223, 0
    %v248 = vsel %vm240, %v228, 0
    %250 = vmatprep.subr.mxu0 0.0
    %251 = vmatpush1.msra.mxu0 %v232
    %252 = vmatprep.subr.mxu0 0.0
    %253 = vmatpush1.msra.mxu0 %v233
    %254 = vmatprep.subr.mxu0 0.0
    %255 = vmatpush1.msra.mxu0 %v234
    %256 = vmatprep.subr.mxu0 0.0
    %257 = vmatpush1.msra.mxu0 %v235
    %258 = vmatprep.subr.mxu0 0.0
    %259 = vmatpush1.msra.mxu0 %v236
    %260 = vmatprep.subr.mxu0 0.0
    %261 = vmatpush1.msra.mxu0 %v237
    %262 = vmatprep.subr.mxu0 0.0
    %263 = vmatpush1.msra.mxu0 %v238
    %264 = vmatprep.subr.mxu0 0.0
    %265 = vmatpush1.msra.mxu0 %v239
    %266 = vmatprep.subr.mxu0 0.0
    %267 = vmatpush1.msra.mxu0 0.0
    %268 = vmatprep.subr.mxu0 0.0
    %269 = vmatpush1.msra.mxu0 0.0
    %270 = vmatprep.subr.mxu0 0.0
    %271 = vmatpush1.msra.mxu0 0.0
    %272 = vmatprep.subr.mxu0 0.0
    %273 = vmatpush1.msra.mxu0 0.0
    %274 = vmatprep.subr.mxu0 0.0
    %275 = vmatpush1.msra.mxu0 0.0
    %276 = vmatprep.subr.mxu0 0.0
    %277 = vmatpush1.msra.mxu0 0.0
    %278 = vmatprep.subr.mxu0 0.0
    %279 = vmatpush1.msra.mxu0 0.0
    %280 = vmatprep.subr.mxu0 0.0
    %281 = vmatpush1.msra.mxu0 0.0
    %282 = vmatprep.subr.mxu0 0.0
    %283 = vmatpush1.msra.mxu0 0.0
    %284 = vmatprep.subr.mxu0 0.0
    %285 = vmatpush1.msra.mxu0 0.0
    %286 = vmatprep.subr.mxu0 0.0
    %287 = vmatpush1.msra.mxu0 0.0
    %288 = vmatprep.subr.mxu0 0.0
    %289 = vmatpush1.msra.mxu0 0.0
    %290 = vmatprep.subr.mxu0 0.0
    %291 = vmatpush1.msra.mxu0 0.0
    %292 = vmatprep.subr.mxu0 0.0
    %293 = vmatpush1.msra.mxu0 0.0
    %294 = vmatprep.subr.mxu0 0.0
    %295 = vmatpush1.msra.mxu0 0.0
    %296 = vmatprep.subr.mxu0 0.0
    %297 = vmatpush1.msra.mxu0 0.0
    %298 = vmatprep.subr.mxu0 0.0
    %299 = vmatpush1.msra.mxu0 0.0
    %300 = vmatprep.subr.mxu0 0.0
    %301 = vmatpush1.msra.mxu0 0.0
    %302 = vmatprep.subr.mxu0 0.0
    %303 = vmatpush1.msra.mxu0 0.0
    %304 = vmatprep.subr.mxu0 0.0
    %305 = vmatpush1.msra.mxu0 0.0
    %306 = vmatprep.subr.mxu0 0.0
    %307 = vmatpush1.msra.mxu0 0.0
    %308 = vmatprep.subr.mxu0 0.0
    %309 = vmatpush1.msra.mxu0 0.0
    %310 = vmatprep.subr.mxu0 0.0
    %311 = vmatpush1.msra.mxu0 0.0
    %312 = vmatprep.subr.mxu0 0.0
    %313 = vmatpush1.msra.mxu0 0.0
    %314 = vmatprep.mubr.f32.mxu0 0.0
    %315 = vmatmul.mubr.f32.gmra.mrb[0].mxu0 %v242
    %v316 = vpop.f32.mrb[0].mxu0
    %v317 = vadd.f32 0.0, %v316
    %v318 = vpop.f32.mrb[0].mxu0
    %319 = vmatprep.mubr.f32.mxu0 0.0
    %320 = vmatmul.mubr.f32.gmra.mrb[0].mxu0 %v245
    %v321 = vpop.f32.mrb[0].mxu0
    %v322 = vadd.f32 0.0, %v321
    %v323 = vpop.f32.mrb[0].mxu0
    %324 = vmatprep.mubr.f32.mxu0 0.0
    %325 = vmatmul.mubr.f32.gmra.mrb[0].mxu0 %v248
    %v326 = vpop.f32.mrb[0].mxu0
    %v327 = vadd.f32 0.0, %v326
    %v328 = vpop.f32.mrb[0].mxu0
    %329 = vdwg.mxu0
    %v331 = vsel %vm240, %v117, 0
    %v334 = vsel %vm240, %v122, 0
    %v337 = vsel %vm240, %v127, 0
    %339 = vmatprep.subr.mxu0 0.0
    %340 = vmatpush1.msra.mxu0 %v130
    %341 = vmatprep.subr.mxu0 0.0
    %342 = vmatpush1.msra.mxu0 %v131
    %343 = vmatprep.subr.mxu0 0.0
    %344 = vmatpush1.msra.mxu0 %v132
    %345 = vmatprep.subr.mxu0 0.0
    %346 = vmatpush1.msra.mxu0 %v133
    %347 = vmatprep.subr.mxu0 0.0
    %348 = vmatpush1.msra.mxu0 %v134
    %349 = vmatprep.subr.mxu0 0.0
    %350 = vmatpush1.msra.mxu0 %v135
    %351 = vmatprep.subr.mxu0 0.0
    %352 = vmatpush1.msra.mxu0 %v136
    %353 = vmatprep.subr.mxu0 0.0
    %354 = vmatpush1.msra.mxu0 %v137
    %355 = vmatprep.subr.mxu0 0.0
    %356 = vmatpush1.msra.mxu0 0.0
    %357 = vmatprep.subr.mxu0 0.0
    %358 = vmatpush1.msra.mxu0 0.0
    %359 = vmatprep.subr.mxu0 0.0
    %360 = vmatpush1.msra.mxu0 0.0
    %361 = vmatprep.subr.mxu0 0.0
    %362 = vmatpush1.msra.mxu0 0.0
    %363 = vmatprep.subr.mxu0 0.0
    %364 = vmatpush1.msra.mxu0 0.0
    %365 = vmatprep.subr.mxu0 0.0
    %366 = vmatpush1.msra.mxu0 0.0
    %367 = vmatprep.subr.mxu0 0.0
    %368 = vmatpush1.msra.mxu0 0.0
    %369 = vmatprep.subr.mxu0 0.0
    %370 = vmatpush1.msra.mxu0 0.0
    %371 = vmatprep.subr.mxu0 0.0
    %372 = vmatpush1.msra.mxu0 0.0
    %373 = vmatprep.subr.mxu0 0.0
    %374 = vmatpush1.msra.mxu0 0.0
    %375 = vmatprep.subr.mxu0 0.0
    %376 = vmatpush1.msra.mxu0 0.0
    %377 = vmatprep.subr.mxu0 0.0
    %378 = vmatpush1.msra.mxu0 0.0
    %379 = vmatprep.subr.mxu0 0.0
    %380 = vmatpush1.msra.mxu0 0.0
    %381 = vmatprep.subr.mxu0 0.0
    %382 = vmatpush1.msra.mxu0 0.0
    %383 = vmatprep.subr.mxu0 0.0
    %384 = vmatpush1.msra.mxu0 0.0
    %385 = vmatprep.subr.mxu0 0.0
    %386 = vmatpush1.msra.mxu0 0.0
    %387 = vmatprep.subr.mxu0 0.0
    %388 = vmatpush1.msra.mxu0 0.0
    %389 = vmatprep.subr.mxu0 0.0
    %390 = vmatpush1.msra.mxu0 0.0
    %391 = vmatprep.subr.mxu0 0.0
    %392 = vmatpush1.msra.mxu0 0.0
    %393 = vmatprep.subr.mxu0 0.0
    %394 = vmatpush1.msra.mxu0 0.0
    %395 = vmatprep.subr.mxu0 0.0
    %396 = vmatpush1.msra.mxu0 0.0
    %397 = vmatprep.subr.mxu0 0.0
    %398 = vmatpush1.msra.mxu0 0.0
    %399 = vmatprep.subr.mxu0 0.0
    %400 = vmatpush1.msra.mxu0 0.0
    %401 = vmatprep.subr.mxu0 0.0
    %402 = vmatpush1.msra.mxu0 0.0
    %403 = vmatprep.mubr.f32.mxu0 0.0
    %404 = vmatmul.mubr.f32.gmra.mrb[0].mxu0 %v331
    %v405 = vpop.f32.mrb[0].mxu0
    %v406 = vadd.f32 %v317, %v405
    %v407 = vpop.f32.mrb[0].mxu0
    %408 = vmatprep.mubr.f32.mxu0 0.0
    %409 = vmatmul.mubr.f32.gmra.mrb[0].mxu0 %v334
    %v410 = vpop.f32.mrb[0].mxu0
    %v411 = vadd.f32 %v322, %v410
    %v412 = vpop.f32.mrb[0].mxu0
    %413 = vmatprep.mubr.f32.mxu0 0.0
    %414 = vmatmul.mubr.f32.gmra.mrb[0].mxu0 %v337
    %v415 = vpop.f32.mrb[0].mxu0
    %v416 = vadd.f32 %v327, %v415
    %v417 = vpop.f32.mrb[0].mxu0
    %418 = vdwg.mxu0
    %s419 = scalar_lea.vmem %s1, 48
    %v420 = vld [vmem:[%s419] sm:$0xff]
    %v421 = vld [vmem:[%s419 + $0x8] sm:$0xff]
    %v422 = vld [vmem:[%s419 + $0x10] sm:$0x3]
    %v424 = vsel %vm36, %v420, 0
    %v427 = vsel %vm36, %v421, 0
    %v430 = vsel %vm36, %v422, 0
    %432 = vmatprep.subr.mxu0 0.0
    %433 = vmatpush1.msra.mxu0 %v27
    %434 = vmatprep.subr.mxu0 0.0
    %435 = vmatpush1.msra.mxu0 %v28
    %436 = vmatprep.subr.mxu0 0.0
    %437 = vmatpush1.msra.mxu0 %v48
    %438 = vmatprep.subr.mxu0 0.0
    %439 = vmatpush1.msra.mxu0 0.0
    %440 = vmatprep.subr.mxu0 0.0
    %441 = vmatpush1.msra.mxu0 0.0
    %442 = vmatprep.subr.mxu0 0.0
    %443 = vmatpush1.msra.mxu0 0.0
    %444 = vmatprep.subr.mxu0 0.0
    %445 = vmatpush1.msra.mxu0 0.0
    %446 = vmatprep.subr.mxu0 0.0
    %447 = vmatpush1.msra.mxu0 0.0
    %448 = vmatprep.subr.mxu0 0.0
    %449 = vmatpush1.msra.mxu0 0.0
    %450 = vmatprep.subr.mxu0 0.0
    %451 = vmatpush1.msra.mxu0 0.0
    %452 = vmatprep.subr.mxu0 0.0
    %453 = vmatpush1.msra.mxu0 0.0
    %454 = vmatprep.subr.mxu0 0.0
    %455 = vmatpush1.msra.mxu0 0.0
    %456 = vmatprep.subr.mxu0 0.0
    %457 = vmatpush1.msra.mxu0 0.0
    %458 = vmatprep.subr.mxu0 0.0
    %459 = vmatpush1.msra.mxu0 0.0
    %460 = vmatprep.subr.mxu0 0.0
    %461 = vmatpush1.msra.mxu0 0.0
    %462 = vmatprep.subr.mxu0 0.0
    %463 = vmatpush1.msra.mxu0 0.0
    %464 = vmatprep.subr.mxu0 0.0
    %465 = vmatpush1.msra.mxu0 0.0
    %466 = vmatprep.subr.mxu0 0.0
    %467 = vmatpush1.msra.mxu0 0.0
    %468 = vmatprep.subr.mxu0 0.0
    %469 = vmatpush1.msra.mxu0 0.0
    %470 = vmatprep.subr.mxu0 0.0
    %471 = vmatpush1.msra.mxu0 0.0
    %472 = vmatprep.subr.mxu0 0.0
    %473 = vmatpush1.msra.mxu0 0.0
    %474 = vmatprep.subr.mxu0 0.0
    %475 = vmatpush1.msra.mxu0 0.0
    %476 = vmatprep.subr.mxu0 0.0
    %477 = vmatpush1.msra.mxu0 0.0
    %478 = vmatprep.subr.mxu0 0.0
    %479 = vmatpush1.msra.mxu0 0.0
    %480 = vmatprep.subr.mxu0 0.0
    %481 = vmatpush1.msra.mxu0 0.0
    %482 = vmatprep.subr.mxu0 0.0
    %483 = vmatpush1.msra.mxu0 0.0
    %484 = vmatprep.subr.mxu0 0.0
    %485 = vmatpush1.msra.mxu0 0.0
    %486 = vmatprep.subr.mxu0 0.0
    %487 = vmatpush1.msra.mxu0 0.0
    %488 = vmatprep.subr.mxu0 0.0
    %489 = vmatpush1.msra.mxu0 0.0
    %490 = vmatprep.subr.mxu0 0.0
    %491 = vmatpush1.msra.mxu0 0.0
    %492 = vmatprep.subr.mxu0 0.0
    %493 = vmatpush1.msra.mxu0 0.0
    %494 = vmatprep.subr.mxu0 0.0
    %495 = vmatpush1.msra.mxu0 0.0
    %496 = vmatprep.mubr.f32.mxu0 0.0
    %497 = vmatmul.mubr.f32.gmra.mrb[0].mxu0 %v424
    %v498 = vpop.f32.mrb[0].mxu0
    %v499 = vadd.f32 0.0, %v498
    %v500 = vpop.f32.mrb[0].mxu0
    %501 = vmatprep.mubr.f32.mxu0 0.0
    %502 = vmatmul.mubr.f32.gmra.mrb[0].mxu0 %v427
    %v503 = vpop.f32.mrb[0].mxu0
    %v504 = vadd.f32 0.0, %v503
    %v505 = vpop.f32.mrb[0].mxu0
    %506 = vmatprep.mubr.f32.mxu0 0.0
    %507 = vmatmul.mubr.f32.gmra.mrb[0].mxu0 %v430
    %v508 = vpop.f32.mrb[0].mxu0
    %v509 = vadd.f32 0.0, %v508
    %v510 = vpop.f32.mrb[0].mxu0
    %511 = vdwg.mxu0
    %s512 = scalar_lea.vmem %s3, 128
    %v513 = vld [vmem:[%s512] sm:$0xff]
    %v514 = vld [vmem:[%s512 + $0x8] sm:$0xff]
    %v515 = vld [vmem:[%s512 + $0x10] sm:$0xff]
    %v516 = vld [vmem:[%s512 + $0x18] sm:$0xff]
    %v517 = vld [vmem:[%s512 + $0x20] sm:$0xff]
    %v518 = vld [vmem:[%s512 + $0x28] sm:$0xff]
    %v519 = vld [vmem:[%s512 + $0x30] sm:$0xff]
    %v520 = vld [vmem:[%s512 + $0x38] sm:$0xff]
    %v522 = vsel %vm240, %v499, 0
    %v525 = vsel %vm240, %v504, 0
    %v528 = vsel %vm240, %v509, 0
    %530 = vmatprep.subr.mxu0 0.0
    %531 = vmatpush1.msra.mxu0 %v513
    %532 = vmatprep.subr.mxu0 0.0
    %533 = vmatpush1.msra.mxu0 %v514
    %534 = vmatprep.subr.mxu0 0.0
    %535 = vmatpush1.msra.mxu0 %v515
    %536 = vmatprep.subr.mxu0 0.0
    %537 = vmatpush1.msra.mxu0 %v516
    %538 = vmatprep.subr.mxu0 0.0
    %539 = vmatpush1.msra.mxu0 %v517
    %540 = vmatprep.subr.mxu0 0.0
    %541 = vmatpush1.msra.mxu0 %v518
    %542 = vmatprep.subr.mxu0 0.0
    %543 = vmatpush1.msra.mxu0 %v519
    %544 = vmatprep.subr.mxu0 0.0
    %545 = vmatpush1.msra.mxu0 %v520
    %546 = vmatprep.subr.mxu0 0.0
    %547 = vmatpush1.msra.mxu0 0.0
    %548 = vmatprep.subr.mxu0 0.0
    %549 = vmatpush1.msra.mxu0 0.0
    %550 = vmatprep.subr.mxu0 0.0
    %551 = vmatpush1.msra.mxu0 0.0
    %552 = vmatprep.subr.mxu0 0.0
    %553 = vmatpush1.msra.mxu0 0.0
    %554 = vmatprep.subr.mxu0 0.0
    %555 = vmatpush1.msra.mxu0 0.0
    %556 = vmatprep.subr.mxu0 0.0
    %557 = vmatpush1.msra.mxu0 0.0
    %558 = vmatprep.subr.mxu0 0.0
    %559 = vmatpush1.msra.mxu0 0.0
    %560 = vmatprep.subr.mxu0 0.0
    %561 = vmatpush1.msra.mxu0 0.0
    %562 = vmatprep.subr.mxu0 0.0
    %563 = vmatpush1.msra.mxu0 0.0
    %564 = vmatprep.subr.mxu0 0.0
    %565 = vmatpush1.msra.mxu0 0.0
    %566 = vmatprep.subr.mxu0 0.0
    %567 = vmatpush1.msra.mxu0 0.0
    %568 = vmatprep.subr.mxu0 0.0
    %569 = vmatpush1.msra.mxu0 0.0
    %570 = vmatprep.subr.mxu0 0.0
    %571 = vmatpush1.msra.mxu0 0.0
    %572 = vmatprep.subr.mxu0 0.0
    %573 = vmatpush1.msra.mxu0 0.0
    %574 = vmatprep.subr.mxu0 0.0
    %575 = vmatpush1.msra.mxu0 0.0
    %576 = vmatprep.subr.mxu0 0.0
    %577 = vmatpush1.msra.mxu0 0.0
    %578 = vmatprep.subr.mxu0 0.0
    %579 = vmatpush1.msra.mxu0 0.0
    %580 = vmatprep.subr.mxu0 0.0
    %581 = vmatpush1.msra.mxu0 0.0
    %582 = vmatprep.subr.mxu0 0.0
    %583 = vmatpush1.msra.mxu0 0.0
    %584 = vmatprep.subr.mxu0 0.0
    %585 = vmatpush1.msra.mxu0 0.0
    %586 = vmatprep.subr.mxu0 0.0
    %587 = vmatpush1.msra.mxu0 0.0
    %588 = vmatprep.subr.mxu0 0.0
    %589 = vmatpush1.msra.mxu0 0.0
    %590 = vmatprep.subr.mxu0 0.0
    %591 = vmatpush1.msra.mxu0 0.0
    %592 = vmatprep.subr.mxu0 0.0
    %593 = vmatpush1.msra.mxu0 0.0
    %594 = vmatprep.mubr.f32.mxu0 0.0
    %595 = vmatmul.mubr.f32.gmra.mrb[0].mxu0 %v522
    %v596 = vpop.f32.mrb[0].mxu0
    %v597 = vadd.f32 0.0, %v596
    %v598 = vpop.f32.mrb[0].mxu0
    %599 = vmatprep.mubr.f32.mxu0 0.0
    %600 = vmatmul.mubr.f32.gmra.mrb[0].mxu0 %v525
    %v601 = vpop.f32.mrb[0].mxu0
    %v602 = vadd.f32 0.0, %v601
    %v603 = vpop.f32.mrb[0].mxu0
    %604 = vmatprep.mubr.f32.mxu0 0.0
    %605 = vmatmul.mubr.f32.gmra.mrb[0].mxu0 %v528
    %v606 = vpop.f32.mrb[0].mxu0
    %v607 = vadd.f32 0.0, %v606
    %v608 = vpop.f32.mrb[0].mxu0
    %609 = vdwg.mxu0
    %v610 = vadd.f32 %v406, %v597
    %v611 = vadd.f32 %v411, %v602
    %v612 = vadd.f32 %v416, %v607
    %s613 = scalar_lea.vmem %s1, 72
    %v614 = vld [vmem:[%s613] sm:$0xff]
    %v615 = vld [vmem:[%s613 + $0x8] sm:$0xff]
    %v616 = vld [vmem:[%s613 + $0x10] sm:$0x3]
    %v618 = vsel %vm36, %v614, 0
    %v621 = vsel %vm36, %v615, 0
    %v624 = vsel %vm36, %v616, 0
    %626 = vmatprep.subr.mxu0 0.0
    %627 = vmatpush1.msra.mxu0 %v27
    %628 = vmatprep.subr.mxu0 0.0
    %629 = vmatpush1.msra.mxu0 %v28
    %630 = vmatprep.subr.mxu0 0.0
    %631 = vmatpush1.msra.mxu0 %v48
    %632 = vmatprep.subr.mxu0 0.0
    %633 = vmatpush1.msra.mxu0 0.0
    %634 = vmatprep.subr.mxu0 0.0
    %635 = vmatpush1.msra.mxu0 0.0
    %636 = vmatprep.subr.mxu0 0.0
    %637 = vmatpush1.msra.mxu0 0.0
    %638 = vmatprep.subr.mxu0 0.0
    %639 = vmatpush1.msra.mxu0 0.0
    %640 = vmatprep.subr.mxu0 0.0
    %641 = vmatpush1.msra.mxu0 0.0
    %642 = vmatprep.subr.mxu0 0.0
    %643 = vmatpush1.msra.mxu0 0.0
    %644 = vmatprep.subr.mxu0 0.0
    %645 = vmatpush1.msra.mxu0 0.0
    %646 = vmatprep.subr.mxu0 0.0
    %647 = vmatpush1.msra.mxu0 0.0
    %648 = vmatprep.subr.mxu0 0.0
    %649 = vmatpush1.msra.mxu0 0.0
    %650 = vmatprep.subr.mxu0 0.0
    %651 = vmatpush1.msra.mxu0 0.0
    %652 = vmatprep.subr.mxu0 0.0
    %653 = vmatpush1.msra.mxu0 0.0
    %654 = vmatprep.subr.mxu0 0.0
    %655 = vmatpush1.msra.mxu0 0.0
    %656 = vmatprep.subr.mxu0 0.0
    %657 = vmatpush1.msra.mxu0 0.0
    %658 = vmatprep.subr.mxu0 0.0
    %659 = vmatpush1.msra.mxu0 0.0
    %660 = vmatprep.subr.mxu0 0.0
    %661 = vmatpush1.msra.mxu0 0.0
    %662 = vmatprep.subr.mxu0 0.0
    %663 = vmatpush1.msra.mxu0 0.0
    %664 = vmatprep.subr.mxu0 0.0
    %665 = vmatpush1.msra.mxu0 0.0
    %666 = vmatprep.subr.mxu0 0.0
    %667 = vmatpush1.msra.mxu0 0.0
    %668 = vmatprep.subr.mxu0 0.0
    %669 = vmatpush1.msra.mxu0 0.0
    %670 = vmatprep.subr.mxu0 0.0
    %671 = vmatpush1.msra.mxu0 0.0
    %672 = vmatprep.subr.mxu0 0.0
    %673 = vmatpush1.msra.mxu0 0.0
    %674 = vmatprep.subr.mxu0 0.0
    %675 = vmatpush1.msra.mxu0 0.0
    %676 = vmatprep.subr.mxu0 0.0
    %677 = vmatpush1.msra.mxu0 0.0
    %678 = vmatprep.subr.mxu0 0.0
    %679 = vmatpush1.msra.mxu0 0.0
    %680 = vmatprep.subr.mxu0 0.0
    %681 = vmatpush1.msra.mxu0 0.0
    %682 = vmatprep.subr.mxu0 0.0
    %683 = vmatpush1.msra.mxu0 0.0
    %684 = vmatprep.subr.mxu0 0.0
    %685 = vmatpush1.msra.mxu0 0.0
    %686 = vmatprep.subr.mxu0 0.0
    %687 = vmatpush1.msra.mxu0 0.0
    %688 = vmatprep.subr.mxu0 0.0
    %689 = vmatpush1.msra.mxu0 0.0
    %690 = vmatprep.mubr.f32.mxu0 0.0
    %691 = vmatmul.mubr.f32.gmra.mrb[0].mxu0 %v618
    %v692 = vpop.f32.mrb[0].mxu0
    %v693 = vadd.f32 0.0, %v692
    %v694 = vpop.f32.mrb[0].mxu0
    %695 = vmatprep.mubr.f32.mxu0 0.0
    %696 = vmatmul.mubr.f32.gmra.mrb[0].mxu0 %v621
    %v697 = vpop.f32.mrb[0].mxu0
    %v698 = vadd.f32 0.0, %v697
    %v699 = vpop.f32.mrb[0].mxu0
    %700 = vmatprep.mubr.f32.mxu0 0.0
    %701 = vmatmul.mubr.f32.gmra.mrb[0].mxu0 %v624
    %v702 = vpop.f32.mrb[0].mxu0
    %v703 = vadd.f32 0.0, %v702
    %v704 = vpop.f32.mrb[0].mxu0
    %705 = vdwg.mxu0
    %s706 = scalar_lea.vmem %s3, 192
    %v707 = vld [vmem:[%s706] sm:$0xff]
    %v708 = vld [vmem:[%s706 + $0x8] sm:$0xff]
    %v709 = vld [vmem:[%s706 + $0x10] sm:$0xff]
    %v710 = vld [vmem:[%s706 + $0x18] sm:$0xff]
    %v711 = vld [vmem:[%s706 + $0x20] sm:$0xff]
    %v712 = vld [vmem:[%s706 + $0x28] sm:$0xff]
    %v713 = vld [vmem:[%s706 + $0x30] sm:$0xff]
    %v714 = vld [vmem:[%s706 + $0x38] sm:$0xff]
    %v716 = vsel %vm240, %v693, 0
    %v719 = vsel %vm240, %v698, 0
    %v722 = vsel %vm240, %v703, 0
    %724 = vmatprep.subr.mxu0 0.0
    %725 = vmatpush1.msra.mxu0 %v707
    %726 = vmatprep.subr.mxu0 0.0
    %727 = vmatpush1.msra.mxu0 %v708
    %728 = vmatprep.subr.mxu0 0.0
    %729 = vmatpush1.msra.mxu0 %v709
    %730 = vmatprep.subr.mxu0 0.0
    %731 = vmatpush1.msra.mxu0 %v710
    %732 = vmatprep.subr.mxu0 0.0
    %733 = vmatpush1.msra.mxu0 %v711
    %734 = vmatprep.subr.mxu0 0.0
    %735 = vmatpush1.msra.mxu0 %v712
    %736 = vmatprep.subr.mxu0 0.0
    %737 = vmatpush1.msra.mxu0 %v713
    %738 = vmatprep.subr.mxu0 0.0
    %739 = vmatpush1.msra.mxu0 %v714
    %740 = vmatprep.subr.mxu0 0.0
    %741 = vmatpush1.msra.mxu0 0.0
    %742 = vmatprep.subr.mxu0 0.0
    %743 = vmatpush1.msra.mxu0 0.0
    %744 = vmatprep.subr.mxu0 0.0
    %745 = vmatpush1.msra.mxu0 0.0
    %746 = vmatprep.subr.mxu0 0.0
    %747 = vmatpush1.msra.mxu0 0.0
    %748 = vmatprep.subr.mxu0 0.0
    %749 = vmatpush1.msra.mxu0 0.0
    %750 = vmatprep.subr.mxu0 0.0
    %751 = vmatpush1.msra.mxu0 0.0
    %752 = vmatprep.subr.mxu0 0.0
    %753 = vmatpush1.msra.mxu0 0.0
    %754 = vmatprep.subr.mxu0 0.0
    %755 = vmatpush1.msra.mxu0 0.0
    %756 = vmatprep.subr.mxu0 0.0
    %757 = vmatpush1.msra.mxu0 0.0
    %758 = vmatprep.subr.mxu0 0.0
    %759 = vmatpush1.msra.mxu0 0.0
    %760 = vmatprep.subr.mxu0 0.0
    %761 = vmatpush1.msra.mxu0 0.0
    %762 = vmatprep.subr.mxu0 0.0
    %763 = vmatpush1.msra.mxu0 0.0
    %764 = vmatprep.subr.mxu0 0.0
    %765 = vmatpush1.msra.mxu0 0.0
    %766 = vmatprep.subr.mxu0 0.0
    %767 = vmatpush1.msra.mxu0 0.0
    %768 = vmatprep.subr.mxu0 0.0
    %769 = vmatpush1.msra.mxu0 0.0
    %770 = vmatprep.subr.mxu0 0.0
    %771 = vmatpush1.msra.mxu0 0.0
    %772 = vmatprep.subr.mxu0 0.0
    %773 = vmatpush1.msra.mxu0 0.0
    %774 = vmatprep.subr.mxu0 0.0
    %775 = vmatpush1.msra.mxu0 0.0
    %776 = vmatprep.subr.mxu0 0.0
    %777 = vmatpush1.msra.mxu0 0.0
    %778 = vmatprep.subr.mxu0 0.0
    %779 = vmatpush1.msra.mxu0 0.0
    %780 = vmatprep.subr.mxu0 0.0
    %781 = vmatpush1.msra.mxu0 0.0
    %782 = vmatprep.subr.mxu0 0.0
    %783 = vmatpush1.msra.mxu0 0.0
    %784 = vmatprep.subr.mxu0 0.0
    %785 = vmatpush1.msra.mxu0 0.0
    %786 = vmatprep.subr.mxu0 0.0
    %787 = vmatpush1.msra.mxu0 0.0
    %788 = vmatprep.mubr.f32.mxu0 0.0
    %789 = vmatmul.mubr.f32.gmra.mrb[0].mxu0 %v716
    %v790 = vpop.f32.mrb[0].mxu0
    %v791 = vadd.f32 0.0, %v790
    %v792 = vpop.f32.mrb[0].mxu0
    %793 = vmatprep.mubr.f32.mxu0 0.0
    %794 = vmatmul.mubr.f32.gmra.mrb[0].mxu0 %v719
    %v795 = vpop.f32.mrb[0].mxu0
    %v796 = vadd.f32 0.0, %v795
    %v797 = vpop.f32.mrb[0].mxu0
    %798 = vmatprep.mubr.f32.mxu0 0.0
    %799 = vmatmul.mubr.f32.gmra.mrb[0].mxu0 %v722
    %v800 = vpop.f32.mrb[0].mxu0
    %v801 = vadd.f32 0.0, %v800
    %v802 = vpop.f32.mrb[0].mxu0
    %803 = vdwg.mxu0
    %v804 = vadd.f32 %v610, %v791
    %v805 = vadd.f32 %v611, %v796
    %v806 = vadd.f32 %v612, %v801
    %s807 = scalar_lea.vmem %s1, 96
    %v808 = vld [vmem:[%s807] sm:$0xff]
    %v809 = vld [vmem:[%s807 + $0x8] sm:$0xff]
    %v810 = vld [vmem:[%s807 + $0x10] sm:$0x3]
    %v812 = vsel %vm36, %v808, 0
    %v815 = vsel %vm36, %v809, 0
    %v818 = vsel %vm36, %v810, 0
    %820 = vmatprep.subr.mxu0 0.0
    %821 = vmatpush1.msra.mxu0 %v27
    %822 = vmatprep.subr.mxu0 0.0
    %823 = vmatpush1.msra.mxu0 %v28
    %824 = vmatprep.subr.mxu0 0.0
    %825 = vmatpush1.msra.mxu0 %v48
    %826 = vmatprep.subr.mxu0 0.0
    %827 = vmatpush1.msra.mxu0 0.0
    %828 = vmatprep.subr.mxu0 0.0
    %829 = vmatpush1.msra.mxu0 0.0
    %830 = vmatprep.subr.mxu0 0.0
    %831 = vmatpush1.msra.mxu0 0.0
    %832 = vmatprep.subr.mxu0 0.0
    %833 = vmatpush1.msra.mxu0 0.0
    %834 = vmatprep.subr.mxu0 0.0
    %835 = vmatpush1.msra.mxu0 0.0
    %836 = vmatprep.subr.mxu0 0.0
    %837 = vmatpush1.msra.mxu0 0.0
    %838 = vmatprep.subr.mxu0 0.0
    %839 = vmatpush1.msra.mxu0 0.0
    %840 = vmatprep.subr.mxu0 0.0
    %841 = vmatpush1.msra.mxu0 0.0
    %842 = vmatprep.subr.mxu0 0.0
    %843 = vmatpush1.msra.mxu0 0.0
    %844 = vmatprep.subr.mxu0 0.0
    %845 = vmatpush1.msra.mxu0 0.0
    %846 = vmatprep.subr.mxu0 0.0
    %847 = vmatpush1.msra.mxu0 0.0
    %848 = vmatprep.subr.mxu0 0.0
    %849 = vmatpush1.msra.mxu0 0.0
    %850 = vmatprep.subr.mxu0 0.0
    %851 = vmatpush1.msra.mxu0 0.0
    %852 = vmatprep.subr.mxu0 0.0
    %853 = vmatpush1.msra.mxu0 0.0
    %854 = vmatprep.subr.mxu0 0.0
    %855 = vmatpush1.msra.mxu0 0.0
    %856 = vmatprep.subr.mxu0 0.0
    %857 = vmatpush1.msra.mxu0 0.0
    %858 = vmatprep.subr.mxu0 0.0
    %859 = vmatpush1.msra.mxu0 0.0
    %860 = vmatprep.subr.mxu0 0.0
    %861 = vmatpush1.msra.mxu0 0.0
    %862 = vmatprep.subr.mxu0 0.0
    %863 = vmatpush1.msra.mxu0 0.0
    %864 = vmatprep.subr.mxu0 0.0
    %865 = vmatpush1.msra.mxu0 0.0
    %866 = vmatprep.subr.mxu0 0.0
    %867 = vmatpush1.msra.mxu0 0.0
    %868 = vmatprep.subr.mxu0 0.0
    %869 = vmatpush1.msra.mxu0 0.0
    %870 = vmatprep.subr.mxu0 0.0
    %871 = vmatpush1.msra.mxu0 0.0
    %872 = vmatprep.subr.mxu0 0.0
    %873 = vmatpush1.msra.mxu0 0.0
    %874 = vmatprep.subr.mxu0 0.0
    %875 = vmatpush1.msra.mxu0 0.0
    %876 = vmatprep.subr.mxu0 0.0
    %877 = vmatpush1.msra.mxu0 0.0
    %878 = vmatprep.subr.mxu0 0.0
    %879 = vmatpush1.msra.mxu0 0.0
    %880 = vmatprep.subr.mxu0 0.0
    %881 = vmatpush1.msra.mxu0 0.0
    %882 = vmatprep.subr.mxu0 0.0
    %883 = vmatpush1.msra.mxu0 0.0
    %884 = vmatprep.mubr.f32.mxu0 0.0
    %885 = vmatmul.mubr.f32.gmra.mrb[0].mxu0 %v812
    %v886 = vpop.f32.mrb[0].mxu0
    %v887 = vadd.f32 0.0, %v886
    %v888 = vpop.f32.mrb[0].mxu0
    %889 = vmatprep.mubr.f32.mxu0 0.0
    %890 = vmatmul.mubr.f32.gmra.mrb[0].mxu0 %v815
    %v891 = vpop.f32.mrb[0].mxu0
    %v892 = vadd.f32 0.0, %v891
    %v893 = vpop.f32.mrb[0].mxu0
    %894 = vmatprep.mubr.f32.mxu0 0.0
    %895 = vmatmul.mubr.f32.gmra.mrb[0].mxu0 %v818
    %v896 = vpop.f32.mrb[0].mxu0
    %v897 = vadd.f32 0.0, %v896
    %v898 = vpop.f32.mrb[0].mxu0
    %899 = vdwg.mxu0
    %s900 = scalar_lea.vmem %s3, 256
    %v901 = vld [vmem:[%s900] sm:$0xff]
    %v902 = vld [vmem:[%s900 + $0x8] sm:$0xff]
    %v903 = vld [vmem:[%s900 + $0x10] sm:$0xff]
    %v904 = vld [vmem:[%s900 + $0x18] sm:$0xff]
    %v905 = vld [vmem:[%s900 + $0x20] sm:$0xff]
    %v906 = vld [vmem:[%s900 + $0x28] sm:$0xff]
    %v907 = vld [vmem:[%s900 + $0x30] sm:$0xff]
    %v908 = vld [vmem:[%s900 + $0x38] sm:$0xff]
    %v910 = vsel %vm240, %v887, 0
    %v913 = vsel %vm240, %v892, 0
    %v916 = vsel %vm240, %v897, 0
    %918 = vmatprep.subr.mxu0 0.0
    %919 = vmatpush1.msra.mxu0 %v901
    %920 = vmatprep.subr.mxu0 0.0
    %921 = vmatpush1.msra.mxu0 %v902
    %922 = vmatprep.subr.mxu0 0.0
    %923 = vmatpush1.msra.mxu0 %v903
    %924 = vmatprep.subr.mxu0 0.0
    %925 = vmatpush1.msra.mxu0 %v904
    %926 = vmatprep.subr.mxu0 0.0
    %927 = vmatpush1.msra.mxu0 %v905
    %928 = vmatprep.subr.mxu0 0.0
    %929 = vmatpush1.msra.mxu0 %v906
    %930 = vmatprep.subr.mxu0 0.0
    %931 = vmatpush1.msra.mxu0 %v907
    %932 = vmatprep.subr.mxu0 0.0
    %933 = vmatpush1.msra.mxu0 %v908
    %934 = vmatprep.subr.mxu0 0.0
    %935 = vmatpush1.msra.mxu0 0.0
    %936 = vmatprep.subr.mxu0 0.0
    %937 = vmatpush1.msra.mxu0 0.0
    %938 = vmatprep.subr.mxu0 0.0
    %939 = vmatpush1.msra.mxu0 0.0
    %940 = vmatprep.subr.mxu0 0.0
    %941 = vmatpush1.msra.mxu0 0.0
    %942 = vmatprep.subr.mxu0 0.0
    %943 = vmatpush1.msra.mxu0 0.0
    %944 = vmatprep.subr.mxu0 0.0
    %945 = vmatpush1.msra.mxu0 0.0
    %946 = vmatprep.subr.mxu0 0.0
    %947 = vmatpush1.msra.mxu0 0.0
    %948 = vmatprep.subr.mxu0 0.0
    %949 = vmatpush1.msra.mxu0 0.0
    %950 = vmatprep.subr.mxu0 0.0
    %951 = vmatpush1.msra.mxu0 0.0
    %952 = vmatprep.subr.mxu0 0.0
    %953 = vmatpush1.msra.mxu0 0.0
    %954 = vmatprep.subr.mxu0 0.0
    %955 = vmatpush1.msra.mxu0 0.0
    %956 = vmatprep.subr.mxu0 0.0
    %957 = vmatpush1.msra.mxu0 0.0
    %958 = vmatprep.subr.mxu0 0.0
    %959 = vmatpush1.msra.mxu0 0.0
    %960 = vmatprep.subr.mxu0 0.0
    %961 = vmatpush1.msra.mxu0 0.0
    %962 = vmatprep.subr.mxu0 0.0
    %963 = vmatpush1.msra.mxu0 0.0
    %964 = vmatprep.subr.mxu0 0.0
    %965 = vmatpush1.msra.mxu0 0.0
    %966 = vmatprep.subr.mxu0 0.0
    %967 = vmatpush1.msra.mxu0 0.0
    %968 = vmatprep.subr.mxu0 0.0
    %969 = vmatpush1.msra.mxu0 0.0
    %970 = vmatprep.subr.mxu0 0.0
    %971 = vmatpush1.msra.mxu0 0.0
    %972 = vmatprep.subr.mxu0 0.0
    %973 = vmatpush1.msra.mxu0 0.0
    %974 = vmatprep.subr.mxu0 0.0
    %975 = vmatpush1.msra.mxu0 0.0
    %976 = vmatprep.subr.mxu0 0.0
    %977 = vmatpush1.msra.mxu0 0.0
    %978 = vmatprep.subr.mxu0 0.0
    %979 = vmatpush1.msra.mxu0 0.0
    %980 = vmatprep.subr.mxu0 0.0
    %981 = vmatpush1.msra.mxu0 0.0
    %982 = vmatprep.mubr.f32.mxu0 0.0
    %983 = vmatmul.mubr.f32.gmra.mrb[0].mxu0 %v910
    %v984 = vpop.f32.mrb[0].mxu0
    %v985 = vadd.f32 0.0, %v984
    %v986 = vpop.f32.mrb[0].mxu0
    %987 = vmatprep.mubr.f32.mxu0 0.0
    %988 = vmatmul.mubr.f32.gmra.mrb[0].mxu0 %v913
    %v989 = vpop.f32.mrb[0].mxu0
    %v990 = vadd.f32 0.0, %v989
    %v991 = vpop.f32.mrb[0].mxu0
    %992 = vmatprep.mubr.f32.mxu0 0.0
    %993 = vmatmul.mubr.f32.gmra.mrb[0].mxu0 %v916
    %v994 = vpop.f32.mrb[0].mxu0
    %v995 = vadd.f32 0.0, %v994
    %v996 = vpop.f32.mrb[0].mxu0
    %997 = vdwg.mxu0
    %v998 = vadd.f32 %v804, %v985
    %v999 = vadd.f32 %v805, %v990
    %v1000 = vadd.f32 %v806, %v995
    %s1001 = scalar_lea.vmem %s1, 120
    %v1002 = vld [vmem:[%s1001] sm:$0xff]
    %v1003 = vld [vmem:[%s1001 + $0x8] sm:$0xff]
    %v1004 = vld [vmem:[%s1001 + $0x10] sm:$0x3]
    %v1006 = vsel %vm36, %v1002, 0
    %v1009 = vsel %vm36, %v1003, 0
    %v1012 = vsel %vm36, %v1004, 0
    %1014 = vmatprep.subr.mxu0 0.0
    %1015 = vmatpush1.msra.mxu0 %v27
    %1016 = vmatprep.subr.mxu0 0.0
    %1017 = vmatpush1.msra.mxu0 %v28
    %1018 = vmatprep.subr.mxu0 0.0
    %1019 = vmatpush1.msra.mxu0 %v48
    %1020 = vmatprep.subr.mxu0 0.0
    %1021 = vmatpush1.msra.mxu0 0.0
    %1022 = vmatprep.subr.mxu0 0.0
    %1023 = vmatpush1.msra.mxu0 0.0
    %1024 = vmatprep.subr.mxu0 0.0
    %1025 = vmatpush1.msra.mxu0 0.0
    %1026 = vmatprep.subr.mxu0 0.0
    %1027 = vmatpush1.msra.mxu0 0.0
    %1028 = vmatprep.subr.mxu0 0.0
    %1029 = vmatpush1.msra.mxu0 0.0
    %1030 = vmatprep.subr.mxu0 0.0
    %1031 = vmatpush1.msra.mxu0 0.0
    %1032 = vmatprep.subr.mxu0 0.0
    %1033 = vmatpush1.msra.mxu0 0.0
    %1034 = vmatprep.subr.mxu0 0.0
    %1035 = vmatpush1.msra.mxu0 0.0
    %1036 = vmatprep.subr.mxu0 0.0
    %1037 = vmatpush1.msra.mxu0 0.0
    %1038 = vmatprep.subr.mxu0 0.0
    %1039 = vmatpush1.msra.mxu0 0.0
    %1040 = vmatprep.subr.mxu0 0.0
    %1041 = vmatpush1.msra.mxu0 0.0
    %1042 = vmatprep.subr.mxu0 0.0
    %1043 = vmatpush1.msra.mxu0 0.0
    %1044 = vmatprep.subr.mxu0 0.0
    %1045 = vmatpush1.msra.mxu0 0.0
    %1046 = vmatprep.subr.mxu0 0.0
    %1047 = vmatpush1.msra.mxu0 0.0
    %1048 = vmatprep.subr.mxu0 0.0
    %1049 = vmatpush1.msra.mxu0 0.0
    %1050 = vmatprep.subr.mxu0 0.0
    %1051 = vmatpush1.msra.mxu0 0.0
    %1052 = vmatprep.subr.mxu0 0.0
    %1053 = vmatpush1.msra.mxu0 0.0
    %1054 = vmatprep.subr.mxu0 0.0
    %1055 = vmatpush1.msra.mxu0 0.0
    %1056 = vmatprep.subr.mxu0 0.0
    %1057 = vmatpush1.msra.mxu0 0.0
    %1058 = vmatprep.subr.mxu0 0.0
    %1059 = vmatpush1.msra.mxu0 0.0
    %1060 = vmatprep.subr.mxu0 0.0
    %1061 = vmatpush1.msra.mxu0 0.0
    %1062 = vmatprep.subr.mxu0 0.0
    %1063 = vmatpush1.msra.mxu0 0.0
    %1064 = vmatprep.subr.mxu0 0.0
    %1065 = vmatpush1.msra.mxu0 0.0
    %1066 = vmatprep.subr.mxu0 0.0
    %1067 = vmatpush1.msra.mxu0 0.0
    %1068 = vmatprep.subr.mxu0 0.0
    %1069 = vmatpush1.msra.mxu0 0.0
    %1070 = vmatprep.subr.mxu0 0.0
    %1071 = vmatpush1.msra.mxu0 0.0
    %1072 = vmatprep.subr.mxu0 0.0
    %1073 = vmatpush1.msra.mxu0 0.0
    %1074 = vmatprep.subr.mxu0 0.0
    %1075 = vmatpush1.msra.mxu0 0.0
    %1076 = vmatprep.subr.mxu0 0.0
    %1077 = vmatpush1.msra.mxu0 0.0
    %1078 = vmatprep.mubr.f32.mxu0 0.0
    %1079 = vmatmul.mubr.f32.gmra.mrb[0].mxu0 %v1006
    %v1080 = vpop.f32.mrb[0].mxu0
    %v1081 = vadd.f32 0.0, %v1080
    %v1082 = vpop.f32.mrb[0].mxu0
    %1083 = vmatprep.mubr.f32.mxu0 0.0
    %1084 = vmatmul.mubr.f32.gmra.mrb[0].mxu0 %v1009
    %v1085 = vpop.f32.mrb[0].mxu0
    %v1086 = vadd.f32 0.0, %v1085
    %v1087 = vpop.f32.mrb[0].mxu0
    %1088 = vmatprep.mubr.f32.mxu0 0.0
    %1089 = vmatmul.mubr.f32.gmra.mrb[0].mxu0 %v1012
    %v1090 = vpop.f32.mrb[0].mxu0
    %v1091 = vadd.f32 0.0, %v1090
    %v1092 = vpop.f32.mrb[0].mxu0
    %1093 = vdwg.mxu0
    %s1094 = scalar_lea.vmem %s3, 320
    %v1095 = vld [vmem:[%s1094] sm:$0xff]
    %v1096 = vld [vmem:[%s1094 + $0x8] sm:$0xff]
    %v1097 = vld [vmem:[%s1094 + $0x10] sm:$0xff]
    %v1098 = vld [vmem:[%s1094 + $0x18] sm:$0xff]
    %v1099 = vld [vmem:[%s1094 + $0x20] sm:$0xff]
    %v1100 = vld [vmem:[%s1094 + $0x28] sm:$0xff]
    %v1101 = vld [vmem:[%s1094 + $0x30] sm:$0xff]
    %v1102 = vld [vmem:[%s1094 + $0x38] sm:$0xff]
    %v1104 = vsel %vm240, %v1081, 0
    %v1107 = vsel %vm240, %v1086, 0
    %v1110 = vsel %vm240, %v1091, 0
    %1112 = vmatprep.subr.mxu0 0.0
    %1113 = vmatpush1.msra.mxu0 %v1095
    %1114 = vmatprep.subr.mxu0 0.0
    %1115 = vmatpush1.msra.mxu0 %v1096
    %1116 = vmatprep.subr.mxu0 0.0
    %1117 = vmatpush1.msra.mxu0 %v1097
    %1118 = vmatprep.subr.mxu0 0.0
    %1119 = vmatpush1.msra.mxu0 %v1098
    %1120 = vmatprep.subr.mxu0 0.0
    %1121 = vmatpush1.msra.mxu0 %v1099
    %1122 = vmatprep.subr.mxu0 0.0
    %1123 = vmatpush1.msra.mxu0 %v1100
    %1124 = vmatprep.subr.mxu0 0.0
    %1125 = vmatpush1.msra.mxu0 %v1101
    %1126 = vmatprep.subr.mxu0 0.0
    %1127 = vmatpush1.msra.mxu0 %v1102
    %1128 = vmatprep.subr.mxu0 0.0
    %1129 = vmatpush1.msra.mxu0 0.0
    %1130 = vmatprep.subr.mxu0 0.0
    %1131 = vmatpush1.msra.mxu0 0.0
    %1132 = vmatprep.subr.mxu0 0.0
    %1133 = vmatpush1.msra.mxu0 0.0
    %1134 = vmatprep.subr.mxu0 0.0
    %1135 = vmatpush1.msra.mxu0 0.0
    %1136 = vmatprep.subr.mxu0 0.0
    %1137 = vmatpush1.msra.mxu0 0.0
    %1138 = vmatprep.subr.mxu0 0.0
    %1139 = vmatpush1.msra.mxu0 0.0
    %1140 = vmatprep.subr.mxu0 0.0
    %1141 = vmatpush1.msra.mxu0 0.0
    %1142 = vmatprep.subr.mxu0 0.0
    %1143 = vmatpush1.msra.mxu0 0.0
    %1144 = vmatprep.subr.mxu0 0.0
    %1145 = vmatpush1.msra.mxu0 0.0
    %1146 = vmatprep.subr.mxu0 0.0
    %1147 = vmatpush1.msra.mxu0 0.0
    %1148 = vmatprep.subr.mxu0 0.0
    %1149 = vmatpush1.msra.mxu0 0.0
    %1150 = vmatprep.subr.mxu0 0.0
    %1151 = vmatpush1.msra.mxu0 0.0
    %1152 = vmatprep.subr.mxu0 0.0
    %1153 = vmatpush1.msra.mxu0 0.0
    %1154 = vmatprep.subr.mxu0 0.0
    %1155 = vmatpush1.msra.mxu0 0.0
    %1156 = vmatprep.subr.mxu0 0.0
    %1157 = vmatpush1.msra.mxu0 0.0
    %1158 = vmatprep.subr.mxu0 0.0
    %1159 = vmatpush1.msra.mxu0 0.0
    %1160 = vmatprep.subr.mxu0 0.0
    %1161 = vmatpush1.msra.mxu0 0.0
    %1162 = vmatprep.subr.mxu0 0.0
    %1163 = vmatpush1.msra.mxu0 0.0
    %1164 = vmatprep.subr.mxu0 0.0
    %1165 = vmatpush1.msra.mxu0 0.0
    %1166 = vmatprep.subr.mxu0 0.0
    %1167 = vmatpush1.msra.mxu0 0.0
    %1168 = vmatprep.subr.mxu0 0.0
    %1169 = vmatpush1.msra.mxu0 0.0
    %1170 = vmatprep.subr.mxu0 0.0
    %1171 = vmatpush1.msra.mxu0 0.0
    %1172 = vmatprep.subr.mxu0 0.0
    %1173 = vmatpush1.msra.mxu0 0.0
    %1174 = vmatprep.subr.mxu0 0.0
    %1175 = vmatpush1.msra.mxu0 0.0
    %1176 = vmatprep.mubr.f32.mxu0 0.0
    %1177 = vmatmul.mubr.f32.gmra.mrb[0].mxu0 %v1104
    %v1178 = vpop.f32.mrb[0].mxu0
    %v1179 = vadd.f32 0.0, %v1178
    %v1180 = vpop.f32.mrb[0].mxu0
    %1181 = vmatprep.mubr.f32.mxu0 0.0
    %1182 = vmatmul.mubr.f32.gmra.mrb[0].mxu0 %v1107
    %v1183 = vpop.f32.mrb[0].mxu0
    %v1184 = vadd.f32 0.0, %v1183
    %v1185 = vpop.f32.mrb[0].mxu0
    %1186 = vmatprep.mubr.f32.mxu0 0.0
    %1187 = vmatmul.mubr.f32.gmra.mrb[0].mxu0 %v1110
    %v1188 = vpop.f32.mrb[0].mxu0
    %v1189 = vadd.f32 0.0, %v1188
    %v1190 = vpop.f32.mrb[0].mxu0
    %1191 = vdwg.mxu0
    %v1192 = vadd.f32 %v998, %v1179
    %v1193 = vadd.f32 %v999, %v1184
    %v1194 = vadd.f32 %v1000, %v1189
    %s1195 = scalar_lea.vmem %s1, 144
    %v1196 = vld [vmem:[%s1195] sm:$0xff]
    %v1197 = vld [vmem:[%s1195 + $0x8] sm:$0xff]
    %v1198 = vld [vmem:[%s1195 + $0x10] sm:$0x3]
    %v1200 = vsel %vm36, %v1196, 0
    %v1203 = vsel %vm36, %v1197, 0
    %v1206 = vsel %vm36, %v1198, 0
    %1208 = vmatprep.subr.mxu0 0.0
    %1209 = vmatpush1.msra.mxu0 %v27
    %1210 = vmatprep.subr.mxu0 0.0
    %1211 = vmatpush1.msra.mxu0 %v28
    %1212 = vmatprep.subr.mxu0 0.0
    %1213 = vmatpush1.msra.mxu0 %v48
    %1214 = vmatprep.subr.mxu0 0.0
    %1215 = vmatpush1.msra.mxu0 0.0
    %1216 = vmatprep.subr.mxu0 0.0
    %1217 = vmatpush1.msra.mxu0 0.0
    %1218 = vmatprep.subr.mxu0 0.0
    %1219 = vmatpush1.msra.mxu0 0.0
    %1220 = vmatprep.subr.mxu0 0.0
    %1221 = vmatpush1.msra.mxu0 0.0
    %1222 = vmatprep.subr.mxu0 0.0
    %1223 = vmatpush1.msra.mxu0 0.0
    %1224 = vmatprep.subr.mxu0 0.0
    %1225 = vmatpush1.msra.mxu0 0.0
    %1226 = vmatprep.subr.mxu0 0.0
    %1227 = vmatpush1.msra.mxu0 0.0
    %1228 = vmatprep.subr.mxu0 0.0
    %1229 = vmatpush1.msra.mxu0 0.0
    %1230 = vmatprep.subr.mxu0 0.0
    %1231 = vmatpush1.msra.mxu0 0.0
    %1232 = vmatprep.subr.mxu0 0.0
    %1233 = vmatpush1.msra.mxu0 0.0
    %1234 = vmatprep.subr.mxu0 0.0
    %1235 = vmatpush1.msra.mxu0 0.0
    %1236 = vmatprep.subr.mxu0 0.0
    %1237 = vmatpush1.msra.mxu0 0.0
    %1238 = vmatprep.subr.mxu0 0.0
    %1239 = vmatpush1.msra.mxu0 0.0
    %1240 = vmatprep.subr.mxu0 0.0
    %1241 = vmatpush1.msra.mxu0 0.0
    %1242 = vmatprep.subr.mxu0 0.0
    %1243 = vmatpush1.msra.mxu0 0.0
    %1244 = vmatprep.subr.mxu0 0.0
    %1245 = vmatpush1.msra.mxu0 0.0
    %1246 = vmatprep.subr.mxu0 0.0
    %1247 = vmatpush1.msra.mxu0 0.0
    %1248 = vmatprep.subr.mxu0 0.0
    %1249 = vmatpush1.msra.mxu0 0.0
    %1250 = vmatprep.subr.mxu0 0.0
    %1251 = vmatpush1.msra.mxu0 0.0
    %1252 = vmatprep.subr.mxu0 0.0
    %1253 = vmatpush1.msra.mxu0 0.0
    %1254 = vmatprep.subr.mxu0 0.0
    %1255 = vmatpush1.msra.mxu0 0.0
    %1256 = vmatprep.subr.mxu0 0.0
    %1257 = vmatpush1.msra.mxu0 0.0
    %1258 = vmatprep.subr.mxu0 0.0
    %1259 = vmatpush1.msra.mxu0 0.0
    %1260 = vmatprep.subr.mxu0 0.0
    %1261 = vmatpush1.msra.mxu0 0.0
    %1262 = vmatprep.subr.mxu0 0.0
    %1263 = vmatpush1.msra.mxu0 0.0
    %1264 = vmatprep.subr.mxu0 0.0
    %1265 = vmatpush1.msra.mxu0 0.0
    %1266 = vmatprep.subr.mxu0 0.0
    %1267 = vmatpush1.msra.mxu0 0.0
    %1268 = vmatprep.subr.mxu0 0.0
    %1269 = vmatpush1.msra.mxu0 0.0
    %1270 = vmatprep.subr.mxu0 0.0
    %1271 = vmatpush1.msra.mxu0 0.0
    %1272 = vmatprep.mubr.f32.mxu0 0.0
    %1273 = vmatmul.mubr.f32.gmra.mrb[0].mxu0 %v1200
    %v1274 = vpop.f32.mrb[0].mxu0
    %v1275 = vadd.f32 0.0, %v1274
    %v1276 = vpop.f32.mrb[0].mxu0
    %1277 = vmatprep.mubr.f32.mxu0 0.0
    %1278 = vmatmul.mubr.f32.gmra.mrb[0].mxu0 %v1203
    %v1279 = vpop.f32.mrb[0].mxu0
    %v1280 = vadd.f32 0.0, %v1279
    %v1281 = vpop.f32.mrb[0].mxu0
    %1282 = vmatprep.mubr.f32.mxu0 0.0
    %1283 = vmatmul.mubr.f32.gmra.mrb[0].mxu0 %v1206
    %v1284 = vpop.f32.mrb[0].mxu0
    %v1285 = vadd.f32 0.0, %v1284
    %v1286 = vpop.f32.mrb[0].mxu0
    %1287 = vdwg.mxu0
    %s1288 = scalar_lea.vmem %s3, 384
    %v1289 = vld [vmem:[%s1288] sm:$0xff]
    %v1290 = vld [vmem:[%s1288 + $0x8] sm:$0xff]
    %v1291 = vld [vmem:[%s1288 + $0x10] sm:$0xff]
    %v1292 = vld [vmem:[%s1288 + $0x18] sm:$0xff]
    %v1293 = vld [vmem:[%s1288 + $0x20] sm:$0xff]
    %v1294 = vld [vmem:[%s1288 + $0x28] sm:$0xff]
    %v1295 = vld [vmem:[%s1288 + $0x30] sm:$0xff]
    %v1296 = vld [vmem:[%s1288 + $0x38] sm:$0xff]
    %v1298 = vsel %vm240, %v1275, 0
    %v1301 = vsel %vm240, %v1280, 0
    %v1304 = vsel %vm240, %v1285, 0
    %1306 = vmatprep.subr.mxu0 0.0
    %1307 = vmatpush1.msra.mxu0 %v1289
    %1308 = vmatprep.subr.mxu0 0.0
    %1309 = vmatpush1.msra.mxu0 %v1290
    %1310 = vmatprep.subr.mxu0 0.0
    %1311 = vmatpush1.msra.mxu0 %v1291
    %1312 = vmatprep.subr.mxu0 0.0
    %1313 = vmatpush1.msra.mxu0 %v1292
    %1314 = vmatprep.subr.mxu0 0.0
    %1315 = vmatpush1.msra.mxu0 %v1293
    %1316 = vmatprep.subr.mxu0 0.0
    %1317 = vmatpush1.msra.mxu0 %v1294
    %1318 = vmatprep.subr.mxu0 0.0
    %1319 = vmatpush1.msra.mxu0 %v1295
    %1320 = vmatprep.subr.mxu0 0.0
    %1321 = vmatpush1.msra.mxu0 %v1296
    %1322 = vmatprep.subr.mxu0 0.0
    %1323 = vmatpush1.msra.mxu0 0.0
    %1324 = vmatprep.subr.mxu0 0.0
    %1325 = vmatpush1.msra.mxu0 0.0
    %1326 = vmatprep.subr.mxu0 0.0
    %1327 = vmatpush1.msra.mxu0 0.0
    %1328 = vmatprep.subr.mxu0 0.0
    %1329 = vmatpush1.msra.mxu0 0.0
    %1330 = vmatprep.subr.mxu0 0.0
    %1331 = vmatpush1.msra.mxu0 0.0
    %1332 = vmatprep.subr.mxu0 0.0
    %1333 = vmatpush1.msra.mxu0 0.0
    %1334 = vmatprep.subr.mxu0 0.0
    %1335 = vmatpush1.msra.mxu0 0.0
    %1336 = vmatprep.subr.mxu0 0.0
    %1337 = vmatpush1.msra.mxu0 0.0
    %1338 = vmatprep.subr.mxu0 0.0
    %1339 = vmatpush1.msra.mxu0 0.0
    %1340 = vmatprep.subr.mxu0 0.0
    %1341 = vmatpush1.msra.mxu0 0.0
    %1342 = vmatprep.subr.mxu0 0.0
    %1343 = vmatpush1.msra.mxu0 0.0
    %1344 = vmatprep.subr.mxu0 0.0
    %1345 = vmatpush1.msra.mxu0 0.0
    %1346 = vmatprep.subr.mxu0 0.0
    %1347 = vmatpush1.msra.mxu0 0.0
    %1348 = vmatprep.subr.mxu0 0.0
    %1349 = vmatpush1.msra.mxu0 0.0
    %1350 = vmatprep.subr.mxu0 0.0
    %1351 = vmatpush1.msra.mxu0 0.0
    %1352 = vmatprep.subr.mxu0 0.0
    %1353 = vmatpush1.msra.mxu0 0.0
    %1354 = vmatprep.subr.mxu0 0.0
    %1355 = vmatpush1.msra.mxu0 0.0
    %1356 = vmatprep.subr.mxu0 0.0
    %1357 = vmatpush1.msra.mxu0 0.0
    %1358 = vmatprep.subr.mxu0 0.0
    %1359 = vmatpush1.msra.mxu0 0.0
    %1360 = vmatprep.subr.mxu0 0.0
    %1361 = vmatpush1.msra.mxu0 0.0
    %1362 = vmatprep.subr.mxu0 0.0
    %1363 = vmatpush1.msra.mxu0 0.0
    %1364 = vmatprep.subr.mxu0 0.0
    %1365 = vmatpush1.msra.mxu0 0.0
    %1366 = vmatprep.subr.mxu0 0.0
    %1367 = vmatpush1.msra.mxu0 0.0
    %1368 = vmatprep.subr.mxu0 0.0
    %1369 = vmatpush1.msra.mxu0 0.0
    %1370 = vmatprep.mubr.f32.mxu0 0.0
    %1371 = vmatmul.mubr.f32.gmra.mrb[0].mxu0 %v1298
    %v1372 = vpop.f32.mrb[0].mxu0
    %v1373 = vadd.f32 0.0, %v1372
    %v1374 = vpop.f32.mrb[0].mxu0
    %1375 = vmatprep.mubr.f32.mxu0 0.0
    %1376 = vmatmul.mubr.f32.gmra.mrb[0].mxu0 %v1301
    %v1377 = vpop.f32.mrb[0].mxu0
    %v1378 = vadd.f32 0.0, %v1377
    %v1379 = vpop.f32.mrb[0].mxu0
    %1380 = vmatprep.mubr.f32.mxu0 0.0
    %1381 = vmatmul.mubr.f32.gmra.mrb[0].mxu0 %v1304
    %v1382 = vpop.f32.mrb[0].mxu0
    %v1383 = vadd.f32 0.0, %v1382
    %v1384 = vpop.f32.mrb[0].mxu0
    %1385 = vdwg.mxu0
    %v1386 = vadd.f32 %v1192, %v1373
    %v1387 = vadd.f32 %v1193, %v1378
    %v1388 = vadd.f32 %v1194, %v1383
    %s1389 = scalar_lea.vmem %s1, 168
    %v1390 = vld [vmem:[%s1389] sm:$0xff]
    %v1391 = vld [vmem:[%s1389 + $0x8] sm:$0xff]
    %v1392 = vld [vmem:[%s1389 + $0x10] sm:$0x3]
    %v1394 = vsel %vm36, %v1390, 0
    %v1397 = vsel %vm36, %v1391, 0
    %v1400 = vsel %vm36, %v1392, 0
    %1402 = vmatprep.subr.mxu0 0.0
    %1403 = vmatpush1.msra.mxu0 %v27
    %1404 = vmatprep.subr.mxu0 0.0
    %1405 = vmatpush1.msra.mxu0 %v28
    %1406 = vmatprep.subr.mxu0 0.0
    %1407 = vmatpush1.msra.mxu0 %v48
    %1408 = vmatprep.subr.mxu0 0.0
    %1409 = vmatpush1.msra.mxu0 0.0
    %1410 = vmatprep.subr.mxu0 0.0
    %1411 = vmatpush1.msra.mxu0 0.0
    %1412 = vmatprep.subr.mxu0 0.0
    %1413 = vmatpush1.msra.mxu0 0.0
    %1414 = vmatprep.subr.mxu0 0.0
    %1415 = vmatpush1.msra.mxu0 0.0
    %1416 = vmatprep.subr.mxu0 0.0
    %1417 = vmatpush1.msra.mxu0 0.0
    %1418 = vmatprep.subr.mxu0 0.0
    %1419 = vmatpush1.msra.mxu0 0.0
    %1420 = vmatprep.subr.mxu0 0.0
    %1421 = vmatpush1.msra.mxu0 0.0
    %1422 = vmatprep.subr.mxu0 0.0
    %1423 = vmatpush1.msra.mxu0 0.0
    %1424 = vmatprep.subr.mxu0 0.0
    %1425 = vmatpush1.msra.mxu0 0.0
    %1426 = vmatprep.subr.mxu0 0.0
    %1427 = vmatpush1.msra.mxu0 0.0
    %1428 = vmatprep.subr.mxu0 0.0
    %1429 = vmatpush1.msra.mxu0 0.0
    %1430 = vmatprep.subr.mxu0 0.0
    %1431 = vmatpush1.msra.mxu0 0.0
    %1432 = vmatprep.subr.mxu0 0.0
    %1433 = vmatpush1.msra.mxu0 0.0
    %1434 = vmatprep.subr.mxu0 0.0
    %1435 = vmatpush1.msra.mxu0 0.0
    %1436 = vmatprep.subr.mxu0 0.0
    %1437 = vmatpush1.msra.mxu0 0.0
    %1438 = vmatprep.subr.mxu0 0.0
    %1439 = vmatpush1.msra.mxu0 0.0
    %1440 = vmatprep.subr.mxu0 0.0
    %1441 = vmatpush1.msra.mxu0 0.0
    %1442 = vmatprep.subr.mxu0 0.0
    %1443 = vmatpush1.msra.mxu0 0.0
    %1444 = vmatprep.subr.mxu0 0.0
    %1445 = vmatpush1.msra.mxu0 0.0
    %1446 = vmatprep.subr.mxu0 0.0
    %1447 = vmatpush1.msra.mxu0 0.0
    %1448 = vmatprep.subr.mxu0 0.0
    %1449 = vmatpush1.msra.mxu0 0.0
    %1450 = vmatprep.subr.mxu0 0.0
    %1451 = vmatpush1.msra.mxu0 0.0
    %1452 = vmatprep.subr.mxu0 0.0
    %1453 = vmatpush1.msra.mxu0 0.0
    %1454 = vmatprep.subr.mxu0 0.0
    %1455 = vmatpush1.msra.mxu0 0.0
    %1456 = vmatprep.subr.mxu0 0.0
    %1457 = vmatpush1.msra.mxu0 0.0
    %1458 = vmatprep.subr.mxu0 0.0
    %1459 = vmatpush1.msra.mxu0 0.0
    %1460 = vmatprep.subr.mxu0 0.0
    %1461 = vmatpush1.msra.mxu0 0.0
    %1462 = vmatprep.subr.mxu0 0.0
    %1463 = vmatpush1.msra.mxu0 0.0
    %1464 = vmatprep.subr.mxu0 0.0
    %1465 = vmatpush1.msra.mxu0 0.0
    %1466 = vmatprep.mubr.f32.mxu0 0.0
    %1467 = vmatmul.mubr.f32.gmra.mrb[0].mxu0 %v1394
    %v1468 = vpop.f32.mrb[0].mxu0
    %v1469 = vadd.f32 0.0, %v1468
    %v1470 = vpop.f32.mrb[0].mxu0
    %1471 = vmatprep.mubr.f32.mxu0 0.0
    %1472 = vmatmul.mubr.f32.gmra.mrb[0].mxu0 %v1397
    %v1473 = vpop.f32.mrb[0].mxu0
    %v1474 = vadd.f32 0.0, %v1473
    %v1475 = vpop.f32.mrb[0].mxu0
    %1476 = vmatprep.mubr.f32.mxu0 0.0
    %1477 = vmatmul.mubr.f32.gmra.mrb[0].mxu0 %v1400
    %v1478 = vpop.f32.mrb[0].mxu0
    %v1479 = vadd.f32 0.0, %v1478
    %v1480 = vpop.f32.mrb[0].mxu0
    %1481 = vdwg.mxu0
    %s1482 = scalar_lea.vmem %s3, 448
    %v1483 = vld [vmem:[%s1482] sm:$0xff]
    %v1484 = vld [vmem:[%s1482 + $0x8] sm:$0xff]
    %v1485 = vld [vmem:[%s1482 + $0x10] sm:$0xff]
    %v1486 = vld [vmem:[%s1482 + $0x18] sm:$0xff]
    %v1487 = vld [vmem:[%s1482 + $0x20] sm:$0xff]
    %v1488 = vld [vmem:[%s1482 + $0x28] sm:$0xff]
    %v1489 = vld [vmem:[%s1482 + $0x30] sm:$0xff]
    %v1490 = vld [vmem:[%s1482 + $0x38] sm:$0xff]
    %v1492 = vsel %vm240, %v1469, 0
    %v1495 = vsel %vm240, %v1474, 0
    %v1498 = vsel %vm240, %v1479, 0
    %1500 = vmatprep.subr.mxu0 0.0
    %1501 = vmatpush1.msra.mxu0 %v1483
    %1502 = vmatprep.subr.mxu0 0.0
    %1503 = vmatpush1.msra.mxu0 %v1484
    %1504 = vmatprep.subr.mxu0 0.0
    %1505 = vmatpush1.msra.mxu0 %v1485
    %1506 = vmatprep.subr.mxu0 0.0
    %1507 = vmatpush1.msra.mxu0 %v1486
    %1508 = vmatprep.subr.mxu0 0.0
    %1509 = vmatpush1.msra.mxu0 %v1487
    %1510 = vmatprep.subr.mxu0 0.0
    %1511 = vmatpush1.msra.mxu0 %v1488
    %1512 = vmatprep.subr.mxu0 0.0
    %1513 = vmatpush1.msra.mxu0 %v1489
    %1514 = vmatprep.subr.mxu0 0.0
    %1515 = vmatpush1.msra.mxu0 %v1490
    %1516 = vmatprep.subr.mxu0 0.0
    %1517 = vmatpush1.msra.mxu0 0.0
    %1518 = vmatprep.subr.mxu0 0.0
    %1519 = vmatpush1.msra.mxu0 0.0
    %1520 = vmatprep.subr.mxu0 0.0
    %1521 = vmatpush1.msra.mxu0 0.0
    %1522 = vmatprep.subr.mxu0 0.0
    %1523 = vmatpush1.msra.mxu0 0.0
    %1524 = vmatprep.subr.mxu0 0.0
    %1525 = vmatpush1.msra.mxu0 0.0
    %1526 = vmatprep.subr.mxu0 0.0
    %1527 = vmatpush1.msra.mxu0 0.0
    %1528 = vmatprep.subr.mxu0 0.0
    %1529 = vmatpush1.msra.mxu0 0.0
    %1530 = vmatprep.subr.mxu0 0.0
    %1531 = vmatpush1.msra.mxu0 0.0
    %1532 = vmatprep.subr.mxu0 0.0
    %1533 = vmatpush1.msra.mxu0 0.0
    %1534 = vmatprep.subr.mxu0 0.0
    %1535 = vmatpush1.msra.mxu0 0.0
    %1536 = vmatprep.subr.mxu0 0.0
    %1537 = vmatpush1.msra.mxu0 0.0
    %1538 = vmatprep.subr.mxu0 0.0
    %1539 = vmatpush1.msra.mxu0 0.0
    %1540 = vmatprep.subr.mxu0 0.0
    %1541 = vmatpush1.msra.mxu0 0.0
    %1542 = vmatprep.subr.mxu0 0.0
    %1543 = vmatpush1.msra.mxu0 0.0
    %1544 = vmatprep.subr.mxu0 0.0
    %1545 = vmatpush1.msra.mxu0 0.0
    %1546 = vmatprep.subr.mxu0 0.0
    %1547 = vmatpush1.msra.mxu0 0.0
    %1548 = vmatprep.subr.mxu0 0.0
    %1549 = vmatpush1.msra.mxu0 0.0
    %1550 = vmatprep.subr.mxu0 0.0
    %1551 = vmatpush1.msra.mxu0 0.0
    %1552 = vmatprep.subr.mxu0 0.0
    %1553 = vmatpush1.msra.mxu0 0.0
    %1554 = vmatprep.subr.mxu0 0.0
    %1555 = vmatpush1.msra.mxu0 0.0
    %1556 = vmatprep.subr.mxu0 0.0
    %1557 = vmatpush1.msra.mxu0 0.0
    %1558 = vmatprep.subr.mxu0 0.0
    %1559 = vmatpush1.msra.mxu0 0.0
    %1560 = vmatprep.subr.mxu0 0.0
    %1561 = vmatpush1.msra.mxu0 0.0
    %1562 = vmatprep.subr.mxu0 0.0
    %1563 = vmatpush1.msra.mxu0 0.0
    %1564 = vmatprep.mubr.f32.mxu0 0.0
    %1565 = vmatmul.mubr.f32.gmra.mrb[0].mxu0 %v1492
    %v1566 = vpop.f32.mrb[0].mxu0
    %v1567 = vadd.f32 0.0, %v1566
    %v1568 = vpop.f32.mrb[0].mxu0
    %1569 = vmatprep.mubr.f32.mxu0 0.0
    %1570 = vmatmul.mubr.f32.gmra.mrb[0].mxu0 %v1495
    %v1571 = vpop.f32.mrb[0].mxu0
    %v1572 = vadd.f32 0.0, %v1571
    %v1573 = vpop.f32.mrb[0].mxu0
    %1574 = vmatprep.mubr.f32.mxu0 0.0
    %1575 = vmatmul.mubr.f32.gmra.mrb[0].mxu0 %v1498
    %v1576 = vpop.f32.mrb[0].mxu0
    %v1577 = vadd.f32 0.0, %v1576
    %v1578 = vpop.f32.mrb[0].mxu0
    %1579 = vdwg.mxu0
    %v1580 = vadd.f32 %v1386, %v1567
    %v1581 = vadd.f32 %v1387, %v1572
    %v1582 = vadd.f32 %v1388, %v1577
    %s1583 = scalar_lea.vmem %s1, 192
    %v1584 = vld [vmem:[%s1583] sm:$0xff]
    %v1585 = vld [vmem:[%s1583 + $0x8] sm:$0xff]
    %v1586 = vld [vmem:[%s1583 + $0x10] sm:$0x3]
    %v1588 = vsel %vm36, %v1584, 0
    %v1591 = vsel %vm36, %v1585, 0
    %v1594 = vsel %vm36, %v1586, 0
    %1596 = vmatprep.subr.mxu0 0.0
    %1597 = vmatpush1.msra.mxu0 %v27
    %1598 = vmatprep.subr.mxu0 0.0
    %1599 = vmatpush1.msra.mxu0 %v28
    %1600 = vmatprep.subr.mxu0 0.0
    %1601 = vmatpush1.msra.mxu0 %v48
    %1602 = vmatprep.subr.mxu0 0.0
    %1603 = vmatpush1.msra.mxu0 0.0
    %1604 = vmatprep.subr.mxu0 0.0
    %1605 = vmatpush1.msra.mxu0 0.0
    %1606 = vmatprep.subr.mxu0 0.0
    %1607 = vmatpush1.msra.mxu0 0.0
    %1608 = vmatprep.subr.mxu0 0.0
    %1609 = vmatpush1.msra.mxu0 0.0
    %1610 = vmatprep.subr.mxu0 0.0
    %1611 = vmatpush1.msra.mxu0 0.0
    %1612 = vmatprep.subr.mxu0 0.0
    %1613 = vmatpush1.msra.mxu0 0.0
    %1614 = vmatprep.subr.mxu0 0.0
    %1615 = vmatpush1.msra.mxu0 0.0
    %1616 = vmatprep.subr.mxu0 0.0
    %1617 = vmatpush1.msra.mxu0 0.0
    %1618 = vmatprep.subr.mxu0 0.0
    %1619 = vmatpush1.msra.mxu0 0.0
    %1620 = vmatprep.subr.mxu0 0.0
    %1621 = vmatpush1.msra.mxu0 0.0
    %1622 = vmatprep.subr.mxu0 0.0
    %1623 = vmatpush1.msra.mxu0 0.0
    %1624 = vmatprep.subr.mxu0 0.0
    %1625 = vmatpush1.msra.mxu0 0.0
    %1626 = vmatprep.subr.mxu0 0.0
    %1627 = vmatpush1.msra.mxu0 0.0
    %1628 = vmatprep.subr.mxu0 0.0
    %1629 = vmatpush1.msra.mxu0 0.0
    %1630 = vmatprep.subr.mxu0 0.0
    %1631 = vmatpush1.msra.mxu0 0.0
    %1632 = vmatprep.subr.mxu0 0.0
    %1633 = vmatpush1.msra.mxu0 0.0
    %1634 = vmatprep.subr.mxu0 0.0
    %1635 = vmatpush1.msra.mxu0 0.0
    %1636 = vmatprep.subr.mxu0 0.0
    %1637 = vmatpush1.msra.mxu0 0.0
    %1638 = vmatprep.subr.mxu0 0.0
    %1639 = vmatpush1.msra.mxu0 0.0
    %1640 = vmatprep.subr.mxu0 0.0
    %1641 = vmatpush1.msra.mxu0 0.0
    %1642 = vmatprep.subr.mxu0 0.0
    %1643 = vmatpush1.msra.mxu0 0.0
    %1644 = vmatprep.subr.mxu0 0.0
    %1645 = vmatpush1.msra.mxu0 0.0
    %1646 = vmatprep.subr.mxu0 0.0
    %1647 = vmatpush1.msra.mxu0 0.0
    %1648 = vmatprep.subr.mxu0 0.0
    %1649 = vmatpush1.msra.mxu0 0.0
    %1650 = vmatprep.subr.mxu0 0.0
    %1651 = vmatpush1.msra.mxu0 0.0
    %1652 = vmatprep.subr.mxu0 0.0
    %1653 = vmatpush1.msra.mxu0 0.0
    %1654 = vmatprep.subr.mxu0 0.0
    %1655 = vmatpush1.msra.mxu0 0.0
    %1656 = vmatprep.subr.mxu0 0.0
    %1657 = vmatpush1.msra.mxu0 0.0
    %1658 = vmatprep.subr.mxu0 0.0
    %1659 = vmatpush1.msra.mxu0 0.0
    %1660 = vmatprep.mubr.f32.mxu0 0.0
    %1661 = vmatmul.mubr.f32.gmra.mrb[0].mxu0 %v1588
    %v1662 = vpop.f32.mrb[0].mxu0
    %v1663 = vadd.f32 0.0, %v1662
    %v1664 = vpop.f32.mrb[0].mxu0
    %1665 = vmatprep.mubr.f32.mxu0 0.0
    %1666 = vmatmul.mubr.f32.gmra.mrb[0].mxu0 %v1591
    %v1667 = vpop.f32.mrb[0].mxu0
    %v1668 = vadd.f32 0.0, %v1667
    %v1669 = vpop.f32.mrb[0].mxu0
    %1670 = vmatprep.mubr.f32.mxu0 0.0
    %1671 = vmatmul.mubr.f32.gmra.mrb[0].mxu0 %v1594
    %v1672 = vpop.f32.mrb[0].mxu0
    %v1673 = vadd.f32 0.0, %v1672
    %v1674 = vpop.f32.mrb[0].mxu0
    %1675 = vdwg.mxu0
    %s1676 = scalar_lea.vmem %s3, 512
    %v1677 = vld [vmem:[%s1676] sm:$0xff]
    %v1678 = vld [vmem:[%s1676 + $0x8] sm:$0xff]
    %v1679 = vld [vmem:[%s1676 + $0x10] sm:$0xff]
    %v1680 = vld [vmem:[%s1676 + $0x18] sm:$0xff]
    %v1681 = vld [vmem:[%s1676 + $0x20] sm:$0xff]
    %v1682 = vld [vmem:[%s1676 + $0x28] sm:$0xff]
    %v1683 = vld [vmem:[%s1676 + $0x30] sm:$0xff]
    %v1684 = vld [vmem:[%s1676 + $0x38] sm:$0xff]
    %v1686 = vsel %vm240, %v1663, 0
    %v1689 = vsel %vm240, %v1668, 0
    %v1692 = vsel %vm240, %v1673, 0
    %1694 = vmatprep.subr.mxu0 0.0
    %1695 = vmatpush1.msra.mxu0 %v1677
    %1696 = vmatprep.subr.mxu0 0.0
    %1697 = vmatpush1.msra.mxu0 %v1678
    %1698 = vmatprep.subr.mxu0 0.0
    %1699 = vmatpush1.msra.mxu0 %v1679
    %1700 = vmatprep.subr.mxu0 0.0
    %1701 = vmatpush1.msra.mxu0 %v1680
    %1702 = vmatprep.subr.mxu0 0.0
    %1703 = vmatpush1.msra.mxu0 %v1681
    %1704 = vmatprep.subr.mxu0 0.0
    %1705 = vmatpush1.msra.mxu0 %v1682
    %1706 = vmatprep.subr.mxu0 0.0
    %1707 = vmatpush1.msra.mxu0 %v1683
    %1708 = vmatprep.subr.mxu0 0.0
    %1709 = vmatpush1.msra.mxu0 %v1684
    %1710 = vmatprep.subr.mxu0 0.0
    %1711 = vmatpush1.msra.mxu0 0.0
    %1712 = vmatprep.subr.mxu0 0.0
    %1713 = vmatpush1.msra.mxu0 0.0
    %1714 = vmatprep.subr.mxu0 0.0
    %1715 = vmatpush1.msra.mxu0 0.0
    %1716 = vmatprep.subr.mxu0 0.0
    %1717 = vmatpush1.msra.mxu0 0.0
    %1718 = vmatprep.subr.mxu0 0.0
    %1719 = vmatpush1.msra.mxu0 0.0
    %1720 = vmatprep.subr.mxu0 0.0
    %1721 = vmatpush1.msra.mxu0 0.0
    %1722 = vmatprep.subr.mxu0 0.0
    %1723 = vmatpush1.msra.mxu0 0.0
    %1724 = vmatprep.subr.mxu0 0.0
    %1725 = vmatpush1.msra.mxu0 0.0
    %1726 = vmatprep.subr.mxu0 0.0
    %1727 = vmatpush1.msra.mxu0 0.0
    %1728 = vmatprep.subr.mxu0 0.0
    %1729 = vmatpush1.msra.mxu0 0.0
    %1730 = vmatprep.subr.mxu0 0.0
    %1731 = vmatpush1.msra.mxu0 0.0
    %1732 = vmatprep.subr.mxu0 0.0
    %1733 = vmatpush1.msra.mxu0 0.0
    %1734 = vmatprep.subr.mxu0 0.0
    %1735 = vmatpush1.msra.mxu0 0.0
    %1736 = vmatprep.subr.mxu0 0.0
    %1737 = vmatpush1.msra.mxu0 0.0
    %1738 = vmatprep.subr.mxu0 0.0
    %1739 = vmatpush1.msra.mxu0 0.0
    %1740 = vmatprep.subr.mxu0 0.0
    %1741 = vmatpush1.msra.mxu0 0.0
    %1742 = vmatprep.subr.mxu0 0.0
    %1743 = vmatpush1.msra.mxu0 0.0
    %1744 = vmatprep.subr.mxu0 0.0
    %1745 = vmatpush1.msra.mxu0 0.0
    %1746 = vmatprep.subr.mxu0 0.0
    %1747 = vmatpush1.msra.mxu0 0.0
    %1748 = vmatprep.subr.mxu0 0.0
    %1749 = vmatpush1.msra.mxu0 0.0
    %1750 = vmatprep.subr.mxu0 0.0
    %1751 = vmatpush1.msra.mxu0 0.0
    %1752 = vmatprep.subr.mxu0 0.0
    %1753 = vmatpush1.msra.mxu0 0.0
    %1754 = vmatprep.subr.mxu0 0.0
    %1755 = vmatpush1.msra.mxu0 0.0
    %1756 = vmatprep.subr.mxu0 0.0
    %1757 = vmatpush1.msra.mxu0 0.0
    %1758 = vmatprep.mubr.f32.mxu0 0.0
    %1759 = vmatmul.mubr.f32.gmra.mrb[0].mxu0 %v1686
    %v1760 = vpop.f32.mrb[0].mxu0
    %v1761 = vadd.f32 0.0, %v1760
    %v1762 = vpop.f32.mrb[0].mxu0
    %1763 = vmatprep.mubr.f32.mxu0 0.0
    %1764 = vmatmul.mubr.f32.gmra.mrb[0].mxu0 %v1689
    %v1765 = vpop.f32.mrb[0].mxu0
    %v1766 = vadd.f32 0.0, %v1765
    %v1767 = vpop.f32.mrb[0].mxu0
    %1768 = vmatprep.mubr.f32.mxu0 0.0
    %1769 = vmatmul.mubr.f32.gmra.mrb[0].mxu0 %v1692
    %v1770 = vpop.f32.mrb[0].mxu0
    %v1771 = vadd.f32 0.0, %v1770
    %v1772 = vpop.f32.mrb[0].mxu0
    %1773 = vdwg.mxu0
    %v1774 = vadd.f32 %v1580, %v1761
    %v1775 = vadd.f32 %v1581, %v1766
    %v1776 = vadd.f32 %v1582, %v1771
    %v1777 = vlaneseq
    %v1778 = vshrl.u32 %v1777, 7
    %v1779 = vsub.s32 0, %v1778
    %v1780 = vrot.slane %v30, %v1779
    %v1781 = vadd.f32 %v1774, %v1780
    %v1782 = vadd.f32 %v1775, %v1780
    %v1783 = vadd.f32 %v1776, %v1780
    %v1784 = vmax.f32 %v1781, 0.0
    %v1785 = vmax.f32 %v1782, 0.0
    %v1786 = vmax.f32 %v1783, 0.0
    %vm1787 = vcmask 261120
    %v1788 = vsel %vm1787, %v1784, 0.0
    %v1789 = vsel %vm1787, %v1785, 0.0
    %v1790 = vadd.f32 %v1788, %v1789
    %vm1791 = vcmask 254976
    %v1792 = vsel %vm1791, %v1786, 0.0
    %v1793 = vadd.f32 %v1790, %v1792
    %v1794 = vrot.slane %v1793, 4
    %v1795 = vadd.f32 %v1793, %v1794
    %v1796 = vrot.slane %v1795, 2
    %v1797 = vadd.f32 %v1795, %v1796
    %v1798 = vrot.slane %v1797, 1
    %v1799 = vadd.f32 %v1797, %v1798
    %v1800 = vmul.f32 %v1799, 0.055555556
    %v1801 = vmul.f32 %v1784, %v1784
    %v1802 = vmul.f32 %v1785, %v1785
    %v1803 = vmul.f32 %v1786, %v1786
    %v1804 = vsel %vm1787, %v1801, 0.0
    %v1805 = vsel %vm1787, %v1802, 0.0
    %v1806 = vadd.f32 %v1804, %v1805
    %v1807 = vsel %vm1791, %v1803, 0.0
    %v1808 = vadd.f32 %v1806, %v1807
    %v1809 = vrot.slane %v1808, 4
    %v1810 = vadd.f32 %v1808, %v1809
    %v1811 = vrot.slane %v1810, 2
    %v1812 = vadd.f32 %v1810, %v1811
    %v1813 = vrot.slane %v1812, 1
    %v1814 = vadd.f32 %v1812, %v1813
    %v1815 = vmul.f32 %v1814, 0.055555556
    %v1816 = vmul.f32 %v1800, %v1800
    %v1817 = vsub.f32 %v1815, %v1816
    %v1818 = vmax.f32 %v1817, 0.0
    %v1819 = vsub.f32 %v1784, %v1800
    %v1820 = vsub.f32 %v1785, %v1800
    %v1821 = vsub.f32 %v1786, %v1800
    %v1822 = vadd.f32 %v1818, 1e-05
    %v1823 = vrsqrt.pop %v1822
    %v1824 = vmul.f32 %v1819, %v1823
    %v1825 = vmul.f32 %v1820, %v1823
    %v1826 = vmul.f32 %v1821, %v1823
    %v1827 = vlaneseq
    %v1828 = vshrl.u32 %v1827, 7
    %v1829 = vsub.s32 0, %v1828
    %v1830 = vrot.slane %v31, %v1829
    %v1831 = vmul.f32 %v1824, %v1830
    %v1832 = vmul.f32 %v1825, %v1830
    %v1833 = vmul.f32 %v1826, %v1830
    %v1834 = vlaneseq
    %v1835 = vshrl.u32 %v1834, 7
    %v1836 = vsub.s32 0, %v1835
    %v1837 = vrot.slane %v32, %v1836
    %v1838 = vadd.f32 %v1831, %v1837
    %v1839 = vadd.f32 %v1832, %v1837
    %v1840 = vadd.f32 %v1833, %v1837
    %v1841 = vld [vmem:[%s6 + $0x3] sm:$0x1]
    %v1842 = vld [vmem:[%s6 + $0x4] sm:$0x1]
    %v1843 = vld [vmem:[%s6 + $0x5] sm:$0x1]
    %v1845 = vsel %vm46, %v1840, 0
    %1847 = vmatprep.subr.mxu0 0.0
    %1848 = vmatpush1.msra.mxu0 %v1838
    %1849 = vmatprep.subr.mxu0 0.0
    %1850 = vmatpush1.msra.mxu0 %v1839
    %1851 = vmatprep.subr.mxu0 0.0
    %1852 = vmatpush1.msra.mxu0 %v1845
    %1853 = vmatprep.subr.mxu0 0.0
    %1854 = vmatpush1.msra.mxu0 0.0
    %1855 = vmatprep.subr.mxu0 0.0
    %1856 = vmatpush1.msra.mxu0 0.0
    %1857 = vmatprep.subr.mxu0 0.0
    %1858 = vmatpush1.msra.mxu0 0.0
    %1859 = vmatprep.subr.mxu0 0.0
    %1860 = vmatpush1.msra.mxu0 0.0
    %1861 = vmatprep.subr.mxu0 0.0
    %1862 = vmatpush1.msra.mxu0 0.0
    %1863 = vmatprep.subr.mxu0 0.0
    %1864 = vmatpush1.msra.mxu0 0.0
    %1865 = vmatprep.subr.mxu0 0.0
    %1866 = vmatpush1.msra.mxu0 0.0
    %1867 = vmatprep.subr.mxu0 0.0
    %1868 = vmatpush1.msra.mxu0 0.0
    %1869 = vmatprep.subr.mxu0 0.0
    %1870 = vmatpush1.msra.mxu0 0.0
    %1871 = vmatprep.subr.mxu0 0.0
    %1872 = vmatpush1.msra.mxu0 0.0
    %1873 = vmatprep.subr.mxu0 0.0
    %1874 = vmatpush1.msra.mxu0 0.0
    %1875 = vmatprep.subr.mxu0 0.0
    %1876 = vmatpush1.msra.mxu0 0.0
    %1877 = vmatprep.subr.mxu0 0.0
    %1878 = vmatpush1.msra.mxu0 0.0
    %1879 = vmatprep.subr.mxu0 0.0
    %1880 = vmatpush1.msra.mxu0 0.0
    %1881 = vmatprep.subr.mxu0 0.0
    %1882 = vmatpush1.msra.mxu0 0.0
    %1883 = vmatprep.subr.mxu0 0.0
    %1884 = vmatpush1.msra.mxu0 0.0
    %1885 = vmatprep.subr.mxu0 0.0
    %1886 = vmatpush1.msra.mxu0 0.0
    %1887 = vmatprep.subr.mxu0 0.0
    %1888 = vmatpush1.msra.mxu0 0.0
    %1889 = vmatprep.subr.mxu0 0.0
    %1890 = vmatpush1.msra.mxu0 0.0
    %1891 = vmatprep.subr.mxu0 0.0
    %1892 = vmatpush1.msra.mxu0 0.0
    %1893 = vmatprep.subr.mxu0 0.0
    %1894 = vmatpush1.msra.mxu0 0.0
    %1895 = vmatprep.subr.mxu0 0.0
    %1896 = vmatpush1.msra.mxu0 0.0
    %1897 = vmatprep.subr.mxu0 0.0
    %1898 = vmatpush1.msra.mxu0 0.0
    %1899 = vmatprep.subr.mxu0 0.0
    %1900 = vmatpush1.msra.mxu0 0.0
    %1901 = vmatprep.subr.mxu0 0.0
    %1902 = vmatpush1.msra.mxu0 0.0
    %1903 = vmatprep.subr.mxu0 0.0
    %1904 = vmatpush1.msra.mxu0 0.0
    %1905 = vmatprep.subr.mxu0 0.0
    %1906 = vmatpush1.msra.mxu0 0.0
    %1907 = vmatprep.subr.mxu0 0.0
    %1908 = vmatpush1.msra.mxu0 0.0
    %1909 = vmatprep.subr.mxu0 0.0
    %1910 = vmatpush1.msra.mxu0 0.0
    %1911 = vmatprep.mubr.f32.mxu0 0.0
    %1912 = vmatmul.mubr.f32.gmra.mrb[0].mxu0 %v38
    %v1913 = vpop.f32.mrb[0].mxu0
    %v1914 = vadd.f32 0.0, %v1913
    %v1915 = vpop.f32.mrb[0].mxu0
    %1916 = vmatprep.mubr.f32.mxu0 0.0
    %1917 = vmatmul.mubr.f32.gmra.mrb[0].mxu0 %v41
    %v1918 = vpop.f32.mrb[0].mxu0
    %v1919 = vadd.f32 0.0, %v1918
    %v1920 = vpop.f32.mrb[0].mxu0
    %1921 = vmatprep.mubr.f32.mxu0 0.0
    %1922 = vmatmul.mubr.f32.gmra.mrb[0].mxu0 %v44
    %v1923 = vpop.f32.mrb[0].mxu0
    %v1924 = vadd.f32 0.0, %v1923
    %v1925 = vpop.f32.mrb[0].mxu0
    %1926 = vdwg.mxu0
    %v1927 = vld [vmem:[%s4] sm:$0xff]
    %v1928 = vld [vmem:[%s4 + $0x8] sm:$0xff]
    %v1929 = vld [vmem:[%s4 + $0x10] sm:$0xff]
    %v1930 = vld [vmem:[%s4 + $0x18] sm:$0xff]
    %1931 = vmatprep.subr.mxu0 0.0
    %1932 = vmatpush1.msra.mxu0 %v1838
    %1933 = vmatprep.subr.mxu0 0.0
    %1934 = vmatpush1.msra.mxu0 %v1839
    %1935 = vmatprep.subr.mxu0 0.0
    %1936 = vmatpush1.msra.mxu0 %v1845
    %1937 = vmatprep.subr.mxu0 0.0
    %1938 = vmatpush1.msra.mxu0 0.0
    %1939 = vmatprep.subr.mxu0 0.0
    %1940 = vmatpush1.msra.mxu0 0.0
    %1941 = vmatprep.subr.mxu0 0.0
    %1942 = vmatpush1.msra.mxu0 0.0
    %1943 = vmatprep.subr.mxu0 0.0
    %1944 = vmatpush1.msra.mxu0 0.0
    %1945 = vmatprep.subr.mxu0 0.0
    %1946 = vmatpush1.msra.mxu0 0.0
    %1947 = vmatprep.subr.mxu0 0.0
    %1948 = vmatpush1.msra.mxu0 0.0
    %1949 = vmatprep.subr.mxu0 0.0
    %1950 = vmatpush1.msra.mxu0 0.0
    %1951 = vmatprep.subr.mxu0 0.0
    %1952 = vmatpush1.msra.mxu0 0.0
    %1953 = vmatprep.subr.mxu0 0.0
    %1954 = vmatpush1.msra.mxu0 0.0
    %1955 = vmatprep.subr.mxu0 0.0
    %1956 = vmatpush1.msra.mxu0 0.0
    %1957 = vmatprep.subr.mxu0 0.0
    %1958 = vmatpush1.msra.mxu0 0.0
    %1959 = vmatprep.subr.mxu0 0.0
    %1960 = vmatpush1.msra.mxu0 0.0
    %1961 = vmatprep.subr.mxu0 0.0
    %1962 = vmatpush1.msra.mxu0 0.0
    %1963 = vmatprep.subr.mxu0 0.0
    %1964 = vmatpush1.msra.mxu0 0.0
    %1965 = vmatprep.subr.mxu0 0.0
    %1966 = vmatpush1.msra.mxu0 0.0
    %1967 = vmatprep.subr.mxu0 0.0
    %1968 = vmatpush1.msra.mxu0 0.0
    %1969 = vmatprep.subr.mxu0 0.0
    %1970 = vmatpush1.msra.mxu0 0.0
    %1971 = vmatprep.subr.mxu0 0.0
    %1972 = vmatpush1.msra.mxu0 0.0
    %1973 = vmatprep.subr.mxu0 0.0
    %1974 = vmatpush1.msra.mxu0 0.0
    %1975 = vmatprep.subr.mxu0 0.0
    %1976 = vmatpush1.msra.mxu0 0.0
    %1977 = vmatprep.subr.mxu0 0.0
    %1978 = vmatpush1.msra.mxu0 0.0
    %1979 = vmatprep.subr.mxu0 0.0
    %1980 = vmatpush1.msra.mxu0 0.0
    %1981 = vmatprep.subr.mxu0 0.0
    %1982 = vmatpush1.msra.mxu0 0.0
    %1983 = vmatprep.subr.mxu0 0.0
    %1984 = vmatpush1.msra.mxu0 0.0
    %1985 = vmatprep.subr.mxu0 0.0
    %1986 = vmatpush1.msra.mxu0 0.0
    %1987 = vmatprep.subr.mxu0 0.0
    %1988 = vmatpush1.msra.mxu0 0.0
    %1989 = vmatprep.subr.mxu0 0.0
    %1990 = vmatpush1.msra.mxu0 0.0
    %1991 = vmatprep.subr.mxu0 0.0
    %1992 = vmatpush1.msra.mxu0 0.0
    %1993 = vmatprep.subr.mxu0 0.0
    %1994 = vmatpush1.msra.mxu0 0.0
    %1995 = vmatprep.mubr.f32.mxu0 0.0
    %1996 = vmatmul.mubr.f32.gmra.mrb[0].mxu0 %v143
    %v1997 = vpop.f32.mrb[0].mxu0
    %v1998 = vadd.f32 0.0, %v1997
    %v1999 = vpop.f32.mrb[0].mxu0
    %2000 = vmatprep.mubr.f32.mxu0 0.0
    %2001 = vmatmul.mubr.f32.gmra.mrb[0].mxu0 %v146
    %v2002 = vpop.f32.mrb[0].mxu0
    %v2003 = vadd.f32 0.0, %v2002
    %v2004 = vpop.f32.mrb[0].mxu0
    %2005 = vmatprep.mubr.f32.mxu0 0.0
    %2006 = vmatmul.mubr.f32.gmra.mrb[0].mxu0 %v149
    %v2007 = vpop.f32.mrb[0].mxu0
    %v2008 = vadd.f32 0.0, %v2007
    %v2009 = vpop.f32.mrb[0].mxu0
    %2010 = vdwg.mxu0
    %s2011 = scalar_lea.vmem %s4, 32
    %v2012 = vld [vmem:[%s2011] sm:$0xff]
    %v2013 = vld [vmem:[%s2011 + $0x8] sm:$0xff]
    %v2014 = vld [vmem:[%s2011 + $0x10] sm:$0xff]
    %v2015 = vld [vmem:[%s2011 + $0x18] sm:$0xff]
    %v2017 = vsel %vm1787, %v1998, 0
    %v2020 = vsel %vm1787, %v2003, 0
    %v2023 = vsel %vm1787, %v2008, 0
    %2025 = vmatprep.subr.mxu0 0.0
    %2026 = vmatpush1.msra.mxu0 %v2012
    %2027 = vmatprep.subr.mxu0 0.0
    %2028 = vmatpush1.msra.mxu0 %v2013
    %2029 = vmatprep.subr.mxu0 0.0
    %2030 = vmatpush1.msra.mxu0 %v2014
    %2031 = vmatprep.subr.mxu0 0.0
    %2032 = vmatpush1.msra.mxu0 %v2015
    %2033 = vmatprep.subr.mxu0 0.0
    %2034 = vmatpush1.msra.mxu0 0.0
    %2035 = vmatprep.subr.mxu0 0.0
    %2036 = vmatpush1.msra.mxu0 0.0
    %2037 = vmatprep.subr.mxu0 0.0
    %2038 = vmatpush1.msra.mxu0 0.0
    %2039 = vmatprep.subr.mxu0 0.0
    %2040 = vmatpush1.msra.mxu0 0.0
    %2041 = vmatprep.subr.mxu0 0.0
    %2042 = vmatpush1.msra.mxu0 0.0
    %2043 = vmatprep.subr.mxu0 0.0
    %2044 = vmatpush1.msra.mxu0 0.0
    %2045 = vmatprep.subr.mxu0 0.0
    %2046 = vmatpush1.msra.mxu0 0.0
    %2047 = vmatprep.subr.mxu0 0.0
    %2048 = vmatpush1.msra.mxu0 0.0
    %2049 = vmatprep.subr.mxu0 0.0
    %2050 = vmatpush1.msra.mxu0 0.0
    %2051 = vmatprep.subr.mxu0 0.0
    %2052 = vmatpush1.msra.mxu0 0.0
    %2053 = vmatprep.subr.mxu0 0.0
    %2054 = vmatpush1.msra.mxu0 0.0
    %2055 = vmatprep.subr.mxu0 0.0
    %2056 = vmatpush1.msra.mxu0 0.0
    %2057 = vmatprep.subr.mxu0 0.0
    %2058 = vmatpush1.msra.mxu0 0.0
    %2059 = vmatprep.subr.mxu0 0.0
    %2060 = vmatpush1.msra.mxu0 0.0
    %2061 = vmatprep.subr.mxu0 0.0
    %2062 = vmatpush1.msra.mxu0 0.0
    %2063 = vmatprep.subr.mxu0 0.0
    %2064 = vmatpush1.msra.mxu0 0.0
    %2065 = vmatprep.subr.mxu0 0.0
    %2066 = vmatpush1.msra.mxu0 0.0
    %2067 = vmatprep.subr.mxu0 0.0
    %2068 = vmatpush1.msra.mxu0 0.0
    %2069 = vmatprep.subr.mxu0 0.0
    %2070 = vmatpush1.msra.mxu0 0.0
    %2071 = vmatprep.subr.mxu0 0.0
    %2072 = vmatpush1.msra.mxu0 0.0
    %2073 = vmatprep.subr.mxu0 0.0
    %2074 = vmatpush1.msra.mxu0 0.0
    %2075 = vmatprep.subr.mxu0 0.0
    %2076 = vmatpush1.msra.mxu0 0.0
    %2077 = vmatprep.subr.mxu0 0.0
    %2078 = vmatpush1.msra.mxu0 0.0
    %2079 = vmatprep.subr.mxu0 0.0
    %2080 = vmatpush1.msra.mxu0 0.0
    %2081 = vmatprep.subr.mxu0 0.0
    %2082 = vmatpush1.msra.mxu0 0.0
    %2083 = vmatprep.subr.mxu0 0.0
    %2084 = vmatpush1.msra.mxu0 0.0
    %2085 = vmatprep.subr.mxu0 0.0
    %2086 = vmatpush1.msra.mxu0 0.0
    %2087 = vmatprep.subr.mxu0 0.0
    %2088 = vmatpush1.msra.mxu0 0.0
    %2089 = vmatprep.mubr.f32.mxu0 0.0
    %2090 = vmatmul.mubr.f32.gmra.mrb[0].mxu0 %v2017
    %v2091 = vpop.f32.mrb[0].mxu0
    %v2092 = vadd.f32 0.0, %v2091
    %v2093 = vpop.f32.mrb[0].mxu0
    %2094 = vmatprep.mubr.f32.mxu0 0.0
    %2095 = vmatmul.mubr.f32.gmra.mrb[0].mxu0 %v2020
    %v2096 = vpop.f32.mrb[0].mxu0
    %v2097 = vadd.f32 0.0, %v2096
    %v2098 = vpop.f32.mrb[0].mxu0
    %2099 = vmatprep.mubr.f32.mxu0 0.0
    %2100 = vmatmul.mubr.f32.gmra.mrb[0].mxu0 %v2023
    %v2101 = vpop.f32.mrb[0].mxu0
    %v2102 = vadd.f32 0.0, %v2101
    %v2103 = vpop.f32.mrb[0].mxu0
    %2104 = vdwg.mxu0
    %v2106 = vsel %vm1787, %v1914, 0
    %v2109 = vsel %vm1787, %v1919, 0
    %v2112 = vsel %vm1787, %v1924, 0
    %2114 = vmatprep.subr.mxu0 0.0
    %2115 = vmatpush1.msra.mxu0 %v1927
    %2116 = vmatprep.subr.mxu0 0.0
    %2117 = vmatpush1.msra.mxu0 %v1928
    %2118 = vmatprep.subr.mxu0 0.0
    %2119 = vmatpush1.msra.mxu0 %v1929
    %2120 = vmatprep.subr.mxu0 0.0
    %2121 = vmatpush1.msra.mxu0 %v1930
    %2122 = vmatprep.subr.mxu0 0.0
    %2123 = vmatpush1.msra.mxu0 0.0
    %2124 = vmatprep.subr.mxu0 0.0
    %2125 = vmatpush1.msra.mxu0 0.0
    %2126 = vmatprep.subr.mxu0 0.0
    %2127 = vmatpush1.msra.mxu0 0.0
    %2128 = vmatprep.subr.mxu0 0.0
    %2129 = vmatpush1.msra.mxu0 0.0
    %2130 = vmatprep.subr.mxu0 0.0
    %2131 = vmatpush1.msra.mxu0 0.0
    %2132 = vmatprep.subr.mxu0 0.0
    %2133 = vmatpush1.msra.mxu0 0.0
    %2134 = vmatprep.subr.mxu0 0.0
    %2135 = vmatpush1.msra.mxu0 0.0
    %2136 = vmatprep.subr.mxu0 0.0
    %2137 = vmatpush1.msra.mxu0 0.0
    %2138 = vmatprep.subr.mxu0 0.0
    %2139 = vmatpush1.msra.mxu0 0.0
    %2140 = vmatprep.subr.mxu0 0.0
    %2141 = vmatpush1.msra.mxu0 0.0
    %2142 = vmatprep.subr.mxu0 0.0
    %2143 = vmatpush1.msra.mxu0 0.0
    %2144 = vmatprep.subr.mxu0 0.0
    %2145 = vmatpush1.msra.mxu0 0.0
    %2146 = vmatprep.subr.mxu0 0.0
    %2147 = vmatpush1.msra.mxu0 0.0
    %2148 = vmatprep.subr.mxu0 0.0
    %2149 = vmatpush1.msra.mxu0 0.0
    %2150 = vmatprep.subr.mxu0 0.0
    %2151 = vmatpush1.msra.mxu0 0.0
    %2152 = vmatprep.subr.mxu0 0.0
    %2153 = vmatpush1.msra.mxu0 0.0
    %2154 = vmatprep.subr.mxu0 0.0
    %2155 = vmatpush1.msra.mxu0 0.0
    %2156 = vmatprep.subr.mxu0 0.0
    %2157 = vmatpush1.msra.mxu0 0.0
    %2158 = vmatprep.subr.mxu0 0.0
    %2159 = vmatpush1.msra.mxu0 0.0
    %2160 = vmatprep.subr.mxu0 0.0
    %2161 = vmatpush1.msra.mxu0 0.0
    %2162 = vmatprep.subr.mxu0 0.0
    %2163 = vmatpush1.msra.mxu0 0.0
    %2164 = vmatprep.subr.mxu0 0.0
    %2165 = vmatpush1.msra.mxu0 0.0
    %2166 = vmatprep.subr.mxu0 0.0
    %2167 = vmatpush1.msra.mxu0 0.0
    %2168 = vmatprep.subr.mxu0 0.0
    %2169 = vmatpush1.msra.mxu0 0.0
    %2170 = vmatprep.subr.mxu0 0.0
    %2171 = vmatpush1.msra.mxu0 0.0
    %2172 = vmatprep.subr.mxu0 0.0
    %2173 = vmatpush1.msra.mxu0 0.0
    %2174 = vmatprep.subr.mxu0 0.0
    %2175 = vmatpush1.msra.mxu0 0.0
    %2176 = vmatprep.subr.mxu0 0.0
    %2177 = vmatpush1.msra.mxu0 0.0
    %2178 = vmatprep.mubr.f32.mxu0 0.0
    %2179 = vmatmul.mubr.f32.gmra.mrb[0].mxu0 %v2106
    %v2180 = vpop.f32.mrb[0].mxu0
    %v2181 = vadd.f32 %v2092, %v2180
    %v2182 = vpop.f32.mrb[0].mxu0
    %2183 = vmatprep.mubr.f32.mxu0 0.0
    %2184 = vmatmul.mubr.f32.gmra.mrb[0].mxu0 %v2109
    %v2185 = vpop.f32.mrb[0].mxu0
    %v2186 = vadd.f32 %v2097, %v2185
    %v2187 = vpop.f32.mrb[0].mxu0
    %2188 = vmatprep.mubr.f32.mxu0 0.0
    %2189 = vmatmul.mubr.f32.gmra.mrb[0].mxu0 %v2112
    %v2190 = vpop.f32.mrb[0].mxu0
    %v2191 = vadd.f32 %v2102, %v2190
    %v2192 = vpop.f32.mrb[0].mxu0
    %2193 = vdwg.mxu0
    %2194 = vmatprep.subr.mxu0 0.0
    %2195 = vmatpush1.msra.mxu0 %v1838
    %2196 = vmatprep.subr.mxu0 0.0
    %2197 = vmatpush1.msra.mxu0 %v1839
    %2198 = vmatprep.subr.mxu0 0.0
    %2199 = vmatpush1.msra.mxu0 %v1845
    %2200 = vmatprep.subr.mxu0 0.0
    %2201 = vmatpush1.msra.mxu0 0.0
    %2202 = vmatprep.subr.mxu0 0.0
    %2203 = vmatpush1.msra.mxu0 0.0
    %2204 = vmatprep.subr.mxu0 0.0
    %2205 = vmatpush1.msra.mxu0 0.0
    %2206 = vmatprep.subr.mxu0 0.0
    %2207 = vmatpush1.msra.mxu0 0.0
    %2208 = vmatprep.subr.mxu0 0.0
    %2209 = vmatpush1.msra.mxu0 0.0
    %2210 = vmatprep.subr.mxu0 0.0
    %2211 = vmatpush1.msra.mxu0 0.0
    %2212 = vmatprep.subr.mxu0 0.0
    %2213 = vmatpush1.msra.mxu0 0.0
    %2214 = vmatprep.subr.mxu0 0.0
    %2215 = vmatpush1.msra.mxu0 0.0
    %2216 = vmatprep.subr.mxu0 0.0
    %2217 = vmatpush1.msra.mxu0 0.0
    %2218 = vmatprep.subr.mxu0 0.0
    %2219 = vmatpush1.msra.mxu0 0.0
    %2220 = vmatprep.subr.mxu0 0.0
    %2221 = vmatpush1.msra.mxu0 0.0
    %2222 = vmatprep.subr.mxu0 0.0
    %2223 = vmatpush1.msra.mxu0 0.0
    %2224 = vmatprep.subr.mxu0 0.0
    %2225 = vmatpush1.msra.mxu0 0.0
    %2226 = vmatprep.subr.mxu0 0.0
    %2227 = vmatpush1.msra.mxu0 0.0
    %2228 = vmatprep.subr.mxu0 0.0
    %2229 = vmatpush1.msra.mxu0 0.0
    %2230 = vmatprep.subr.mxu0 0.0
    %2231 = vmatpush1.msra.mxu0 0.0
    %2232 = vmatprep.subr.mxu0 0.0
    %2233 = vmatpush1.msra.mxu0 0.0
    %2234 = vmatprep.subr.mxu0 0.0
    %2235 = vmatpush1.msra.mxu0 0.0
    %2236 = vmatprep.subr.mxu0 0.0
    %2237 = vmatpush1.msra.mxu0 0.0
    %2238 = vmatprep.subr.mxu0 0.0
    %2239 = vmatpush1.msra.mxu0 0.0
    %2240 = vmatprep.subr.mxu0 0.0
    %2241 = vmatpush1.msra.mxu0 0.0
    %2242 = vmatprep.subr.mxu0 0.0
    %2243 = vmatpush1.msra.mxu0 0.0
    %2244 = vmatprep.subr.mxu0 0.0
    %2245 = vmatpush1.msra.mxu0 0.0
    %2246 = vmatprep.subr.mxu0 0.0
    %2247 = vmatpush1.msra.mxu0 0.0
    %2248 = vmatprep.subr.mxu0 0.0
    %2249 = vmatpush1.msra.mxu0 0.0
    %2250 = vmatprep.subr.mxu0 0.0
    %2251 = vmatpush1.msra.mxu0 0.0
    %2252 = vmatprep.subr.mxu0 0.0
    %2253 = vmatpush1.msra.mxu0 0.0
    %2254 = vmatprep.subr.mxu0 0.0
    %2255 = vmatpush1.msra.mxu0 0.0
    %2256 = vmatprep.subr.mxu0 0.0
    %2257 = vmatpush1.msra.mxu0 0.0
    %2258 = vmatprep.mubr.f32.mxu0 0.0
    %2259 = vmatmul.mubr.f32.gmra.mrb[0].mxu0 %v424
    %v2260 = vpop.f32.mrb[0].mxu0
    %v2261 = vadd.f32 0.0, %v2260
    %v2262 = vpop.f32.mrb[0].mxu0
    %2263 = vmatprep.mubr.f32.mxu0 0.0
    %2264 = vmatmul.mubr.f32.gmra.mrb[0].mxu0 %v427
    %v2265 = vpop.f32.mrb[0].mxu0
    %v2266 = vadd.f32 0.0, %v2265
    %v2267 = vpop.f32.mrb[0].mxu0
    %2268 = vmatprep.mubr.f32.mxu0 0.0
    %2269 = vmatmul.mubr.f32.gmra.mrb[0].mxu0 %v430
    %v2270 = vpop.f32.mrb[0].mxu0
    %v2271 = vadd.f32 0.0, %v2270
    %v2272 = vpop.f32.mrb[0].mxu0
    %2273 = vdwg.mxu0
    %s2274 = scalar_lea.vmem %s4, 64
    %v2275 = vld [vmem:[%s2274] sm:$0xff]
    %v2276 = vld [vmem:[%s2274 + $0x8] sm:$0xff]
    %v2277 = vld [vmem:[%s2274 + $0x10] sm:$0xff]
    %v2278 = vld [vmem:[%s2274 + $0x18] sm:$0xff]
    %v2280 = vsel %vm1787, %v2261, 0
    %v2283 = vsel %vm1787, %v2266, 0
    %v2286 = vsel %vm1787, %v2271, 0
    %2288 = vmatprep.subr.mxu0 0.0
    %2289 = vmatpush1.msra.mxu0 %v2275
    %2290 = vmatprep.subr.mxu0 0.0
    %2291 = vmatpush1.msra.mxu0 %v2276
    %2292 = vmatprep.subr.mxu0 0.0
    %2293 = vmatpush1.msra.mxu0 %v2277
    %2294 = vmatprep.subr.mxu0 0.0
    %2295 = vmatpush1.msra.mxu0 %v2278
    %2296 = vmatprep.subr.mxu0 0.0
    %2297 = vmatpush1.msra.mxu0 0.0
    %2298 = vmatprep.subr.mxu0 0.0
    %2299 = vmatpush1.msra.mxu0 0.0
    %2300 = vmatprep.subr.mxu0 0.0
    %2301 = vmatpush1.msra.mxu0 0.0
    %2302 = vmatprep.subr.mxu0 0.0
    %2303 = vmatpush1.msra.mxu0 0.0
    %2304 = vmatprep.subr.mxu0 0.0
    %2305 = vmatpush1.msra.mxu0 0.0
    %2306 = vmatprep.subr.mxu0 0.0
    %2307 = vmatpush1.msra.mxu0 0.0
    %2308 = vmatprep.subr.mxu0 0.0
    %2309 = vmatpush1.msra.mxu0 0.0
    %2310 = vmatprep.subr.mxu0 0.0
    %2311 = vmatpush1.msra.mxu0 0.0
    %2312 = vmatprep.subr.mxu0 0.0
    %2313 = vmatpush1.msra.mxu0 0.0
    %2314 = vmatprep.subr.mxu0 0.0
    %2315 = vmatpush1.msra.mxu0 0.0
    %2316 = vmatprep.subr.mxu0 0.0
    %2317 = vmatpush1.msra.mxu0 0.0
    %2318 = vmatprep.subr.mxu0 0.0
    %2319 = vmatpush1.msra.mxu0 0.0
    %2320 = vmatprep.subr.mxu0 0.0
    %2321 = vmatpush1.msra.mxu0 0.0
    %2322 = vmatprep.subr.mxu0 0.0
    %2323 = vmatpush1.msra.mxu0 0.0
    %2324 = vmatprep.subr.mxu0 0.0
    %2325 = vmatpush1.msra.mxu0 0.0
    %2326 = vmatprep.subr.mxu0 0.0
    %2327 = vmatpush1.msra.mxu0 0.0
    %2328 = vmatprep.subr.mxu0 0.0
    %2329 = vmatpush1.msra.mxu0 0.0
    %2330 = vmatprep.subr.mxu0 0.0
    %2331 = vmatpush1.msra.mxu0 0.0
    %2332 = vmatprep.subr.mxu0 0.0
    %2333 = vmatpush1.msra.mxu0 0.0
    %2334 = vmatprep.subr.mxu0 0.0
    %2335 = vmatpush1.msra.mxu0 0.0
    %2336 = vmatprep.subr.mxu0 0.0
    %2337 = vmatpush1.msra.mxu0 0.0
    %2338 = vmatprep.subr.mxu0 0.0
    %2339 = vmatpush1.msra.mxu0 0.0
    %2340 = vmatprep.subr.mxu0 0.0
    %2341 = vmatpush1.msra.mxu0 0.0
    %2342 = vmatprep.subr.mxu0 0.0
    %2343 = vmatpush1.msra.mxu0 0.0
    %2344 = vmatprep.subr.mxu0 0.0
    %2345 = vmatpush1.msra.mxu0 0.0
    %2346 = vmatprep.subr.mxu0 0.0
    %2347 = vmatpush1.msra.mxu0 0.0
    %2348 = vmatprep.subr.mxu0 0.0
    %2349 = vmatpush1.msra.mxu0 0.0
    %2350 = vmatprep.subr.mxu0 0.0
    %2351 = vmatpush1.msra.mxu0 0.0
    %2352 = vmatprep.mubr.f32.mxu0 0.0
    %2353 = vmatmul.mubr.f32.gmra.mrb[0].mxu0 %v2280
    %v2354 = vpop.f32.mrb[0].mxu0
    %v2355 = vadd.f32 0.0, %v2354
    %v2356 = vpop.f32.mrb[0].mxu0
    %2357 = vmatprep.mubr.f32.mxu0 0.0
    %2358 = vmatmul.mubr.f32.gmra.mrb[0].mxu0 %v2283
    %v2359 = vpop.f32.mrb[0].mxu0
    %v2360 = vadd.f32 0.0, %v2359
    %v2361 = vpop.f32.mrb[0].mxu0
    %2362 = vmatprep.mubr.f32.mxu0 0.0
    %2363 = vmatmul.mubr.f32.gmra.mrb[0].mxu0 %v2286
    %v2364 = vpop.f32.mrb[0].mxu0
    %v2365 = vadd.f32 0.0, %v2364
    %v2366 = vpop.f32.mrb[0].mxu0
    %2367 = vdwg.mxu0
    %v2368 = vadd.f32 %v2181, %v2355
    %v2369 = vadd.f32 %v2186, %v2360
    %v2370 = vadd.f32 %v2191, %v2365
    %2371 = vmatprep.subr.mxu0 0.0
    %2372 = vmatpush1.msra.mxu0 %v1838
    %2373 = vmatprep.subr.mxu0 0.0
    %2374 = vmatpush1.msra.mxu0 %v1839
    %2375 = vmatprep.subr.mxu0 0.0
    %2376 = vmatpush1.msra.mxu0 %v1845
    %2377 = vmatprep.subr.mxu0 0.0
    %2378 = vmatpush1.msra.mxu0 0.0
    %2379 = vmatprep.subr.mxu0 0.0
    %2380 = vmatpush1.msra.mxu0 0.0
    %2381 = vmatprep.subr.mxu0 0.0
    %2382 = vmatpush1.msra.mxu0 0.0
    %2383 = vmatprep.subr.mxu0 0.0
    %2384 = vmatpush1.msra.mxu0 0.0
    %2385 = vmatprep.subr.mxu0 0.0
    %2386 = vmatpush1.msra.mxu0 0.0
    %2387 = vmatprep.subr.mxu0 0.0
    %2388 = vmatpush1.msra.mxu0 0.0
    %2389 = vmatprep.subr.mxu0 0.0
    %2390 = vmatpush1.msra.mxu0 0.0
    %2391 = vmatprep.subr.mxu0 0.0
    %2392 = vmatpush1.msra.mxu0 0.0
    %2393 = vmatprep.subr.mxu0 0.0
    %2394 = vmatpush1.msra.mxu0 0.0
    %2395 = vmatprep.subr.mxu0 0.0
    %2396 = vmatpush1.msra.mxu0 0.0
    %2397 = vmatprep.subr.mxu0 0.0
    %2398 = vmatpush1.msra.mxu0 0.0
    %2399 = vmatprep.subr.mxu0 0.0
    %2400 = vmatpush1.msra.mxu0 0.0
    %2401 = vmatprep.subr.mxu0 0.0
    %2402 = vmatpush1.msra.mxu0 0.0
    %2403 = vmatprep.subr.mxu0 0.0
    %2404 = vmatpush1.msra.mxu0 0.0
    %2405 = vmatprep.subr.mxu0 0.0
    %2406 = vmatpush1.msra.mxu0 0.0
    %2407 = vmatprep.subr.mxu0 0.0
    %2408 = vmatpush1.msra.mxu0 0.0
    %2409 = vmatprep.subr.mxu0 0.0
    %2410 = vmatpush1.msra.mxu0 0.0
    %2411 = vmatprep.subr.mxu0 0.0
    %2412 = vmatpush1.msra.mxu0 0.0
    %2413 = vmatprep.subr.mxu0 0.0
    %2414 = vmatpush1.msra.mxu0 0.0
    %2415 = vmatprep.subr.mxu0 0.0
    %2416 = vmatpush1.msra.mxu0 0.0
    %2417 = vmatprep.subr.mxu0 0.0
    %2418 = vmatpush1.msra.mxu0 0.0
    %2419 = vmatprep.subr.mxu0 0.0
    %2420 = vmatpush1.msra.mxu0 0.0
    %2421 = vmatprep.subr.mxu0 0.0
    %2422 = vmatpush1.msra.mxu0 0.0
    %2423 = vmatprep.subr.mxu0 0.0
    %2424 = vmatpush1.msra.mxu0 0.0
    %2425 = vmatprep.subr.mxu0 0.0
    %2426 = vmatpush1.msra.mxu0 0.0
    %2427 = vmatprep.subr.mxu0 0.0
    %2428 = vmatpush1.msra.mxu0 0.0
    %2429 = vmatprep.subr.mxu0 0.0
    %2430 = vmatpush1.msra.mxu0 0.0
    %2431 = vmatprep.subr.mxu0 0.0
    %2432 = vmatpush1.msra.mxu0 0.0
    %2433 = vmatprep.subr.mxu0 0.0
    %2434 = vmatpush1.msra.mxu0 0.0
    %2435 = vmatprep.mubr.f32.mxu0 0.0
    %2436 = vmatmul.mubr.f32.gmra.mrb[0].mxu0 %v618
    %v2437 = vpop.f32.mrb[0].mxu0
    %v2438 = vadd.f32 0.0, %v2437
    %v2439 = vpop.f32.mrb[0].mxu0
    %2440 = vmatprep.mubr.f32.mxu0 0.0
    %2441 = vmatmul.mubr.f32.gmra.mrb[0].mxu0 %v621
    %v2442 = vpop.f32.mrb[0].mxu0
    %v2443 = vadd.f32 0.0, %v2442
    %v2444 = vpop.f32.mrb[0].mxu0
    %2445 = vmatprep.mubr.f32.mxu0 0.0
    %2446 = vmatmul.mubr.f32.gmra.mrb[0].mxu0 %v624
    %v2447 = vpop.f32.mrb[0].mxu0
    %v2448 = vadd.f32 0.0, %v2447
    %v2449 = vpop.f32.mrb[0].mxu0
    %2450 = vdwg.mxu0
    %s2451 = scalar_lea.vmem %s4, 96
    %v2452 = vld [vmem:[%s2451] sm:$0xff]
    %v2453 = vld [vmem:[%s2451 + $0x8] sm:$0xff]
    %v2454 = vld [vmem:[%s2451 + $0x10] sm:$0xff]
    %v2455 = vld [vmem:[%s2451 + $0x18] sm:$0xff]
    %v2457 = vsel %vm1787, %v2438, 0
    %v2460 = vsel %vm1787, %v2443, 0
    %v2463 = vsel %vm1787, %v2448, 0
    %2465 = vmatprep.subr.mxu0 0.0
    %2466 = vmatpush1.msra.mxu0 %v2452
    %2467 = vmatprep.subr.mxu0 0.0
    %2468 = vmatpush1.msra.mxu0 %v2453
    %2469 = vmatprep.subr.mxu0 0.0
    %2470 = vmatpush1.msra.mxu0 %v2454
    %2471 = vmatprep.subr.mxu0 0.0
    %2472 = vmatpush1.msra.mxu0 %v2455
    %2473 = vmatprep.subr.mxu0 0.0
    %2474 = vmatpush1.msra.mxu0 0.0
    %2475 = vmatprep.subr.mxu0 0.0
    %2476 = vmatpush1.msra.mxu0 0.0
    %2477 = vmatprep.subr.mxu0 0.0
    %2478 = vmatpush1.msra.mxu0 0.0
    %2479 = vmatprep.subr.mxu0 0.0
    %2480 = vmatpush1.msra.mxu0 0.0
    %2481 = vmatprep.subr.mxu0 0.0
    %2482 = vmatpush1.msra.mxu0 0.0
    %2483 = vmatprep.subr.mxu0 0.0
    %2484 = vmatpush1.msra.mxu0 0.0
    %2485 = vmatprep.subr.mxu0 0.0
    %2486 = vmatpush1.msra.mxu0 0.0
    %2487 = vmatprep.subr.mxu0 0.0
    %2488 = vmatpush1.msra.mxu0 0.0
    %2489 = vmatprep.subr.mxu0 0.0
    %2490 = vmatpush1.msra.mxu0 0.0
    %2491 = vmatprep.subr.mxu0 0.0
    %2492 = vmatpush1.msra.mxu0 0.0
    %2493 = vmatprep.subr.mxu0 0.0
    %2494 = vmatpush1.msra.mxu0 0.0
    %2495 = vmatprep.subr.mxu0 0.0
    %2496 = vmatpush1.msra.mxu0 0.0
    %2497 = vmatprep.subr.mxu0 0.0
    %2498 = vmatpush1.msra.mxu0 0.0
    %2499 = vmatprep.subr.mxu0 0.0
    %2500 = vmatpush1.msra.mxu0 0.0
    %2501 = vmatprep.subr.mxu0 0.0
    %2502 = vmatpush1.msra.mxu0 0.0
    %2503 = vmatprep.subr.mxu0 0.0
    %2504 = vmatpush1.msra.mxu0 0.0
    %2505 = vmatprep.subr.mxu0 0.0
    %2506 = vmatpush1.msra.mxu0 0.0
    %2507 = vmatprep.subr.mxu0 0.0
    %2508 = vmatpush1.msra.mxu0 0.0
    %2509 = vmatprep.subr.mxu0 0.0
    %2510 = vmatpush1.msra.mxu0 0.0
    %2511 = vmatprep.subr.mxu0 0.0
    %2512 = vmatpush1.msra.mxu0 0.0
    %2513 = vmatprep.subr.mxu0 0.0
    %2514 = vmatpush1.msra.mxu0 0.0
    %2515 = vmatprep.subr.mxu0 0.0
    %2516 = vmatpush1.msra.mxu0 0.0
    %2517 = vmatprep.subr.mxu0 0.0
    %2518 = vmatpush1.msra.mxu0 0.0
    %2519 = vmatprep.subr.mxu0 0.0
    %2520 = vmatpush1.msra.mxu0 0.0
    %2521 = vmatprep.subr.mxu0 0.0
    %2522 = vmatpush1.msra.mxu0 0.0
    %2523 = vmatprep.subr.mxu0 0.0
    %2524 = vmatpush1.msra.mxu0 0.0
    %2525 = vmatprep.subr.mxu0 0.0
    %2526 = vmatpush1.msra.mxu0 0.0
    %2527 = vmatprep.subr.mxu0 0.0
    %2528 = vmatpush1.msra.mxu0 0.0
    %2529 = vmatprep.mubr.f32.mxu0 0.0
    %2530 = vmatmul.mubr.f32.gmra.mrb[0].mxu0 %v2457
    %v2531 = vpop.f32.mrb[0].mxu0
    %v2532 = vadd.f32 0.0, %v2531
    %v2533 = vpop.f32.mrb[0].mxu0
    %2534 = vmatprep.mubr.f32.mxu0 0.0
    %2535 = vmatmul.mubr.f32.gmra.mrb[0].mxu0 %v2460
    %v2536 = vpop.f32.mrb[0].mxu0
    %v2537 = vadd.f32 0.0, %v2536
    %v2538 = vpop.f32.mrb[0].mxu0
    %2539 = vmatprep.mubr.f32.mxu0 0.0
    %2540 = vmatmul.mubr.f32.gmra.mrb[0].mxu0 %v2463
    %v2541 = vpop.f32.mrb[0].mxu0
    %v2542 = vadd.f32 0.0, %v2541
    %v2543 = vpop.f32.mrb[0].mxu0
    %2544 = vdwg.mxu0
    %v2545 = vadd.f32 %v2368, %v2532
    %v2546 = vadd.f32 %v2369, %v2537
    %v2547 = vadd.f32 %v2370, %v2542
    %2548 = vmatprep.subr.mxu0 0.0
    %2549 = vmatpush1.msra.mxu0 %v1838
    %2550 = vmatprep.subr.mxu0 0.0
    %2551 = vmatpush1.msra.mxu0 %v1839
    %2552 = vmatprep.subr.mxu0 0.0
    %2553 = vmatpush1.msra.mxu0 %v1845
    %2554 = vmatprep.subr.mxu0 0.0
    %2555 = vmatpush1.msra.mxu0 0.0
    %2556 = vmatprep.subr.mxu0 0.0
    %2557 = vmatpush1.msra.mxu0 0.0
    %2558 = vmatprep.subr.mxu0 0.0
    %2559 = vmatpush1.msra.mxu0 0.0
    %2560 = vmatprep.subr.mxu0 0.0
    %2561 = vmatpush1.msra.mxu0 0.0
    %2562 = vmatprep.subr.mxu0 0.0
    %2563 = vmatpush1.msra.mxu0 0.0
    %2564 = vmatprep.subr.mxu0 0.0
    %2565 = vmatpush1.msra.mxu0 0.0
    %2566 = vmatprep.subr.mxu0 0.0
    %2567 = vmatpush1.msra.mxu0 0.0
    %2568 = vmatprep.subr.mxu0 0.0
    %2569 = vmatpush1.msra.mxu0 0.0
    %2570 = vmatprep.subr.mxu0 0.0
    %2571 = vmatpush1.msra.mxu0 0.0
    %2572 = vmatprep.subr.mxu0 0.0
    %2573 = vmatpush1.msra.mxu0 0.0
    %2574 = vmatprep.subr.mxu0 0.0
    %2575 = vmatpush1.msra.mxu0 0.0
    %2576 = vmatprep.subr.mxu0 0.0
    %2577 = vmatpush1.msra.mxu0 0.0
    %2578 = vmatprep.subr.mxu0 0.0
    %2579 = vmatpush1.msra.mxu0 0.0
    %2580 = vmatprep.subr.mxu0 0.0
    %2581 = vmatpush1.msra.mxu0 0.0
    %2582 = vmatprep.subr.mxu0 0.0
    %2583 = vmatpush1.msra.mxu0 0.0
    %2584 = vmatprep.subr.mxu0 0.0
    %2585 = vmatpush1.msra.mxu0 0.0
    %2586 = vmatprep.subr.mxu0 0.0
    %2587 = vmatpush1.msra.mxu0 0.0
    %2588 = vmatprep.subr.mxu0 0.0
    %2589 = vmatpush1.msra.mxu0 0.0
    %2590 = vmatprep.subr.mxu0 0.0
    %2591 = vmatpush1.msra.mxu0 0.0
    %2592 = vmatprep.subr.mxu0 0.0
    %2593 = vmatpush1.msra.mxu0 0.0
    %2594 = vmatprep.subr.mxu0 0.0
    %2595 = vmatpush1.msra.mxu0 0.0
    %2596 = vmatprep.subr.mxu0 0.0
    %2597 = vmatpush1.msra.mxu0 0.0
    %2598 = vmatprep.subr.mxu0 0.0
    %2599 = vmatpush1.msra.mxu0 0.0
    %2600 = vmatprep.subr.mxu0 0.0
    %2601 = vmatpush1.msra.mxu0 0.0
    %2602 = vmatprep.subr.mxu0 0.0
    %2603 = vmatpush1.msra.mxu0 0.0
    %2604 = vmatprep.subr.mxu0 0.0
    %2605 = vmatpush1.msra.mxu0 0.0
    %2606 = vmatprep.subr.mxu0 0.0
    %2607 = vmatpush1.msra.mxu0 0.0
    %2608 = vmatprep.subr.mxu0 0.0
    %2609 = vmatpush1.msra.mxu0 0.0
    %2610 = vmatprep.subr.mxu0 0.0
    %2611 = vmatpush1.msra.mxu0 0.0
    %2612 = vmatprep.mubr.f32.mxu0 0.0
    %2613 = vmatmul.mubr.f32.gmra.mrb[0].mxu0 %v812
    %v2614 = vpop.f32.mrb[0].mxu0
    %v2615 = vadd.f32 0.0, %v2614
    %v2616 = vpop.f32.mrb[0].mxu0
    %2617 = vmatprep.mubr.f32.mxu0 0.0
    %2618 = vmatmul.mubr.f32.gmra.mrb[0].mxu0 %v815
    %v2619 = vpop.f32.mrb[0].mxu0
    %v2620 = vadd.f32 0.0, %v2619
    %v2621 = vpop.f32.mrb[0].mxu0
    %2622 = vmatprep.mubr.f32.mxu0 0.0
    %2623 = vmatmul.mubr.f32.gmra.mrb[0].mxu0 %v818
    %v2624 = vpop.f32.mrb[0].mxu0
    %v2625 = vadd.f32 0.0, %v2624
    %v2626 = vpop.f32.mrb[0].mxu0
    %2627 = vdwg.mxu0
    %s2628 = scalar_lea.vmem %s4, 128
    %v2629 = vld [vmem:[%s2628] sm:$0xff]
    %v2630 = vld [vmem:[%s2628 + $0x8] sm:$0xff]
    %v2631 = vld [vmem:[%s2628 + $0x10] sm:$0xff]
    %v2632 = vld [vmem:[%s2628 + $0x18] sm:$0xff]
    %v2634 = vsel %vm1787, %v2615, 0
    %v2637 = vsel %vm1787, %v2620, 0
    %v2640 = vsel %vm1787, %v2625, 0
    %2642 = vmatprep.subr.mxu0 0.0
    %2643 = vmatpush1.msra.mxu0 %v2629
    %2644 = vmatprep.subr.mxu0 0.0
    %2645 = vmatpush1.msra.mxu0 %v2630
    %2646 = vmatprep.subr.mxu0 0.0
    %2647 = vmatpush1.msra.mxu0 %v2631
    %2648 = vmatprep.subr.mxu0 0.0
    %2649 = vmatpush1.msra.mxu0 %v2632
    %2650 = vmatprep.subr.mxu0 0.0
    %2651 = vmatpush1.msra.mxu0 0.0
    %2652 = vmatprep.subr.mxu0 0.0
    %2653 = vmatpush1.msra.mxu0 0.0
    %2654 = vmatprep.subr.mxu0 0.0
    %2655 = vmatpush1.msra.mxu0 0.0
    %2656 = vmatprep.subr.mxu0 0.0
    %2657 = vmatpush1.msra.mxu0 0.0
    %2658 = vmatprep.subr.mxu0 0.0
    %2659 = vmatpush1.msra.mxu0 0.0
    %2660 = vmatprep.subr.mxu0 0.0
    %2661 = vmatpush1.msra.mxu0 0.0
    %2662 = vmatprep.subr.mxu0 0.0
    %2663 = vmatpush1.msra.mxu0 0.0
    %2664 = vmatprep.subr.mxu0 0.0
    %2665 = vmatpush1.msra.mxu0 0.0
    %2666 = vmatprep.subr.mxu0 0.0
    %2667 = vmatpush1.msra.mxu0 0.0
    %2668 = vmatprep.subr.mxu0 0.0
    %2669 = vmatpush1.msra.mxu0 0.0
    %2670 = vmatprep.subr.mxu0 0.0
    %2671 = vmatpush1.msra.mxu0 0.0
    %2672 = vmatprep.subr.mxu0 0.0
    %2673 = vmatpush1.msra.mxu0 0.0
    %2674 = vmatprep.subr.mxu0 0.0
    %2675 = vmatpush1.msra.mxu0 0.0
    %2676 = vmatprep.subr.mxu0 0.0
    %2677 = vmatpush1.msra.mxu0 0.0
    %2678 = vmatprep.subr.mxu0 0.0
    %2679 = vmatpush1.msra.mxu0 0.0
    %2680 = vmatprep.subr.mxu0 0.0
    %2681 = vmatpush1.msra.mxu0 0.0
    %2682 = vmatprep.subr.mxu0 0.0
    %2683 = vmatpush1.msra.mxu0 0.0
    %2684 = vmatprep.subr.mxu0 0.0
    %2685 = vmatpush1.msra.mxu0 0.0
    %2686 = vmatprep.subr.mxu0 0.0
    %2687 = vmatpush1.msra.mxu0 0.0
    %2688 = vmatprep.subr.mxu0 0.0
    %2689 = vmatpush1.msra.mxu0 0.0
    %2690 = vmatprep.subr.mxu0 0.0
    %2691 = vmatpush1.msra.mxu0 0.0
    %2692 = vmatprep.subr.mxu0 0.0
    %2693 = vmatpush1.msra.mxu0 0.0
    %2694 = vmatprep.subr.mxu0 0.0
    %2695 = vmatpush1.msra.mxu0 0.0
    %2696 = vmatprep.subr.mxu0 0.0
    %2697 = vmatpush1.msra.mxu0 0.0
    %2698 = vmatprep.subr.mxu0 0.0
    %2699 = vmatpush1.msra.mxu0 0.0
    %2700 = vmatprep.subr.mxu0 0.0
    %2701 = vmatpush1.msra.mxu0 0.0
    %2702 = vmatprep.subr.mxu0 0.0
    %2703 = vmatpush1.msra.mxu0 0.0
    %2704 = vmatprep.subr.mxu0 0.0
    %2705 = vmatpush1.msra.mxu0 0.0
    %2706 = vmatprep.mubr.f32.mxu0 0.0
    %2707 = vmatmul.mubr.f32.gmra.mrb[0].mxu0 %v2634
    %v2708 = vpop.f32.mrb[0].mxu0
    %v2709 = vadd.f32 0.0, %v2708
    %v2710 = vpop.f32.mrb[0].mxu0
    %2711 = vmatprep.mubr.f32.mxu0 0.0
    %2712 = vmatmul.mubr.f32.gmra.mrb[0].mxu0 %v2637
    %v2713 = vpop.f32.mrb[0].mxu0
    %v2714 = vadd.f32 0.0, %v2713
    %v2715 = vpop.f32.mrb[0].mxu0
    %2716 = vmatprep.mubr.f32.mxu0 0.0
    %2717 = vmatmul.mubr.f32.gmra.mrb[0].mxu0 %v2640
    %v2718 = vpop.f32.mrb[0].mxu0
    %v2719 = vadd.f32 0.0, %v2718
    %v2720 = vpop.f32.mrb[0].mxu0
    %2721 = vdwg.mxu0
    %v2722 = vadd.f32 %v2545, %v2709
    %v2723 = vadd.f32 %v2546, %v2714
    %v2724 = vadd.f32 %v2547, %v2719
    %2725 = vmatprep.subr.mxu0 0.0
    %2726 = vmatpush1.msra.mxu0 %v1838
    %2727 = vmatprep.subr.mxu0 0.0
    %2728 = vmatpush1.msra.mxu0 %v1839
    %2729 = vmatprep.subr.mxu0 0.0
    %2730 = vmatpush1.msra.mxu0 %v1845
    %2731 = vmatprep.subr.mxu0 0.0
    %2732 = vmatpush1.msra.mxu0 0.0
    %2733 = vmatprep.subr.mxu0 0.0
    %2734 = vmatpush1.msra.mxu0 0.0
    %2735 = vmatprep.subr.mxu0 0.0
    %2736 = vmatpush1.msra.mxu0 0.0
    %2737 = vmatprep.subr.mxu0 0.0
    %2738 = vmatpush1.msra.mxu0 0.0
    %2739 = vmatprep.subr.mxu0 0.0
    %2740 = vmatpush1.msra.mxu0 0.0
    %2741 = vmatprep.subr.mxu0 0.0
    %2742 = vmatpush1.msra.mxu0 0.0
    %2743 = vmatprep.subr.mxu0 0.0
    %2744 = vmatpush1.msra.mxu0 0.0
    %2745 = vmatprep.subr.mxu0 0.0
    %2746 = vmatpush1.msra.mxu0 0.0
    %2747 = vmatprep.subr.mxu0 0.0
    %2748 = vmatpush1.msra.mxu0 0.0
    %2749 = vmatprep.subr.mxu0 0.0
    %2750 = vmatpush1.msra.mxu0 0.0
    %2751 = vmatprep.subr.mxu0 0.0
    %2752 = vmatpush1.msra.mxu0 0.0
    %2753 = vmatprep.subr.mxu0 0.0
    %2754 = vmatpush1.msra.mxu0 0.0
    %2755 = vmatprep.subr.mxu0 0.0
    %2756 = vmatpush1.msra.mxu0 0.0
    %2757 = vmatprep.subr.mxu0 0.0
    %2758 = vmatpush1.msra.mxu0 0.0
    %2759 = vmatprep.subr.mxu0 0.0
    %2760 = vmatpush1.msra.mxu0 0.0
    %2761 = vmatprep.subr.mxu0 0.0
    %2762 = vmatpush1.msra.mxu0 0.0
    %2763 = vmatprep.subr.mxu0 0.0
    %2764 = vmatpush1.msra.mxu0 0.0
    %2765 = vmatprep.subr.mxu0 0.0
    %2766 = vmatpush1.msra.mxu0 0.0
    %2767 = vmatprep.subr.mxu0 0.0
    %2768 = vmatpush1.msra.mxu0 0.0
    %2769 = vmatprep.subr.mxu0 0.0
    %2770 = vmatpush1.msra.mxu0 0.0
    %2771 = vmatprep.subr.mxu0 0.0
    %2772 = vmatpush1.msra.mxu0 0.0
    %2773 = vmatprep.subr.mxu0 0.0
    %2774 = vmatpush1.msra.mxu0 0.0
    %2775 = vmatprep.subr.mxu0 0.0
    %2776 = vmatpush1.msra.mxu0 0.0
    %2777 = vmatprep.subr.mxu0 0.0
    %2778 = vmatpush1.msra.mxu0 0.0
    %2779 = vmatprep.subr.mxu0 0.0
    %2780 = vmatpush1.msra.mxu0 0.0
    %2781 = vmatprep.subr.mxu0 0.0
    %2782 = vmatpush1.msra.mxu0 0.0
    %2783 = vmatprep.subr.mxu0 0.0
    %2784 = vmatpush1.msra.mxu0 0.0
    %2785 = vmatprep.subr.mxu0 0.0
    %2786 = vmatpush1.msra.mxu0 0.0
    %2787 = vmatprep.subr.mxu0 0.0
    %2788 = vmatpush1.msra.mxu0 0.0
    %2789 = vmatprep.mubr.f32.mxu0 0.0
    %2790 = vmatmul.mubr.f32.gmra.mrb[0].mxu0 %v1006
    %v2791 = vpop.f32.mrb[0].mxu0
    %v2792 = vadd.f32 0.0, %v2791
    %v2793 = vpop.f32.mrb[0].mxu0
    %2794 = vmatprep.mubr.f32.mxu0 0.0
    %2795 = vmatmul.mubr.f32.gmra.mrb[0].mxu0 %v1009
    %v2796 = vpop.f32.mrb[0].mxu0
    %v2797 = vadd.f32 0.0, %v2796
    %v2798 = vpop.f32.mrb[0].mxu0
    %2799 = vmatprep.mubr.f32.mxu0 0.0
    %2800 = vmatmul.mubr.f32.gmra.mrb[0].mxu0 %v1012
    %v2801 = vpop.f32.mrb[0].mxu0
    %v2802 = vadd.f32 0.0, %v2801
    %v2803 = vpop.f32.mrb[0].mxu0
    %2804 = vdwg.mxu0
    %s2805 = scalar_lea.vmem %s4, 160
    %v2806 = vld [vmem:[%s2805] sm:$0xff]
    %v2807 = vld [vmem:[%s2805 + $0x8] sm:$0xff]
    %v2808 = vld [vmem:[%s2805 + $0x10] sm:$0xff]
    %v2809 = vld [vmem:[%s2805 + $0x18] sm:$0xff]
    %v2811 = vsel %vm1787, %v2792, 0
    %v2814 = vsel %vm1787, %v2797, 0
    %v2817 = vsel %vm1787, %v2802, 0
    %2819 = vmatprep.subr.mxu0 0.0
    %2820 = vmatpush1.msra.mxu0 %v2806
    %2821 = vmatprep.subr.mxu0 0.0
    %2822 = vmatpush1.msra.mxu0 %v2807
    %2823 = vmatprep.subr.mxu0 0.0
    %2824 = vmatpush1.msra.mxu0 %v2808
    %2825 = vmatprep.subr.mxu0 0.0
    %2826 = vmatpush1.msra.mxu0 %v2809
    %2827 = vmatprep.subr.mxu0 0.0
    %2828 = vmatpush1.msra.mxu0 0.0
    %2829 = vmatprep.subr.mxu0 0.0
    %2830 = vmatpush1.msra.mxu0 0.0
    %2831 = vmatprep.subr.mxu0 0.0
    %2832 = vmatpush1.msra.mxu0 0.0
    %2833 = vmatprep.subr.mxu0 0.0
    %2834 = vmatpush1.msra.mxu0 0.0
    %2835 = vmatprep.subr.mxu0 0.0
    %2836 = vmatpush1.msra.mxu0 0.0
    %2837 = vmatprep.subr.mxu0 0.0
    %2838 = vmatpush1.msra.mxu0 0.0
    %2839 = vmatprep.subr.mxu0 0.0
    %2840 = vmatpush1.msra.mxu0 0.0
    %2841 = vmatprep.subr.mxu0 0.0
    %2842 = vmatpush1.msra.mxu0 0.0
    %2843 = vmatprep.subr.mxu0 0.0
    %2844 = vmatpush1.msra.mxu0 0.0
    %2845 = vmatprep.subr.mxu0 0.0
    %2846 = vmatpush1.msra.mxu0 0.0
    %2847 = vmatprep.subr.mxu0 0.0
    %2848 = vmatpush1.msra.mxu0 0.0
    %2849 = vmatprep.subr.mxu0 0.0
    %2850 = vmatpush1.msra.mxu0 0.0
    %2851 = vmatprep.subr.mxu0 0.0
    %2852 = vmatpush1.msra.mxu0 0.0
    %2853 = vmatprep.subr.mxu0 0.0
    %2854 = vmatpush1.msra.mxu0 0.0
    %2855 = vmatprep.subr.mxu0 0.0
    %2856 = vmatpush1.msra.mxu0 0.0
    %2857 = vmatprep.subr.mxu0 0.0
    %2858 = vmatpush1.msra.mxu0 0.0
    %2859 = vmatprep.subr.mxu0 0.0
    %2860 = vmatpush1.msra.mxu0 0.0
    %2861 = vmatprep.subr.mxu0 0.0
    %2862 = vmatpush1.msra.mxu0 0.0
    %2863 = vmatprep.subr.mxu0 0.0
    %2864 = vmatpush1.msra.mxu0 0.0
    %2865 = vmatprep.subr.mxu0 0.0
    %2866 = vmatpush1.msra.mxu0 0.0
    %2867 = vmatprep.subr.mxu0 0.0
    %2868 = vmatpush1.msra.mxu0 0.0
    %2869 = vmatprep.subr.mxu0 0.0
    %2870 = vmatpush1.msra.mxu0 0.0
    %2871 = vmatprep.subr.mxu0 0.0
    %2872 = vmatpush1.msra.mxu0 0.0
    %2873 = vmatprep.subr.mxu0 0.0
    %2874 = vmatpush1.msra.mxu0 0.0
    %2875 = vmatprep.subr.mxu0 0.0
    %2876 = vmatpush1.msra.mxu0 0.0
    %2877 = vmatprep.subr.mxu0 0.0
    %2878 = vmatpush1.msra.mxu0 0.0
    %2879 = vmatprep.subr.mxu0 0.0
    %2880 = vmatpush1.msra.mxu0 0.0
    %2881 = vmatprep.subr.mxu0 0.0
    %2882 = vmatpush1.msra.mxu0 0.0
    %2883 = vmatprep.mubr.f32.mxu0 0.0
    %2884 = vmatmul.mubr.f32.gmra.mrb[0].mxu0 %v2811
    %v2885 = vpop.f32.mrb[0].mxu0
    %v2886 = vadd.f32 0.0, %v2885
    %v2887 = vpop.f32.mrb[0].mxu0
    %2888 = vmatprep.mubr.f32.mxu0 0.0
    %2889 = vmatmul.mubr.f32.gmra.mrb[0].mxu0 %v2814
    %v2890 = vpop.f32.mrb[0].mxu0
    %v2891 = vadd.f32 0.0, %v2890
    %v2892 = vpop.f32.mrb[0].mxu0
    %2893 = vmatprep.mubr.f32.mxu0 0.0
    %2894 = vmatmul.mubr.f32.gmra.mrb[0].mxu0 %v2817
    %v2895 = vpop.f32.mrb[0].mxu0
    %v2896 = vadd.f32 0.0, %v2895
    %v2897 = vpop.f32.mrb[0].mxu0
    %2898 = vdwg.mxu0
    %v2899 = vadd.f32 %v2722, %v2886
    %v2900 = vadd.f32 %v2723, %v2891
    %v2901 = vadd.f32 %v2724, %v2896
    %2902 = vmatprep.subr.mxu0 0.0
    %2903 = vmatpush1.msra.mxu0 %v1838
    %2904 = vmatprep.subr.mxu0 0.0
    %2905 = vmatpush1.msra.mxu0 %v1839
    %2906 = vmatprep.subr.mxu0 0.0
    %2907 = vmatpush1.msra.mxu0 %v1845
    %2908 = vmatprep.subr.mxu0 0.0
    %2909 = vmatpush1.msra.mxu0 0.0
    %2910 = vmatprep.subr.mxu0 0.0
    %2911 = vmatpush1.msra.mxu0 0.0
    %2912 = vmatprep.subr.mxu0 0.0
    %2913 = vmatpush1.msra.mxu0 0.0
    %2914 = vmatprep.subr.mxu0 0.0
    %2915 = vmatpush1.msra.mxu0 0.0
    %2916 = vmatprep.subr.mxu0 0.0
    %2917 = vmatpush1.msra.mxu0 0.0
    %2918 = vmatprep.subr.mxu0 0.0
    %2919 = vmatpush1.msra.mxu0 0.0
    %2920 = vmatprep.subr.mxu0 0.0
    %2921 = vmatpush1.msra.mxu0 0.0
    %2922 = vmatprep.subr.mxu0 0.0
    %2923 = vmatpush1.msra.mxu0 0.0
    %2924 = vmatprep.subr.mxu0 0.0
    %2925 = vmatpush1.msra.mxu0 0.0
    %2926 = vmatprep.subr.mxu0 0.0
    %2927 = vmatpush1.msra.mxu0 0.0
    %2928 = vmatprep.subr.mxu0 0.0
    %2929 = vmatpush1.msra.mxu0 0.0
    %2930 = vmatprep.subr.mxu0 0.0
    %2931 = vmatpush1.msra.mxu0 0.0
    %2932 = vmatprep.subr.mxu0 0.0
    %2933 = vmatpush1.msra.mxu0 0.0
    %2934 = vmatprep.subr.mxu0 0.0
    %2935 = vmatpush1.msra.mxu0 0.0
    %2936 = vmatprep.subr.mxu0 0.0
    %2937 = vmatpush1.msra.mxu0 0.0
    %2938 = vmatprep.subr.mxu0 0.0
    %2939 = vmatpush1.msra.mxu0 0.0
    %2940 = vmatprep.subr.mxu0 0.0
    %2941 = vmatpush1.msra.mxu0 0.0
    %2942 = vmatprep.subr.mxu0 0.0
    %2943 = vmatpush1.msra.mxu0 0.0
    %2944 = vmatprep.subr.mxu0 0.0
    %2945 = vmatpush1.msra.mxu0 0.0
    %2946 = vmatprep.subr.mxu0 0.0
    %2947 = vmatpush1.msra.mxu0 0.0
    %2948 = vmatprep.subr.mxu0 0.0
    %2949 = vmatpush1.msra.mxu0 0.0
    %2950 = vmatprep.subr.mxu0 0.0
    %2951 = vmatpush1.msra.mxu0 0.0
    %2952 = vmatprep.subr.mxu0 0.0
    %2953 = vmatpush1.msra.mxu0 0.0
    %2954 = vmatprep.subr.mxu0 0.0
    %2955 = vmatpush1.msra.mxu0 0.0
    %2956 = vmatprep.subr.mxu0 0.0
    %2957 = vmatpush1.msra.mxu0 0.0
    %2958 = vmatprep.subr.mxu0 0.0
    %2959 = vmatpush1.msra.mxu0 0.0
    %2960 = vmatprep.subr.mxu0 0.0
    %2961 = vmatpush1.msra.mxu0 0.0
    %2962 = vmatprep.subr.mxu0 0.0
    %2963 = vmatpush1.msra.mxu0 0.0
    %2964 = vmatprep.subr.mxu0 0.0
    %2965 = vmatpush1.msra.mxu0 0.0
    %2966 = vmatprep.mubr.f32.mxu0 0.0
    %2967 = vmatmul.mubr.f32.gmra.mrb[0].mxu0 %v1200
    %v2968 = vpop.f32.mrb[0].mxu0
    %v2969 = vadd.f32 0.0, %v2968
    %v2970 = vpop.f32.mrb[0].mxu0
    %2971 = vmatprep.mubr.f32.mxu0 0.0
    %2972 = vmatmul.mubr.f32.gmra.mrb[0].mxu0 %v1203
    %v2973 = vpop.f32.mrb[0].mxu0
    %v2974 = vadd.f32 0.0, %v2973
    %v2975 = vpop.f32.mrb[0].mxu0
    %2976 = vmatprep.mubr.f32.mxu0 0.0
    %2977 = vmatmul.mubr.f32.gmra.mrb[0].mxu0 %v1206
    %v2978 = vpop.f32.mrb[0].mxu0
    %v2979 = vadd.f32 0.0, %v2978
    %v2980 = vpop.f32.mrb[0].mxu0
    %2981 = vdwg.mxu0
    %s2982 = scalar_lea.vmem %s4, 192
    %v2983 = vld [vmem:[%s2982] sm:$0xff]
    %v2984 = vld [vmem:[%s2982 + $0x8] sm:$0xff]
    %v2985 = vld [vmem:[%s2982 + $0x10] sm:$0xff]
    %v2986 = vld [vmem:[%s2982 + $0x18] sm:$0xff]
    %v2988 = vsel %vm1787, %v2969, 0
    %v2991 = vsel %vm1787, %v2974, 0
    %v2994 = vsel %vm1787, %v2979, 0
    %2996 = vmatprep.subr.mxu0 0.0
    %2997 = vmatpush1.msra.mxu0 %v2983
    %2998 = vmatprep.subr.mxu0 0.0
    %2999 = vmatpush1.msra.mxu0 %v2984
    %3000 = vmatprep.subr.mxu0 0.0
    %3001 = vmatpush1.msra.mxu0 %v2985
    %3002 = vmatprep.subr.mxu0 0.0
    %3003 = vmatpush1.msra.mxu0 %v2986
    %3004 = vmatprep.subr.mxu0 0.0
    %3005 = vmatpush1.msra.mxu0 0.0
    %3006 = vmatprep.subr.mxu0 0.0
    %3007 = vmatpush1.msra.mxu0 0.0
    %3008 = vmatprep.subr.mxu0 0.0
    %3009 = vmatpush1.msra.mxu0 0.0
    %3010 = vmatprep.subr.mxu0 0.0
    %3011 = vmatpush1.msra.mxu0 0.0
    %3012 = vmatprep.subr.mxu0 0.0
    %3013 = vmatpush1.msra.mxu0 0.0
    %3014 = vmatprep.subr.mxu0 0.0
    %3015 = vmatpush1.msra.mxu0 0.0
    %3016 = vmatprep.subr.mxu0 0.0
    %3017 = vmatpush1.msra.mxu0 0.0
    %3018 = vmatprep.subr.mxu0 0.0
    %3019 = vmatpush1.msra.mxu0 0.0
    %3020 = vmatprep.subr.mxu0 0.0
    %3021 = vmatpush1.msra.mxu0 0.0
    %3022 = vmatprep.subr.mxu0 0.0
    %3023 = vmatpush1.msra.mxu0 0.0
    %3024 = vmatprep.subr.mxu0 0.0
    %3025 = vmatpush1.msra.mxu0 0.0
    %3026 = vmatprep.subr.mxu0 0.0
    %3027 = vmatpush1.msra.mxu0 0.0
    %3028 = vmatprep.subr.mxu0 0.0
    %3029 = vmatpush1.msra.mxu0 0.0
    %3030 = vmatprep.subr.mxu0 0.0
    %3031 = vmatpush1.msra.mxu0 0.0
    %3032 = vmatprep.subr.mxu0 0.0
    %3033 = vmatpush1.msra.mxu0 0.0
    %3034 = vmatprep.subr.mxu0 0.0
    %3035 = vmatpush1.msra.mxu0 0.0
    %3036 = vmatprep.subr.mxu0 0.0
    %3037 = vmatpush1.msra.mxu0 0.0
    %3038 = vmatprep.subr.mxu0 0.0
    %3039 = vmatpush1.msra.mxu0 0.0
    %3040 = vmatprep.subr.mxu0 0.0
    %3041 = vmatpush1.msra.mxu0 0.0
    %3042 = vmatprep.subr.mxu0 0.0
    %3043 = vmatpush1.msra.mxu0 0.0
    %3044 = vmatprep.subr.mxu0 0.0
    %3045 = vmatpush1.msra.mxu0 0.0
    %3046 = vmatprep.subr.mxu0 0.0
    %3047 = vmatpush1.msra.mxu0 0.0
    %3048 = vmatprep.subr.mxu0 0.0
    %3049 = vmatpush1.msra.mxu0 0.0
    %3050 = vmatprep.subr.mxu0 0.0
    %3051 = vmatpush1.msra.mxu0 0.0
    %3052 = vmatprep.subr.mxu0 0.0
    %3053 = vmatpush1.msra.mxu0 0.0
    %3054 = vmatprep.subr.mxu0 0.0
    %3055 = vmatpush1.msra.mxu0 0.0
    %3056 = vmatprep.subr.mxu0 0.0
    %3057 = vmatpush1.msra.mxu0 0.0
    %3058 = vmatprep.subr.mxu0 0.0
    %3059 = vmatpush1.msra.mxu0 0.0
    %3060 = vmatprep.mubr.f32.mxu0 0.0
    %3061 = vmatmul.mubr.f32.gmra.mrb[0].mxu0 %v2988
    %v3062 = vpop.f32.mrb[0].mxu0
    %v3063 = vadd.f32 0.0, %v3062
    %v3064 = vpop.f32.mrb[0].mxu0
    %3065 = vmatprep.mubr.f32.mxu0 0.0
    %3066 = vmatmul.mubr.f32.gmra.mrb[0].mxu0 %v2991
    %v3067 = vpop.f32.mrb[0].mxu0
    %v3068 = vadd.f32 0.0, %v3067
    %v3069 = vpop.f32.mrb[0].mxu0
    %3070 = vmatprep.mubr.f32.mxu0 0.0
    %3071 = vmatmul.mubr.f32.gmra.mrb[0].mxu0 %v2994
    %v3072 = vpop.f32.mrb[0].mxu0
    %v3073 = vadd.f32 0.0, %v3072
    %v3074 = vpop.f32.mrb[0].mxu0
    %3075 = vdwg.mxu0
    %v3076 = vadd.f32 %v2899, %v3063
    %v3077 = vadd.f32 %v2900, %v3068
    %v3078 = vadd.f32 %v2901, %v3073
    %3079 = vmatprep.subr.mxu0 0.0
    %3080 = vmatpush1.msra.mxu0 %v1838
    %3081 = vmatprep.subr.mxu0 0.0
    %3082 = vmatpush1.msra.mxu0 %v1839
    %3083 = vmatprep.subr.mxu0 0.0
    %3084 = vmatpush1.msra.mxu0 %v1845
    %3085 = vmatprep.subr.mxu0 0.0
    %3086 = vmatpush1.msra.mxu0 0.0
    %3087 = vmatprep.subr.mxu0 0.0
    %3088 = vmatpush1.msra.mxu0 0.0
    %3089 = vmatprep.subr.mxu0 0.0
    %3090 = vmatpush1.msra.mxu0 0.0
    %3091 = vmatprep.subr.mxu0 0.0
    %3092 = vmatpush1.msra.mxu0 0.0
    %3093 = vmatprep.subr.mxu0 0.0
    %3094 = vmatpush1.msra.mxu0 0.0
    %3095 = vmatprep.subr.mxu0 0.0
    %3096 = vmatpush1.msra.mxu0 0.0
    %3097 = vmatprep.subr.mxu0 0.0
    %3098 = vmatpush1.msra.mxu0 0.0
    %3099 = vmatprep.subr.mxu0 0.0
    %3100 = vmatpush1.msra.mxu0 0.0
    %3101 = vmatprep.subr.mxu0 0.0
    %3102 = vmatpush1.msra.mxu0 0.0
    %3103 = vmatprep.subr.mxu0 0.0
    %3104 = vmatpush1.msra.mxu0 0.0
    %3105 = vmatprep.subr.mxu0 0.0
    %3106 = vmatpush1.msra.mxu0 0.0
    %3107 = vmatprep.subr.mxu0 0.0
    %3108 = vmatpush1.msra.mxu0 0.0
    %3109 = vmatprep.subr.mxu0 0.0
    %3110 = vmatpush1.msra.mxu0 0.0
    %3111 = vmatprep.subr.mxu0 0.0
    %3112 = vmatpush1.msra.mxu0 0.0
    %3113 = vmatprep.subr.mxu0 0.0
    %3114 = vmatpush1.msra.mxu0 0.0
    %3115 = vmatprep.subr.mxu0 0.0
    %3116 = vmatpush1.msra.mxu0 0.0
    %3117 = vmatprep.subr.mxu0 0.0
    %3118 = vmatpush1.msra.mxu0 0.0
    %3119 = vmatprep.subr.mxu0 0.0
    %3120 = vmatpush1.msra.mxu0 0.0
    %3121 = vmatprep.subr.mxu0 0.0
    %3122 = vmatpush1.msra.mxu0 0.0
    %3123 = vmatprep.subr.mxu0 0.0
    %3124 = vmatpush1.msra.mxu0 0.0
    %3125 = vmatprep.subr.mxu0 0.0
    %3126 = vmatpush1.msra.mxu0 0.0
    %3127 = vmatprep.subr.mxu0 0.0
    %3128 = vmatpush1.msra.mxu0 0.0
    %3129 = vmatprep.subr.mxu0 0.0
    %3130 = vmatpush1.msra.mxu0 0.0
    %3131 = vmatprep.subr.mxu0 0.0
    %3132 = vmatpush1.msra.mxu0 0.0
    %3133 = vmatprep.subr.mxu0 0.0
    %3134 = vmatpush1.msra.mxu0 0.0
    %3135 = vmatprep.subr.mxu0 0.0
    %3136 = vmatpush1.msra.mxu0 0.0
    %3137 = vmatprep.subr.mxu0 0.0
    %3138 = vmatpush1.msra.mxu0 0.0
    %3139 = vmatprep.subr.mxu0 0.0
    %3140 = vmatpush1.msra.mxu0 0.0
    %3141 = vmatprep.subr.mxu0 0.0
    %3142 = vmatpush1.msra.mxu0 0.0
    %3143 = vmatprep.mubr.f32.mxu0 0.0
    %3144 = vmatmul.mubr.f32.gmra.mrb[0].mxu0 %v1394
    %v3145 = vpop.f32.mrb[0].mxu0
    %v3146 = vadd.f32 0.0, %v3145
    %v3147 = vpop.f32.mrb[0].mxu0
    %3148 = vmatprep.mubr.f32.mxu0 0.0
    %3149 = vmatmul.mubr.f32.gmra.mrb[0].mxu0 %v1397
    %v3150 = vpop.f32.mrb[0].mxu0
    %v3151 = vadd.f32 0.0, %v3150
    %v3152 = vpop.f32.mrb[0].mxu0
    %3153 = vmatprep.mubr.f32.mxu0 0.0
    %3154 = vmatmul.mubr.f32.gmra.mrb[0].mxu0 %v1400
    %v3155 = vpop.f32.mrb[0].mxu0
    %v3156 = vadd.f32 0.0, %v3155
    %v3157 = vpop.f32.mrb[0].mxu0
    %3158 = vdwg.mxu0
    %s3159 = scalar_lea.vmem %s4, 224
    %v3160 = vld [vmem:[%s3159] sm:$0xff]
    %v3161 = vld [vmem:[%s3159 + $0x8] sm:$0xff]
    %v3162 = vld [vmem:[%s3159 + $0x10] sm:$0xff]
    %v3163 = vld [vmem:[%s3159 + $0x18] sm:$0xff]
    %v3165 = vsel %vm1787, %v3146, 0
    %v3168 = vsel %vm1787, %v3151, 0
    %v3171 = vsel %vm1787, %v3156, 0
    %3173 = vmatprep.subr.mxu0 0.0
    %3174 = vmatpush1.msra.mxu0 %v3160
    %3175 = vmatprep.subr.mxu0 0.0
    %3176 = vmatpush1.msra.mxu0 %v3161
    %3177 = vmatprep.subr.mxu0 0.0
    %3178 = vmatpush1.msra.mxu0 %v3162
    %3179 = vmatprep.subr.mxu0 0.0
    %3180 = vmatpush1.msra.mxu0 %v3163
    %3181 = vmatprep.subr.mxu0 0.0
    %3182 = vmatpush1.msra.mxu0 0.0
    %3183 = vmatprep.subr.mxu0 0.0
    %3184 = vmatpush1.msra.mxu0 0.0
    %3185 = vmatprep.subr.mxu0 0.0
    %3186 = vmatpush1.msra.mxu0 0.0
    %3187 = vmatprep.subr.mxu0 0.0
    %3188 = vmatpush1.msra.mxu0 0.0
    %3189 = vmatprep.subr.mxu0 0.0
    %3190 = vmatpush1.msra.mxu0 0.0
    %3191 = vmatprep.subr.mxu0 0.0
    %3192 = vmatpush1.msra.mxu0 0.0
    %3193 = vmatprep.subr.mxu0 0.0
    %3194 = vmatpush1.msra.mxu0 0.0
    %3195 = vmatprep.subr.mxu0 0.0
    %3196 = vmatpush1.msra.mxu0 0.0
    %3197 = vmatprep.subr.mxu0 0.0
    %3198 = vmatpush1.msra.mxu0 0.0
    %3199 = vmatprep.subr.mxu0 0.0
    %3200 = vmatpush1.msra.mxu0 0.0
    %3201 = vmatprep.subr.mxu0 0.0
    %3202 = vmatpush1.msra.mxu0 0.0
    %3203 = vmatprep.subr.mxu0 0.0
    %3204 = vmatpush1.msra.mxu0 0.0
    %3205 = vmatprep.subr.mxu0 0.0
    %3206 = vmatpush1.msra.mxu0 0.0
    %3207 = vmatprep.subr.mxu0 0.0
    %3208 = vmatpush1.msra.mxu0 0.0
    %3209 = vmatprep.subr.mxu0 0.0
    %3210 = vmatpush1.msra.mxu0 0.0
    %3211 = vmatprep.subr.mxu0 0.0
    %3212 = vmatpush1.msra.mxu0 0.0
    %3213 = vmatprep.subr.mxu0 0.0
    %3214 = vmatpush1.msra.mxu0 0.0
    %3215 = vmatprep.subr.mxu0 0.0
    %3216 = vmatpush1.msra.mxu0 0.0
    %3217 = vmatprep.subr.mxu0 0.0
    %3218 = vmatpush1.msra.mxu0 0.0
    %3219 = vmatprep.subr.mxu0 0.0
    %3220 = vmatpush1.msra.mxu0 0.0
    %3221 = vmatprep.subr.mxu0 0.0
    %3222 = vmatpush1.msra.mxu0 0.0
    %3223 = vmatprep.subr.mxu0 0.0
    %3224 = vmatpush1.msra.mxu0 0.0
    %3225 = vmatprep.subr.mxu0 0.0
    %3226 = vmatpush1.msra.mxu0 0.0
    %3227 = vmatprep.subr.mxu0 0.0
    %3228 = vmatpush1.msra.mxu0 0.0
    %3229 = vmatprep.subr.mxu0 0.0
    %3230 = vmatpush1.msra.mxu0 0.0
    %3231 = vmatprep.subr.mxu0 0.0
    %3232 = vmatpush1.msra.mxu0 0.0
    %3233 = vmatprep.subr.mxu0 0.0
    %3234 = vmatpush1.msra.mxu0 0.0
    %3235 = vmatprep.subr.mxu0 0.0
    %3236 = vmatpush1.msra.mxu0 0.0
    %3237 = vmatprep.mubr.f32.mxu0 0.0
    %3238 = vmatmul.mubr.f32.gmra.mrb[0].mxu0 %v3165
    %v3239 = vpop.f32.mrb[0].mxu0
    %v3240 = vadd.f32 0.0, %v3239
    %v3241 = vpop.f32.mrb[0].mxu0
    %3242 = vmatprep.mubr.f32.mxu0 0.0
    %3243 = vmatmul.mubr.f32.gmra.mrb[0].mxu0 %v3168
    %v3244 = vpop.f32.mrb[0].mxu0
    %v3245 = vadd.f32 0.0, %v3244
    %v3246 = vpop.f32.mrb[0].mxu0
    %3247 = vmatprep.mubr.f32.mxu0 0.0
    %3248 = vmatmul.mubr.f32.gmra.mrb[0].mxu0 %v3171
    %v3249 = vpop.f32.mrb[0].mxu0
    %v3250 = vadd.f32 0.0, %v3249
    %v3251 = vpop.f32.mrb[0].mxu0
    %3252 = vdwg.mxu0
    %v3253 = vadd.f32 %v3076, %v3240
    %v3254 = vadd.f32 %v3077, %v3245
    %v3255 = vadd.f32 %v3078, %v3250
    %3256 = vmatprep.subr.mxu0 0.0
    %3257 = vmatpush1.msra.mxu0 %v1838
    %3258 = vmatprep.subr.mxu0 0.0
    %3259 = vmatpush1.msra.mxu0 %v1839
    %3260 = vmatprep.subr.mxu0 0.0
    %3261 = vmatpush1.msra.mxu0 %v1845
    %3262 = vmatprep.subr.mxu0 0.0
    %3263 = vmatpush1.msra.mxu0 0.0
    %3264 = vmatprep.subr.mxu0 0.0
    %3265 = vmatpush1.msra.mxu0 0.0
    %3266 = vmatprep.subr.mxu0 0.0
    %3267 = vmatpush1.msra.mxu0 0.0
    %3268 = vmatprep.subr.mxu0 0.0
    %3269 = vmatpush1.msra.mxu0 0.0
    %3270 = vmatprep.subr.mxu0 0.0
    %3271 = vmatpush1.msra.mxu0 0.0
    %3272 = vmatprep.subr.mxu0 0.0
    %3273 = vmatpush1.msra.mxu0 0.0
    %3274 = vmatprep.subr.mxu0 0.0
    %3275 = vmatpush1.msra.mxu0 0.0
    %3276 = vmatprep.subr.mxu0 0.0
    %3277 = vmatpush1.msra.mxu0 0.0
    %3278 = vmatprep.subr.mxu0 0.0
    %3279 = vmatpush1.msra.mxu0 0.0
    %3280 = vmatprep.subr.mxu0 0.0
    %3281 = vmatpush1.msra.mxu0 0.0
    %3282 = vmatprep.subr.mxu0 0.0
    %3283 = vmatpush1.msra.mxu0 0.0
    %3284 = vmatprep.subr.mxu0 0.0
    %3285 = vmatpush1.msra.mxu0 0.0
    %3286 = vmatprep.subr.mxu0 0.0
    %3287 = vmatpush1.msra.mxu0 0.0
    %3288 = vmatprep.subr.mxu0 0.0
    %3289 = vmatpush1.msra.mxu0 0.0
    %3290 = vmatprep.subr.mxu0 0.0
    %3291 = vmatpush1.msra.mxu0 0.0
    %3292 = vmatprep.subr.mxu0 0.0
    %3293 = vmatpush1.msra.mxu0 0.0
    %3294 = vmatprep.subr.mxu0 0.0
    %3295 = vmatpush1.msra.mxu0 0.0
    %3296 = vmatprep.subr.mxu0 0.0
    %3297 = vmatpush1.msra.mxu0 0.0
    %3298 = vmatprep.subr.mxu0 0.0
    %3299 = vmatpush1.msra.mxu0 0.0
    %3300 = vmatprep.subr.mxu0 0.0
    %3301 = vmatpush1.msra.mxu0 0.0
    %3302 = vmatprep.subr.mxu0 0.0
    %3303 = vmatpush1.msra.mxu0 0.0
    %3304 = vmatprep.subr.mxu0 0.0
    %3305 = vmatpush1.msra.mxu0 0.0
    %3306 = vmatprep.subr.mxu0 0.0
    %3307 = vmatpush1.msra.mxu0 0.0
    %3308 = vmatprep.subr.mxu0 0.0
    %3309 = vmatpush1.msra.mxu0 0.0
    %3310 = vmatprep.subr.mxu0 0.0
    %3311 = vmatpush1.msra.mxu0 0.0
    %3312 = vmatprep.subr.mxu0 0.0
    %3313 = vmatpush1.msra.mxu0 0.0
    %3314 = vmatprep.subr.mxu0 0.0
    %3315 = vmatpush1.msra.mxu0 0.0
    %3316 = vmatprep.subr.mxu0 0.0
    %3317 = vmatpush1.msra.mxu0 0.0
    %3318 = vmatprep.subr.mxu0 0.0
    %3319 = vmatpush1.msra.mxu0 0.0
    %3320 = vmatprep.mubr.f32.mxu0 0.0
    %3321 = vmatmul.mubr.f32.gmra.mrb[0].mxu0 %v1588
    %v3322 = vpop.f32.mrb[0].mxu0
    %v3323 = vadd.f32 0.0, %v3322
    %v3324 = vpop.f32.mrb[0].mxu0
    %3325 = vmatprep.mubr.f32.mxu0 0.0
    %3326 = vmatmul.mubr.f32.gmra.mrb[0].mxu0 %v1591
    %v3327 = vpop.f32.mrb[0].mxu0
    %v3328 = vadd.f32 0.0, %v3327
    %v3329 = vpop.f32.mrb[0].mxu0
    %3330 = vmatprep.mubr.f32.mxu0 0.0
    %3331 = vmatmul.mubr.f32.gmra.mrb[0].mxu0 %v1594
    %v3332 = vpop.f32.mrb[0].mxu0
    %v3333 = vadd.f32 0.0, %v3332
    %v3334 = vpop.f32.mrb[0].mxu0
    %3335 = vdwg.mxu0
    %s3336 = scalar_lea.vmem %s4, 256
    %v3337 = vld [vmem:[%s3336] sm:$0xff]
    %v3338 = vld [vmem:[%s3336 + $0x8] sm:$0xff]
    %v3339 = vld [vmem:[%s3336 + $0x10] sm:$0xff]
    %v3340 = vld [vmem:[%s3336 + $0x18] sm:$0xff]
    %v3342 = vsel %vm1787, %v3323, 0
    %v3345 = vsel %vm1787, %v3328, 0
    %v3348 = vsel %vm1787, %v3333, 0
    %3350 = vmatprep.subr.mxu0 0.0
    %3351 = vmatpush1.msra.mxu0 %v3337
    %3352 = vmatprep.subr.mxu0 0.0
    %3353 = vmatpush1.msra.mxu0 %v3338
    %3354 = vmatprep.subr.mxu0 0.0
    %3355 = vmatpush1.msra.mxu0 %v3339
    %3356 = vmatprep.subr.mxu0 0.0
    %3357 = vmatpush1.msra.mxu0 %v3340
    %3358 = vmatprep.subr.mxu0 0.0
    %3359 = vmatpush1.msra.mxu0 0.0
    %3360 = vmatprep.subr.mxu0 0.0
    %3361 = vmatpush1.msra.mxu0 0.0
    %3362 = vmatprep.subr.mxu0 0.0
    %3363 = vmatpush1.msra.mxu0 0.0
    %3364 = vmatprep.subr.mxu0 0.0
    %3365 = vmatpush1.msra.mxu0 0.0
    %3366 = vmatprep.subr.mxu0 0.0
    %3367 = vmatpush1.msra.mxu0 0.0
    %3368 = vmatprep.subr.mxu0 0.0
    %3369 = vmatpush1.msra.mxu0 0.0
    %3370 = vmatprep.subr.mxu0 0.0
    %3371 = vmatpush1.msra.mxu0 0.0
    %3372 = vmatprep.subr.mxu0 0.0
    %3373 = vmatpush1.msra.mxu0 0.0
    %3374 = vmatprep.subr.mxu0 0.0
    %3375 = vmatpush1.msra.mxu0 0.0
    %3376 = vmatprep.subr.mxu0 0.0
    %3377 = vmatpush1.msra.mxu0 0.0
    %3378 = vmatprep.subr.mxu0 0.0
    %3379 = vmatpush1.msra.mxu0 0.0
    %3380 = vmatprep.subr.mxu0 0.0
    %3381 = vmatpush1.msra.mxu0 0.0
    %3382 = vmatprep.subr.mxu0 0.0
    %3383 = vmatpush1.msra.mxu0 0.0
    %3384 = vmatprep.subr.mxu0 0.0
    %3385 = vmatpush1.msra.mxu0 0.0
    %3386 = vmatprep.subr.mxu0 0.0
    %3387 = vmatpush1.msra.mxu0 0.0
    %3388 = vmatprep.subr.mxu0 0.0
    %3389 = vmatpush1.msra.mxu0 0.0
    %3390 = vmatprep.subr.mxu0 0.0
    %3391 = vmatpush1.msra.mxu0 0.0
    %3392 = vmatprep.subr.mxu0 0.0
    %3393 = vmatpush1.msra.mxu0 0.0
    %3394 = vmatprep.subr.mxu0 0.0
    %3395 = vmatpush1.msra.mxu0 0.0
    %3396 = vmatprep.subr.mxu0 0.0
    %3397 = vmatpush1.msra.mxu0 0.0
    %3398 = vmatprep.subr.mxu0 0.0
    %3399 = vmatpush1.msra.mxu0 0.0
    %3400 = vmatprep.subr.mxu0 0.0
    %3401 = vmatpush1.msra.mxu0 0.0
    %3402 = vmatprep.subr.mxu0 0.0
    %3403 = vmatpush1.msra.mxu0 0.0
    %3404 = vmatprep.subr.mxu0 0.0
    %3405 = vmatpush1.msra.mxu0 0.0
    %3406 = vmatprep.subr.mxu0 0.0
    %3407 = vmatpush1.msra.mxu0 0.0
    %3408 = vmatprep.subr.mxu0 0.0
    %3409 = vmatpush1.msra.mxu0 0.0
    %3410 = vmatprep.subr.mxu0 0.0
    %3411 = vmatpush1.msra.mxu0 0.0
    %3412 = vmatprep.subr.mxu0 0.0
    %3413 = vmatpush1.msra.mxu0 0.0
    %3414 = vmatprep.mubr.f32.mxu0 0.0
    %3415 = vmatmul.mubr.f32.gmra.mrb[0].mxu0 %v3342
    %v3416 = vpop.f32.mrb[0].mxu0
    %v3417 = vadd.f32 0.0, %v3416
    %v3418 = vpop.f32.mrb[0].mxu0
    %3419 = vmatprep.mubr.f32.mxu0 0.0
    %3420 = vmatmul.mubr.f32.gmra.mrb[0].mxu0 %v3345
    %v3421 = vpop.f32.mrb[0].mxu0
    %v3422 = vadd.f32 0.0, %v3421
    %v3423 = vpop.f32.mrb[0].mxu0
    %3424 = vmatprep.mubr.f32.mxu0 0.0
    %3425 = vmatmul.mubr.f32.gmra.mrb[0].mxu0 %v3348
    %v3426 = vpop.f32.mrb[0].mxu0
    %v3427 = vadd.f32 0.0, %v3426
    %v3428 = vpop.f32.mrb[0].mxu0
    %3429 = vdwg.mxu0
    %v3430 = vadd.f32 %v3253, %v3417
    %v3431 = vadd.f32 %v3254, %v3422
    %v3432 = vadd.f32 %v3255, %v3427
    %v3433 = vlaneseq
    %v3434 = vshrl.u32 %v3433, 7
    %v3435 = vsub.s32 0, %v3434
    %v3436 = vrot.slane %v1841, %v3435
    %v3437 = vadd.f32 %v3430, %v3436
    %v3438 = vadd.f32 %v3431, %v3436
    %v3439 = vadd.f32 %v3432, %v3436
    %v3440 = vmax.f32 %v3437, 0.0
    %v3441 = vmax.f32 %v3438, 0.0
    %v3442 = vmax.f32 %v3439, 0.0
    %v3443 = vsel %vm1787, %v3440, 0.0
    %v3444 = vsel %vm1787, %v3441, 0.0
    %v3445 = vadd.f32 %v3443, %v3444
    %v3446 = vsel %vm1791, %v3442, 0.0
    %v3447 = vadd.f32 %v3445, %v3446
    %v3448 = vrot.slane %v3447, 4
    %v3449 = vadd.f32 %v3447, %v3448
    %v3450 = vrot.slane %v3449, 2
    %v3451 = vadd.f32 %v3449, %v3450
    %v3452 = vrot.slane %v3451, 1
    %v3453 = vadd.f32 %v3451, %v3452
    %v3454 = vmul.f32 %v3453, 0.055555556
    %v3455 = vmul.f32 %v3440, %v3440
    %v3456 = vmul.f32 %v3441, %v3441
    %v3457 = vmul.f32 %v3442, %v3442
    %v3458 = vsel %vm1787, %v3455, 0.0
    %v3459 = vsel %vm1787, %v3456, 0.0
    %v3460 = vadd.f32 %v3458, %v3459
    %v3461 = vsel %vm1791, %v3457, 0.0
    %v3462 = vadd.f32 %v3460, %v3461
    %v3463 = vrot.slane %v3462, 4
    %v3464 = vadd.f32 %v3462, %v3463
    %v3465 = vrot.slane %v3464, 2
    %v3466 = vadd.f32 %v3464, %v3465
    %v3467 = vrot.slane %v3466, 1
    %v3468 = vadd.f32 %v3466, %v3467
    %v3469 = vmul.f32 %v3468, 0.055555556
    %v3470 = vmul.f32 %v3454, %v3454
    %v3471 = vsub.f32 %v3469, %v3470
    %v3472 = vmax.f32 %v3471, 0.0
    %v3473 = vsub.f32 %v3440, %v3454
    %v3474 = vsub.f32 %v3441, %v3454
    %v3475 = vsub.f32 %v3442, %v3454
    %v3476 = vadd.f32 %v3472, 1e-05
    %v3477 = vrsqrt.pop %v3476
    %v3478 = vmul.f32 %v3473, %v3477
    %v3479 = vmul.f32 %v3474, %v3477
    %v3480 = vmul.f32 %v3475, %v3477
    %v3481 = vlaneseq
    %v3482 = vshrl.u32 %v3481, 7
    %v3483 = vsub.s32 0, %v3482
    %v3484 = vrot.slane %v1842, %v3483
    %v3485 = vmul.f32 %v3478, %v3484
    %v3486 = vmul.f32 %v3479, %v3484
    %v3487 = vmul.f32 %v3480, %v3484
    %v3488 = vlaneseq
    %v3489 = vshrl.u32 %v3488, 7
    %v3490 = vsub.s32 0, %v3489
    %v3491 = vrot.slane %v1843, %v3490
    %v3492 = vadd.f32 %v3485, %v3491
    %v3493 = vadd.f32 %v3486, %v3491
    %v3494 = vadd.f32 %v3487, %v3491
    %v3495 = vld [vmem:[%s6 + $0x6] sm:$0x1]
    %v3496 = vlaneseq
    %v3497 = vshrl.u32 %v3496, 7
    %v3498 = vsub.s32 0, %v3497
    %v3499 = vrot.slane %v3495, %v3498
    %v3500 = vadd.f32 %v3499, 0.0
    %v3501 = vld [vmem:[%s2] sm:$0x3]
    %v3503 = vsel %vm36, %v3501, 0
    %v3506 = vsel %vm46, %v3494, 0
    %3508 = vmatprep.subr.mxu0 0.0
    %3509 = vmatpush1.msra.mxu0 %v3492
    %3510 = vmatprep.subr.mxu0 0.0
    %3511 = vmatpush1.msra.mxu0 %v3493
    %3512 = vmatprep.subr.mxu0 0.0
    %3513 = vmatpush1.msra.mxu0 %v3506
    %3514 = vmatprep.subr.mxu0 0.0
    %3515 = vmatpush1.msra.mxu0 0.0
    %3516 = vmatprep.subr.mxu0 0.0
    %3517 = vmatpush1.msra.mxu0 0.0
    %3518 = vmatprep.subr.mxu0 0.0
    %3519 = vmatpush1.msra.mxu0 0.0
    %3520 = vmatprep.subr.mxu0 0.0
    %3521 = vmatpush1.msra.mxu0 0.0
    %3522 = vmatprep.subr.mxu0 0.0
    %3523 = vmatpush1.msra.mxu0 0.0
    %3524 = vmatprep.subr.mxu0 0.0
    %3525 = vmatpush1.msra.mxu0 0.0
    %3526 = vmatprep.subr.mxu0 0.0
    %3527 = vmatpush1.msra.mxu0 0.0
    %3528 = vmatprep.subr.mxu0 0.0
    %3529 = vmatpush1.msra.mxu0 0.0
    %3530 = vmatprep.subr.mxu0 0.0
    %3531 = vmatpush1.msra.mxu0 0.0
    %3532 = vmatprep.subr.mxu0 0.0
    %3533 = vmatpush1.msra.mxu0 0.0
    %3534 = vmatprep.subr.mxu0 0.0
    %3535 = vmatpush1.msra.mxu0 0.0
    %3536 = vmatprep.subr.mxu0 0.0
    %3537 = vmatpush1.msra.mxu0 0.0
    %3538 = vmatprep.subr.mxu0 0.0
    %3539 = vmatpush1.msra.mxu0 0.0
    %3540 = vmatprep.subr.mxu0 0.0
    %3541 = vmatpush1.msra.mxu0 0.0
    %3542 = vmatprep.subr.mxu0 0.0
    %3543 = vmatpush1.msra.mxu0 0.0
    %3544 = vmatprep.subr.mxu0 0.0
    %3545 = vmatpush1.msra.mxu0 0.0
    %3546 = vmatprep.subr.mxu0 0.0
    %3547 = vmatpush1.msra.mxu0 0.0
    %3548 = vmatprep.subr.mxu0 0.0
    %3549 = vmatpush1.msra.mxu0 0.0
    %3550 = vmatprep.subr.mxu0 0.0
    %3551 = vmatpush1.msra.mxu0 0.0
    %3552 = vmatprep.subr.mxu0 0.0
    %3553 = vmatpush1.msra.mxu0 0.0
    %3554 = vmatprep.subr.mxu0 0.0
    %3555 = vmatpush1.msra.mxu0 0.0
    %3556 = vmatprep.subr.mxu0 0.0
    %3557 = vmatpush1.msra.mxu0 0.0
    %3558 = vmatprep.subr.mxu0 0.0
    %3559 = vmatpush1.msra.mxu0 0.0
    %3560 = vmatprep.subr.mxu0 0.0
    %3561 = vmatpush1.msra.mxu0 0.0
    %3562 = vmatprep.subr.mxu0 0.0
    %3563 = vmatpush1.msra.mxu0 0.0
    %3564 = vmatprep.subr.mxu0 0.0
    %3565 = vmatpush1.msra.mxu0 0.0
    %3566 = vmatprep.subr.mxu0 0.0
    %3567 = vmatpush1.msra.mxu0 0.0
    %3568 = vmatprep.subr.mxu0 0.0
    %3569 = vmatpush1.msra.mxu0 0.0
    %3570 = vmatprep.subr.mxu0 0.0
    %3571 = vmatpush1.msra.mxu0 0.0
    %3572 = vmatprep.mubr.f32.mxu0 0.0
    %3573 = vmatmul.mubr.f32.gmra.mrb[0].mxu0 %v3503
    %v3574 = vpop.f32.mrb[0].mxu0
    %v3575 = vadd.f32 0.0, %v3574
    %v3576 = vpop.f32.mrb[0].mxu0
    %3577 = vdwg.mxu0
    %v3578 = vld [vmem:[%s5] sm:$0xff]
    %v3579 = vld [vmem:[%s5 + $0x8] sm:$0xff]
    %v3580 = vld [vmem:[%s5 + $0x10] sm:$0xff]
    %v3581 = vld [vmem:[%s5 + $0x18] sm:$0xff]
    %v3583 = vsel %vm1787, %v3575, 0
    %3585 = vmatprep.subr.mxu0 0.0
    %3586 = vmatpush1.msra.mxu0 %v3578
    %3587 = vmatprep.subr.mxu0 0.0
    %3588 = vmatpush1.msra.mxu0 %v3579
    %3589 = vmatprep.subr.mxu0 0.0
    %3590 = vmatpush1.msra.mxu0 %v3580
    %3591 = vmatprep.subr.mxu0 0.0
    %3592 = vmatpush1.msra.mxu0 %v3581
    %3593 = vmatprep.subr.mxu0 0.0
    %3594 = vmatpush1.msra.mxu0 0.0
    %3595 = vmatprep.subr.mxu0 0.0
    %3596 = vmatpush1.msra.mxu0 0.0
    %3597 = vmatprep.subr.mxu0 0.0
    %3598 = vmatpush1.msra.mxu0 0.0
    %3599 = vmatprep.subr.mxu0 0.0
    %3600 = vmatpush1.msra.mxu0 0.0
    %3601 = vmatprep.subr.mxu0 0.0
    %3602 = vmatpush1.msra.mxu0 0.0
    %3603 = vmatprep.subr.mxu0 0.0
    %3604 = vmatpush1.msra.mxu0 0.0
    %3605 = vmatprep.subr.mxu0 0.0
    %3606 = vmatpush1.msra.mxu0 0.0
    %3607 = vmatprep.subr.mxu0 0.0
    %3608 = vmatpush1.msra.mxu0 0.0
    %3609 = vmatprep.subr.mxu0 0.0
    %3610 = vmatpush1.msra.mxu0 0.0
    %3611 = vmatprep.subr.mxu0 0.0
    %3612 = vmatpush1.msra.mxu0 0.0
    %3613 = vmatprep.subr.mxu0 0.0
    %3614 = vmatpush1.msra.mxu0 0.0
    %3615 = vmatprep.subr.mxu0 0.0
    %3616 = vmatpush1.msra.mxu0 0.0
    %3617 = vmatprep.subr.mxu0 0.0
    %3618 = vmatpush1.msra.mxu0 0.0
    %3619 = vmatprep.subr.mxu0 0.0
    %3620 = vmatpush1.msra.mxu0 0.0
    %3621 = vmatprep.subr.mxu0 0.0
    %3622 = vmatpush1.msra.mxu0 0.0
    %3623 = vmatprep.subr.mxu0 0.0
    %3624 = vmatpush1.msra.mxu0 0.0
    %3625 = vmatprep.subr.mxu0 0.0
    %3626 = vmatpush1.msra.mxu0 0.0
    %3627 = vmatprep.subr.mxu0 0.0
    %3628 = vmatpush1.msra.mxu0 0.0
    %3629 = vmatprep.subr.mxu0 0.0
    %3630 = vmatpush1.msra.mxu0 0.0
    %3631 = vmatprep.subr.mxu0 0.0
    %3632 = vmatpush1.msra.mxu0 0.0
    %3633 = vmatprep.subr.mxu0 0.0
    %3634 = vmatpush1.msra.mxu0 0.0
    %3635 = vmatprep.subr.mxu0 0.0
    %3636 = vmatpush1.msra.mxu0 0.0
    %3637 = vmatprep.subr.mxu0 0.0
    %3638 = vmatpush1.msra.mxu0 0.0
    %3639 = vmatprep.subr.mxu0 0.0
    %3640 = vmatpush1.msra.mxu0 0.0
    %3641 = vmatprep.subr.mxu0 0.0
    %3642 = vmatpush1.msra.mxu0 0.0
    %3643 = vmatprep.subr.mxu0 0.0
    %3644 = vmatpush1.msra.mxu0 0.0
    %3645 = vmatprep.subr.mxu0 0.0
    %3646 = vmatpush1.msra.mxu0 0.0
    %3647 = vmatprep.subr.mxu0 0.0
    %3648 = vmatpush1.msra.mxu0 0.0
    %3649 = vmatprep.mubr.f32.mxu0 0.0
    %3650 = vmatmul.mubr.f32.gmra.mrb[0].mxu0 %v3583
    %v3651 = vpop.f32.mrb[0].mxu0
    %v3652 = vadd.f32 0.0, %v3651
    %v3653 = vpop.f32.mrb[0].mxu0
    %3654 = vdwg.mxu0
    %v3655 = vadd.f32 %v3500, %v3652
    %s3656 = scalar_lea.vmem %s2, 2
    %v3657 = vld [vmem:[%s3656] sm:$0x3]
    %v3659 = vsel %vm36, %v3657, 0
    %3661 = vmatprep.subr.mxu0 0.0
    %3662 = vmatpush1.msra.mxu0 %v3492
    %3663 = vmatprep.subr.mxu0 0.0
    %3664 = vmatpush1.msra.mxu0 %v3493
    %3665 = vmatprep.subr.mxu0 0.0
    %3666 = vmatpush1.msra.mxu0 %v3506
    %3667 = vmatprep.subr.mxu0 0.0
    %3668 = vmatpush1.msra.mxu0 0.0
    %3669 = vmatprep.subr.mxu0 0.0
    %3670 = vmatpush1.msra.mxu0 0.0
    %3671 = vmatprep.subr.mxu0 0.0
    %3672 = vmatpush1.msra.mxu0 0.0
    %3673 = vmatprep.subr.mxu0 0.0
    %3674 = vmatpush1.msra.mxu0 0.0
    %3675 = vmatprep.subr.mxu0 0.0
    %3676 = vmatpush1.msra.mxu0 0.0
    %3677 = vmatprep.subr.mxu0 0.0
    %3678 = vmatpush1.msra.mxu0 0.0
    %3679 = vmatprep.subr.mxu0 0.0
    %3680 = vmatpush1.msra.mxu0 0.0
    %3681 = vmatprep.subr.mxu0 0.0
    %3682 = vmatpush1.msra.mxu0 0.0
    %3683 = vmatprep.subr.mxu0 0.0
    %3684 = vmatpush1.msra.mxu0 0.0
    %3685 = vmatprep.subr.mxu0 0.0
    %3686 = vmatpush1.msra.mxu0 0.0
    %3687 = vmatprep.subr.mxu0 0.0
    %3688 = vmatpush1.msra.mxu0 0.0
    %3689 = vmatprep.subr.mxu0 0.0
    %3690 = vmatpush1.msra.mxu0 0.0
    %3691 = vmatprep.subr.mxu0 0.0
    %3692 = vmatpush1.msra.mxu0 0.0
    %3693 = vmatprep.subr.mxu0 0.0
    %3694 = vmatpush1.msra.mxu0 0.0
    %3695 = vmatprep.subr.mxu0 0.0
    %3696 = vmatpush1.msra.mxu0 0.0
    %3697 = vmatprep.subr.mxu0 0.0
    %3698 = vmatpush1.msra.mxu0 0.0
    %3699 = vmatprep.subr.mxu0 0.0
    %3700 = vmatpush1.msra.mxu0 0.0
    %3701 = vmatprep.subr.mxu0 0.0
    %3702 = vmatpush1.msra.mxu0 0.0
    %3703 = vmatprep.subr.mxu0 0.0
    %3704 = vmatpush1.msra.mxu0 0.0
    %3705 = vmatprep.subr.mxu0 0.0
    %3706 = vmatpush1.msra.mxu0 0.0
    %3707 = vmatprep.subr.mxu0 0.0
    %3708 = vmatpush1.msra.mxu0 0.0
    %3709 = vmatprep.subr.mxu0 0.0
    %3710 = vmatpush1.msra.mxu0 0.0
    %3711 = vmatprep.subr.mxu0 0.0
    %3712 = vmatpush1.msra.mxu0 0.0
    %3713 = vmatprep.subr.mxu0 0.0
    %3714 = vmatpush1.msra.mxu0 0.0
    %3715 = vmatprep.subr.mxu0 0.0
    %3716 = vmatpush1.msra.mxu0 0.0
    %3717 = vmatprep.subr.mxu0 0.0
    %3718 = vmatpush1.msra.mxu0 0.0
    %3719 = vmatprep.subr.mxu0 0.0
    %3720 = vmatpush1.msra.mxu0 0.0
    %3721 = vmatprep.subr.mxu0 0.0
    %3722 = vmatpush1.msra.mxu0 0.0
    %3723 = vmatprep.subr.mxu0 0.0
    %3724 = vmatpush1.msra.mxu0 0.0
    %3725 = vmatprep.mubr.f32.mxu0 0.0
    %3726 = vmatmul.mubr.f32.gmra.mrb[0].mxu0 %v3659
    %v3727 = vpop.f32.mrb[0].mxu0
    %v3728 = vadd.f32 0.0, %v3727
    %v3729 = vpop.f32.mrb[0].mxu0
    %3730 = vdwg.mxu0
    %s3731 = scalar_lea.vmem %s5, 32
    %v3732 = vld [vmem:[%s3731] sm:$0xff]
    %v3733 = vld [vmem:[%s3731 + $0x8] sm:$0xff]
    %v3734 = vld [vmem:[%s3731 + $0x10] sm:$0xff]
    %v3735 = vld [vmem:[%s3731 + $0x18] sm:$0xff]
    %v3737 = vsel %vm1787, %v3728, 0
    %3739 = vmatprep.subr.mxu0 0.0
    %3740 = vmatpush1.msra.mxu0 %v3732
    %3741 = vmatprep.subr.mxu0 0.0
    %3742 = vmatpush1.msra.mxu0 %v3733
    %3743 = vmatprep.subr.mxu0 0.0
    %3744 = vmatpush1.msra.mxu0 %v3734
    %3745 = vmatprep.subr.mxu0 0.0
    %3746 = vmatpush1.msra.mxu0 %v3735
    %3747 = vmatprep.subr.mxu0 0.0
    %3748 = vmatpush1.msra.mxu0 0.0
    %3749 = vmatprep.subr.mxu0 0.0
    %3750 = vmatpush1.msra.mxu0 0.0
    %3751 = vmatprep.subr.mxu0 0.0
    %3752 = vmatpush1.msra.mxu0 0.0
    %3753 = vmatprep.subr.mxu0 0.0
    %3754 = vmatpush1.msra.mxu0 0.0
    %3755 = vmatprep.subr.mxu0 0.0
    %3756 = vmatpush1.msra.mxu0 0.0
    %3757 = vmatprep.subr.mxu0 0.0
    %3758 = vmatpush1.msra.mxu0 0.0
    %3759 = vmatprep.subr.mxu0 0.0
    %3760 = vmatpush1.msra.mxu0 0.0
    %3761 = vmatprep.subr.mxu0 0.0
    %3762 = vmatpush1.msra.mxu0 0.0
    %3763 = vmatprep.subr.mxu0 0.0
    %3764 = vmatpush1.msra.mxu0 0.0
    %3765 = vmatprep.subr.mxu0 0.0
    %3766 = vmatpush1.msra.mxu0 0.0
    %3767 = vmatprep.subr.mxu0 0.0
    %3768 = vmatpush1.msra.mxu0 0.0
    %3769 = vmatprep.subr.mxu0 0.0
    %3770 = vmatpush1.msra.mxu0 0.0
    %3771 = vmatprep.subr.mxu0 0.0
    %3772 = vmatpush1.msra.mxu0 0.0
    %3773 = vmatprep.subr.mxu0 0.0
    %3774 = vmatpush1.msra.mxu0 0.0
    %3775 = vmatprep.subr.mxu0 0.0
    %3776 = vmatpush1.msra.mxu0 0.0
    %3777 = vmatprep.subr.mxu0 0.0
    %3778 = vmatpush1.msra.mxu0 0.0
    %3779 = vmatprep.subr.mxu0 0.0
    %3780 = vmatpush1.msra.mxu0 0.0
    %3781 = vmatprep.subr.mxu0 0.0
    %3782 = vmatpush1.msra.mxu0 0.0
    %3783 = vmatprep.subr.mxu0 0.0
    %3784 = vmatpush1.msra.mxu0 0.0
    %3785 = vmatprep.subr.mxu0 0.0
    %3786 = vmatpush1.msra.mxu0 0.0
    %3787 = vmatprep.subr.mxu0 0.0
    %3788 = vmatpush1.msra.mxu0 0.0
    %3789 = vmatprep.subr.mxu0 0.0
    %3790 = vmatpush1.msra.mxu0 0.0
    %3791 = vmatprep.subr.mxu0 0.0
    %3792 = vmatpush1.msra.mxu0 0.0
    %3793 = vmatprep.subr.mxu0 0.0
    %3794 = vmatpush1.msra.mxu0 0.0
    %3795 = vmatprep.subr.mxu0 0.0
    %3796 = vmatpush1.msra.mxu0 0.0
    %3797 = vmatprep.subr.mxu0 0.0
    %3798 = vmatpush1.msra.mxu0 0.0
    %3799 = vmatprep.subr.mxu0 0.0
    %3800 = vmatpush1.msra.mxu0 0.0
    %3801 = vmatprep.subr.mxu0 0.0
    %3802 = vmatpush1.msra.mxu0 0.0
    %3803 = vmatprep.mubr.f32.mxu0 0.0
    %3804 = vmatmul.mubr.f32.gmra.mrb[0].mxu0 %v3737
    %v3805 = vpop.f32.mrb[0].mxu0
    %v3806 = vadd.f32 0.0, %v3805
    %v3807 = vpop.f32.mrb[0].mxu0
    %3808 = vdwg.mxu0
    %v3809 = vadd.f32 %v3655, %v3806
    %s3810 = scalar_lea.vmem %s2, 4
    %v3811 = vld [vmem:[%s3810] sm:$0x3]
    %v3813 = vsel %vm36, %v3811, 0
    %3815 = vmatprep.subr.mxu0 0.0
    %3816 = vmatpush1.msra.mxu0 %v3492
    %3817 = vmatprep.subr.mxu0 0.0
    %3818 = vmatpush1.msra.mxu0 %v3493
    %3819 = vmatprep.subr.mxu0 0.0
    %3820 = vmatpush1.msra.mxu0 %v3506
    %3821 = vmatprep.subr.mxu0 0.0
    %3822 = vmatpush1.msra.mxu0 0.0
    %3823 = vmatprep.subr.mxu0 0.0
    %3824 = vmatpush1.msra.mxu0 0.0
    %3825 = vmatprep.subr.mxu0 0.0
    %3826 = vmatpush1.msra.mxu0 0.0
    %3827 = vmatprep.subr.mxu0 0.0
    %3828 = vmatpush1.msra.mxu0 0.0
    %3829 = vmatprep.subr.mxu0 0.0
    %3830 = vmatpush1.msra.mxu0 0.0
    %3831 = vmatprep.subr.mxu0 0.0
    %3832 = vmatpush1.msra.mxu0 0.0
    %3833 = vmatprep.subr.mxu0 0.0
    %3834 = vmatpush1.msra.mxu0 0.0
    %3835 = vmatprep.subr.mxu0 0.0
    %3836 = vmatpush1.msra.mxu0 0.0
    %3837 = vmatprep.subr.mxu0 0.0
    %3838 = vmatpush1.msra.mxu0 0.0
    %3839 = vmatprep.subr.mxu0 0.0
    %3840 = vmatpush1.msra.mxu0 0.0
    %3841 = vmatprep.subr.mxu0 0.0
    %3842 = vmatpush1.msra.mxu0 0.0
    %3843 = vmatprep.subr.mxu0 0.0
    %3844 = vmatpush1.msra.mxu0 0.0
    %3845 = vmatprep.subr.mxu0 0.0
    %3846 = vmatpush1.msra.mxu0 0.0
    %3847 = vmatprep.subr.mxu0 0.0
    %3848 = vmatpush1.msra.mxu0 0.0
    %3849 = vmatprep.subr.mxu0 0.0
    %3850 = vmatpush1.msra.mxu0 0.0
    %3851 = vmatprep.subr.mxu0 0.0
    %3852 = vmatpush1.msra.mxu0 0.0
    %3853 = vmatprep.subr.mxu0 0.0
    %3854 = vmatpush1.msra.mxu0 0.0
    %3855 = vmatprep.subr.mxu0 0.0
    %3856 = vmatpush1.msra.mxu0 0.0
    %3857 = vmatprep.subr.mxu0 0.0
    %3858 = vmatpush1.msra.mxu0 0.0
    %3859 = vmatprep.subr.mxu0 0.0
    %3860 = vmatpush1.msra.mxu0 0.0
    %3861 = vmatprep.subr.mxu0 0.0
    %3862 = vmatpush1.msra.mxu0 0.0
    %3863 = vmatprep.subr.mxu0 0.0
    %3864 = vmatpush1.msra.mxu0 0.0
    %3865 = vmatprep.subr.mxu0 0.0
    %3866 = vmatpush1.msra.mxu0 0.0
    %3867 = vmatprep.subr.mxu0 0.0
    %3868 = vmatpush1.msra.mxu0 0.0
    %3869 = vmatprep.subr.mxu0 0.0
    %3870 = vmatpush1.msra.mxu0 0.0
    %3871 = vmatprep.subr.mxu0 0.0
    %3872 = vmatpush1.msra.mxu0 0.0
    %3873 = vmatprep.subr.mxu0 0.0
    %3874 = vmatpush1.msra.mxu0 0.0
    %3875 = vmatprep.subr.mxu0 0.0
    %3876 = vmatpush1.msra.mxu0 0.0
    %3877 = vmatprep.subr.mxu0 0.0
    %3878 = vmatpush1.msra.mxu0 0.0
    %3879 = vmatprep.mubr.f32.mxu0 0.0
    %3880 = vmatmul.mubr.f32.gmra.mrb[0].mxu0 %v3813
    %v3881 = vpop.f32.mrb[0].mxu0
    %v3882 = vadd.f32 0.0, %v3881
    %v3883 = vpop.f32.mrb[0].mxu0
    %3884 = vdwg.mxu0
    %s3885 = scalar_lea.vmem %s5, 64
    %v3886 = vld [vmem:[%s3885] sm:$0xff]
    %v3887 = vld [vmem:[%s3885 + $0x8] sm:$0xff]
    %v3888 = vld [vmem:[%s3885 + $0x10] sm:$0xff]
    %v3889 = vld [vmem:[%s3885 + $0x18] sm:$0xff]
    %v3891 = vsel %vm1787, %v3882, 0
    %3893 = vmatprep.subr.mxu0 0.0
    %3894 = vmatpush1.msra.mxu0 %v3886
    %3895 = vmatprep.subr.mxu0 0.0
    %3896 = vmatpush1.msra.mxu0 %v3887
    %3897 = vmatprep.subr.mxu0 0.0
    %3898 = vmatpush1.msra.mxu0 %v3888
    %3899 = vmatprep.subr.mxu0 0.0
    %3900 = vmatpush1.msra.mxu0 %v3889
    %3901 = vmatprep.subr.mxu0 0.0
    %3902 = vmatpush1.msra.mxu0 0.0
    %3903 = vmatprep.subr.mxu0 0.0
    %3904 = vmatpush1.msra.mxu0 0.0
    %3905 = vmatprep.subr.mxu0 0.0
    %3906 = vmatpush1.msra.mxu0 0.0
    %3907 = vmatprep.subr.mxu0 0.0
    %3908 = vmatpush1.msra.mxu0 0.0
    %3909 = vmatprep.subr.mxu0 0.0
    %3910 = vmatpush1.msra.mxu0 0.0
    %3911 = vmatprep.subr.mxu0 0.0
    %3912 = vmatpush1.msra.mxu0 0.0
    %3913 = vmatprep.subr.mxu0 0.0
    %3914 = vmatpush1.msra.mxu0 0.0
    %3915 = vmatprep.subr.mxu0 0.0
    %3916 = vmatpush1.msra.mxu0 0.0
    %3917 = vmatprep.subr.mxu0 0.0
    %3918 = vmatpush1.msra.mxu0 0.0
    %3919 = vmatprep.subr.mxu0 0.0
    %3920 = vmatpush1.msra.mxu0 0.0
    %3921 = vmatprep.subr.mxu0 0.0
    %3922 = vmatpush1.msra.mxu0 0.0
    %3923 = vmatprep.subr.mxu0 0.0
    %3924 = vmatpush1.msra.mxu0 0.0
    %3925 = vmatprep.subr.mxu0 0.0
    %3926 = vmatpush1.msra.mxu0 0.0
    %3927 = vmatprep.subr.mxu0 0.0
    %3928 = vmatpush1.msra.mxu0 0.0
    %3929 = vmatprep.subr.mxu0 0.0
    %3930 = vmatpush1.msra.mxu0 0.0
    %3931 = vmatprep.subr.mxu0 0.0
    %3932 = vmatpush1.msra.mxu0 0.0
    %3933 = vmatprep.subr.mxu0 0.0
    %3934 = vmatpush1.msra.mxu0 0.0
    %3935 = vmatprep.subr.mxu0 0.0
    %3936 = vmatpush1.msra.mxu0 0.0
    %3937 = vmatprep.subr.mxu0 0.0
    %3938 = vmatpush1.msra.mxu0 0.0
    %3939 = vmatprep.subr.mxu0 0.0
    %3940 = vmatpush1.msra.mxu0 0.0
    %3941 = vmatprep.subr.mxu0 0.0
    %3942 = vmatpush1.msra.mxu0 0.0
    %3943 = vmatprep.subr.mxu0 0.0
    %3944 = vmatpush1.msra.mxu0 0.0
    %3945 = vmatprep.subr.mxu0 0.0
    %3946 = vmatpush1.msra.mxu0 0.0
    %3947 = vmatprep.subr.mxu0 0.0
    %3948 = vmatpush1.msra.mxu0 0.0
    %3949 = vmatprep.subr.mxu0 0.0
    %3950 = vmatpush1.msra.mxu0 0.0
    %3951 = vmatprep.subr.mxu0 0.0
    %3952 = vmatpush1.msra.mxu0 0.0
    %3953 = vmatprep.subr.mxu0 0.0
    %3954 = vmatpush1.msra.mxu0 0.0
    %3955 = vmatprep.subr.mxu0 0.0
    %3956 = vmatpush1.msra.mxu0 0.0
    %3957 = vmatprep.mubr.f32.mxu0 0.0
    %3958 = vmatmul.mubr.f32.gmra.mrb[0].mxu0 %v3891
    %v3959 = vpop.f32.mrb[0].mxu0
    %v3960 = vadd.f32 0.0, %v3959
    %v3961 = vpop.f32.mrb[0].mxu0
    %3962 = vdwg.mxu0
    %v3963 = vadd.f32 %v3809, %v3960
    %s3964 = scalar_lea.vmem %s2, 6
    %v3965 = vld [vmem:[%s3964] sm:$0x3]
    %v3967 = vsel %vm36, %v3965, 0
    %3969 = vmatprep.subr.mxu0 0.0
    %3970 = vmatpush1.msra.mxu0 %v3492
    %3971 = vmatprep.subr.mxu0 0.0
    %3972 = vmatpush1.msra.mxu0 %v3493
    %3973 = vmatprep.subr.mxu0 0.0
    %3974 = vmatpush1.msra.mxu0 %v3506
    %3975 = vmatprep.subr.mxu0 0.0
    %3976 = vmatpush1.msra.mxu0 0.0
    %3977 = vmatprep.subr.mxu0 0.0
    %3978 = vmatpush1.msra.mxu0 0.0
    %3979 = vmatprep.subr.mxu0 0.0
    %3980 = vmatpush1.msra.mxu0 0.0
    %3981 = vmatprep.subr.mxu0 0.0
    %3982 = vmatpush1.msra.mxu0 0.0
    %3983 = vmatprep.subr.mxu0 0.0
    %3984 = vmatpush1.msra.mxu0 0.0
    %3985 = vmatprep.subr.mxu0 0.0
    %3986 = vmatpush1.msra.mxu0 0.0
    %3987 = vmatprep.subr.mxu0 0.0
    %3988 = vmatpush1.msra.mxu0 0.0
    %3989 = vmatprep.subr.mxu0 0.0
    %3990 = vmatpush1.msra.mxu0 0.0
    %3991 = vmatprep.subr.mxu0 0.0
    %3992 = vmatpush1.msra.mxu0 0.0
    %3993 = vmatprep.subr.mxu0 0.0
    %3994 = vmatpush1.msra.mxu0 0.0
    %3995 = vmatprep.subr.mxu0 0.0
    %3996 = vmatpush1.msra.mxu0 0.0
    %3997 = vmatprep.subr.mxu0 0.0
    %3998 = vmatpush1.msra.mxu0 0.0
    %3999 = vmatprep.subr.mxu0 0.0
    %4000 = vmatpush1.msra.mxu0 0.0
    %4001 = vmatprep.subr.mxu0 0.0
    %4002 = vmatpush1.msra.mxu0 0.0
    %4003 = vmatprep.subr.mxu0 0.0
    %4004 = vmatpush1.msra.mxu0 0.0
    %4005 = vmatprep.subr.mxu0 0.0
    %4006 = vmatpush1.msra.mxu0 0.0
    %4007 = vmatprep.subr.mxu0 0.0
    %4008 = vmatpush1.msra.mxu0 0.0
    %4009 = vmatprep.subr.mxu0 0.0
    %4010 = vmatpush1.msra.mxu0 0.0
    %4011 = vmatprep.subr.mxu0 0.0
    %4012 = vmatpush1.msra.mxu0 0.0
    %4013 = vmatprep.subr.mxu0 0.0
    %4014 = vmatpush1.msra.mxu0 0.0
    %4015 = vmatprep.subr.mxu0 0.0
    %4016 = vmatpush1.msra.mxu0 0.0
    %4017 = vmatprep.subr.mxu0 0.0
    %4018 = vmatpush1.msra.mxu0 0.0
    %4019 = vmatprep.subr.mxu0 0.0
    %4020 = vmatpush1.msra.mxu0 0.0
    %4021 = vmatprep.subr.mxu0 0.0
    %4022 = vmatpush1.msra.mxu0 0.0
    %4023 = vmatprep.subr.mxu0 0.0
    %4024 = vmatpush1.msra.mxu0 0.0
    %4025 = vmatprep.subr.mxu0 0.0
    %4026 = vmatpush1.msra.mxu0 0.0
    %4027 = vmatprep.subr.mxu0 0.0
    %4028 = vmatpush1.msra.mxu0 0.0
    %4029 = vmatprep.subr.mxu0 0.0
    %4030 = vmatpush1.msra.mxu0 0.0
    %4031 = vmatprep.subr.mxu0 0.0
    %4032 = vmatpush1.msra.mxu0 0.0
    %4033 = vmatprep.mubr.f32.mxu0 0.0
    %4034 = vmatmul.mubr.f32.gmra.mrb[0].mxu0 %v3967
    %v4035 = vpop.f32.mrb[0].mxu0
    %v4036 = vadd.f32 0.0, %v4035
    %v4037 = vpop.f32.mrb[0].mxu0
    %4038 = vdwg.mxu0
    %s4039 = scalar_lea.vmem %s5, 96
    %v4040 = vld [vmem:[%s4039] sm:$0xff]
    %v4041 = vld [vmem:[%s4039 + $0x8] sm:$0xff]
    %v4042 = vld [vmem:[%s4039 + $0x10] sm:$0xff]
    %v4043 = vld [vmem:[%s4039 + $0x18] sm:$0xff]
    %v4045 = vsel %vm1787, %v4036, 0
    %4047 = vmatprep.subr.mxu0 0.0
    %4048 = vmatpush1.msra.mxu0 %v4040
    %4049 = vmatprep.subr.mxu0 0.0
    %4050 = vmatpush1.msra.mxu0 %v4041
    %4051 = vmatprep.subr.mxu0 0.0
    %4052 = vmatpush1.msra.mxu0 %v4042
    %4053 = vmatprep.subr.mxu0 0.0
    %4054 = vmatpush1.msra.mxu0 %v4043
    %4055 = vmatprep.subr.mxu0 0.0
    %4056 = vmatpush1.msra.mxu0 0.0
    %4057 = vmatprep.subr.mxu0 0.0
    %4058 = vmatpush1.msra.mxu0 0.0
    %4059 = vmatprep.subr.mxu0 0.0
    %4060 = vmatpush1.msra.mxu0 0.0
    %4061 = vmatprep.subr.mxu0 0.0
    %4062 = vmatpush1.msra.mxu0 0.0
    %4063 = vmatprep.subr.mxu0 0.0
    %4064 = vmatpush1.msra.mxu0 0.0
    %4065 = vmatprep.subr.mxu0 0.0
    %4066 = vmatpush1.msra.mxu0 0.0
    %4067 = vmatprep.subr.mxu0 0.0
    %4068 = vmatpush1.msra.mxu0 0.0
    %4069 = vmatprep.subr.mxu0 0.0
    %4070 = vmatpush1.msra.mxu0 0.0
    %4071 = vmatprep.subr.mxu0 0.0
    %4072 = vmatpush1.msra.mxu0 0.0
    %4073 = vmatprep.subr.mxu0 0.0
    %4074 = vmatpush1.msra.mxu0 0.0
    %4075 = vmatprep.subr.mxu0 0.0
    %4076 = vmatpush1.msra.mxu0 0.0
    %4077 = vmatprep.subr.mxu0 0.0
    %4078 = vmatpush1.msra.mxu0 0.0
    %4079 = vmatprep.subr.mxu0 0.0
    %4080 = vmatpush1.msra.mxu0 0.0
    %4081 = vmatprep.subr.mxu0 0.0
    %4082 = vmatpush1.msra.mxu0 0.0
    %4083 = vmatprep.subr.mxu0 0.0
    %4084 = vmatpush1.msra.mxu0 0.0
    %4085 = vmatprep.subr.mxu0 0.0
    %4086 = vmatpush1.msra.mxu0 0.0
    %4087 = vmatprep.subr.mxu0 0.0
    %4088 = vmatpush1.msra.mxu0 0.0
    %4089 = vmatprep.subr.mxu0 0.0
    %4090 = vmatpush1.msra.mxu0 0.0
    %4091 = vmatprep.subr.mxu0 0.0
    %4092 = vmatpush1.msra.mxu0 0.0
    %4093 = vmatprep.subr.mxu0 0.0
    %4094 = vmatpush1.msra.mxu0 0.0
    %4095 = vmatprep.subr.mxu0 0.0
    %4096 = vmatpush1.msra.mxu0 0.0
    %4097 = vmatprep.subr.mxu0 0.0
    %4098 = vmatpush1.msra.mxu0 0.0
    %4099 = vmatprep.subr.mxu0 0.0
    %4100 = vmatpush1.msra.mxu0 0.0
    %4101 = vmatprep.subr.mxu0 0.0
    %4102 = vmatpush1.msra.mxu0 0.0
    %4103 = vmatprep.subr.mxu0 0.0
    %4104 = vmatpush1.msra.mxu0 0.0
    %4105 = vmatprep.subr.mxu0 0.0
    %4106 = vmatpush1.msra.mxu0 0.0
    %4107 = vmatprep.subr.mxu0 0.0
    %4108 = vmatpush1.msra.mxu0 0.0
    %4109 = vmatprep.subr.mxu0 0.0
    %4110 = vmatpush1.msra.mxu0 0.0
    %4111 = vmatprep.mubr.f32.mxu0 0.0
    %4112 = vmatmul.mubr.f32.gmra.mrb[0].mxu0 %v4045
    %v4113 = vpop.f32.mrb[0].mxu0
    %v4114 = vadd.f32 0.0, %v4113
    %v4115 = vpop.f32.mrb[0].mxu0
    %4116 = vdwg.mxu0
    %v4117 = vadd.f32 %v3963, %v4114
    %s4118 = scalar_lea.vmem %s2, 8
    %v4119 = vld [vmem:[%s4118] sm:$0x3]
    %v4121 = vsel %vm36, %v4119, 0
    %4123 = vmatprep.subr.mxu0 0.0
    %4124 = vmatpush1.msra.mxu0 %v3492
    %4125 = vmatprep.subr.mxu0 0.0
    %4126 = vmatpush1.msra.mxu0 %v3493
    %4127 = vmatprep.subr.mxu0 0.0
    %4128 = vmatpush1.msra.mxu0 %v3506
    %4129 = vmatprep.subr.mxu0 0.0
    %4130 = vmatpush1.msra.mxu0 0.0
    %4131 = vmatprep.subr.mxu0 0.0
    %4132 = vmatpush1.msra.mxu0 0.0
    %4133 = vmatprep.subr.mxu0 0.0
    %4134 = vmatpush1.msra.mxu0 0.0
    %4135 = vmatprep.subr.mxu0 0.0
    %4136 = vmatpush1.msra.mxu0 0.0
    %4137 = vmatprep.subr.mxu0 0.0
    %4138 = vmatpush1.msra.mxu0 0.0
    %4139 = vmatprep.subr.mxu0 0.0
    %4140 = vmatpush1.msra.mxu0 0.0
    %4141 = vmatprep.subr.mxu0 0.0
    %4142 = vmatpush1.msra.mxu0 0.0
    %4143 = vmatprep.subr.mxu0 0.0
    %4144 = vmatpush1.msra.mxu0 0.0
    %4145 = vmatprep.subr.mxu0 0.0
    %4146 = vmatpush1.msra.mxu0 0.0
    %4147 = vmatprep.subr.mxu0 0.0
    %4148 = vmatpush1.msra.mxu0 0.0
    %4149 = vmatprep.subr.mxu0 0.0
    %4150 = vmatpush1.msra.mxu0 0.0
    %4151 = vmatprep.subr.mxu0 0.0
    %4152 = vmatpush1.msra.mxu0 0.0
    %4153 = vmatprep.subr.mxu0 0.0
    %4154 = vmatpush1.msra.mxu0 0.0
    %4155 = vmatprep.subr.mxu0 0.0
    %4156 = vmatpush1.msra.mxu0 0.0
    %4157 = vmatprep.subr.mxu0 0.0
    %4158 = vmatpush1.msra.mxu0 0.0
    %4159 = vmatprep.subr.mxu0 0.0
    %4160 = vmatpush1.msra.mxu0 0.0
    %4161 = vmatprep.subr.mxu0 0.0
    %4162 = vmatpush1.msra.mxu0 0.0
    %4163 = vmatprep.subr.mxu0 0.0
    %4164 = vmatpush1.msra.mxu0 0.0
    %4165 = vmatprep.subr.mxu0 0.0
    %4166 = vmatpush1.msra.mxu0 0.0
    %4167 = vmatprep.subr.mxu0 0.0
    %4168 = vmatpush1.msra.mxu0 0.0
    %4169 = vmatprep.subr.mxu0 0.0
    %4170 = vmatpush1.msra.mxu0 0.0
    %4171 = vmatprep.subr.mxu0 0.0
    %4172 = vmatpush1.msra.mxu0 0.0
    %4173 = vmatprep.subr.mxu0 0.0
    %4174 = vmatpush1.msra.mxu0 0.0
    %4175 = vmatprep.subr.mxu0 0.0
    %4176 = vmatpush1.msra.mxu0 0.0
    %4177 = vmatprep.subr.mxu0 0.0
    %4178 = vmatpush1.msra.mxu0 0.0
    %4179 = vmatprep.subr.mxu0 0.0
    %4180 = vmatpush1.msra.mxu0 0.0
    %4181 = vmatprep.subr.mxu0 0.0
    %4182 = vmatpush1.msra.mxu0 0.0
    %4183 = vmatprep.subr.mxu0 0.0
    %4184 = vmatpush1.msra.mxu0 0.0
    %4185 = vmatprep.subr.mxu0 0.0
    %4186 = vmatpush1.msra.mxu0 0.0
    %4187 = vmatprep.mubr.f32.mxu0 0.0
    %4188 = vmatmul.mubr.f32.gmra.mrb[0].mxu0 %v4121
    %v4189 = vpop.f32.mrb[0].mxu0
    %v4190 = vadd.f32 0.0, %v4189
    %v4191 = vpop.f32.mrb[0].mxu0
    %4192 = vdwg.mxu0
    %s4193 = scalar_lea.vmem %s5, 128
    %v4194 = vld [vmem:[%s4193] sm:$0xff]
    %v4195 = vld [vmem:[%s4193 + $0x8] sm:$0xff]
    %v4196 = vld [vmem:[%s4193 + $0x10] sm:$0xff]
    %v4197 = vld [vmem:[%s4193 + $0x18] sm:$0xff]
    %v4199 = vsel %vm1787, %v4190, 0
    %4201 = vmatprep.subr.mxu0 0.0
    %4202 = vmatpush1.msra.mxu0 %v4194
    %4203 = vmatprep.subr.mxu0 0.0
    %4204 = vmatpush1.msra.mxu0 %v4195
    %4205 = vmatprep.subr.mxu0 0.0
    %4206 = vmatpush1.msra.mxu0 %v4196
    %4207 = vmatprep.subr.mxu0 0.0
    %4208 = vmatpush1.msra.mxu0 %v4197
    %4209 = vmatprep.subr.mxu0 0.0
    %4210 = vmatpush1.msra.mxu0 0.0
    %4211 = vmatprep.subr.mxu0 0.0
    %4212 = vmatpush1.msra.mxu0 0.0
    %4213 = vmatprep.subr.mxu0 0.0
    %4214 = vmatpush1.msra.mxu0 0.0
    %4215 = vmatprep.subr.mxu0 0.0
    %4216 = vmatpush1.msra.mxu0 0.0
    %4217 = vmatprep.subr.mxu0 0.0
    %4218 = vmatpush1.msra.mxu0 0.0
    %4219 = vmatprep.subr.mxu0 0.0
    %4220 = vmatpush1.msra.mxu0 0.0
    %4221 = vmatprep.subr.mxu0 0.0
    %4222 = vmatpush1.msra.mxu0 0.0
    %4223 = vmatprep.subr.mxu0 0.0
    %4224 = vmatpush1.msra.mxu0 0.0
    %4225 = vmatprep.subr.mxu0 0.0
    %4226 = vmatpush1.msra.mxu0 0.0
    %4227 = vmatprep.subr.mxu0 0.0
    %4228 = vmatpush1.msra.mxu0 0.0
    %4229 = vmatprep.subr.mxu0 0.0
    %4230 = vmatpush1.msra.mxu0 0.0
    %4231 = vmatprep.subr.mxu0 0.0
    %4232 = vmatpush1.msra.mxu0 0.0
    %4233 = vmatprep.subr.mxu0 0.0
    %4234 = vmatpush1.msra.mxu0 0.0
    %4235 = vmatprep.subr.mxu0 0.0
    %4236 = vmatpush1.msra.mxu0 0.0
    %4237 = vmatprep.subr.mxu0 0.0
    %4238 = vmatpush1.msra.mxu0 0.0
    %4239 = vmatprep.subr.mxu0 0.0
    %4240 = vmatpush1.msra.mxu0 0.0
    %4241 = vmatprep.subr.mxu0 0.0
    %4242 = vmatpush1.msra.mxu0 0.0
    %4243 = vmatprep.subr.mxu0 0.0
    %4244 = vmatpush1.msra.mxu0 0.0
    %4245 = vmatprep.subr.mxu0 0.0
    %4246 = vmatpush1.msra.mxu0 0.0
    %4247 = vmatprep.subr.mxu0 0.0
    %4248 = vmatpush1.msra.mxu0 0.0
    %4249 = vmatprep.subr.mxu0 0.0
    %4250 = vmatpush1.msra.mxu0 0.0
    %4251 = vmatprep.subr.mxu0 0.0
    %4252 = vmatpush1.msra.mxu0 0.0
    %4253 = vmatprep.subr.mxu0 0.0
    %4254 = vmatpush1.msra.mxu0 0.0
    %4255 = vmatprep.subr.mxu0 0.0
    %4256 = vmatpush1.msra.mxu0 0.0
    %4257 = vmatprep.subr.mxu0 0.0
    %4258 = vmatpush1.msra.mxu0 0.0
    %4259 = vmatprep.subr.mxu0 0.0
    %4260 = vmatpush1.msra.mxu0 0.0
    %4261 = vmatprep.subr.mxu0 0.0
    %4262 = vmatpush1.msra.mxu0 0.0
    %4263 = vmatprep.subr.mxu0 0.0
    %4264 = vmatpush1.msra.mxu0 0.0
    %4265 = vmatprep.mubr.f32.mxu0 0.0
    %4266 = vmatmul.mubr.f32.gmra.mrb[0].mxu0 %v4199
    %v4267 = vpop.f32.mrb[0].mxu0
    %v4268 = vadd.f32 0.0, %v4267
    %v4269 = vpop.f32.mrb[0].mxu0
    %4270 = vdwg.mxu0
    %v4271 = vadd.f32 %v4117, %v4268
    %s4272 = scalar_lea.vmem %s2, 10
    %v4273 = vld [vmem:[%s4272] sm:$0x3]
    %v4275 = vsel %vm36, %v4273, 0
    %4277 = vmatprep.subr.mxu0 0.0
    %4278 = vmatpush1.msra.mxu0 %v3492
    %4279 = vmatprep.subr.mxu0 0.0
    %4280 = vmatpush1.msra.mxu0 %v3493
    %4281 = vmatprep.subr.mxu0 0.0
    %4282 = vmatpush1.msra.mxu0 %v3506
    %4283 = vmatprep.subr.mxu0 0.0
    %4284 = vmatpush1.msra.mxu0 0.0
    %4285 = vmatprep.subr.mxu0 0.0
    %4286 = vmatpush1.msra.mxu0 0.0
    %4287 = vmatprep.subr.mxu0 0.0
    %4288 = vmatpush1.msra.mxu0 0.0
    %4289 = vmatprep.subr.mxu0 0.0
    %4290 = vmatpush1.msra.mxu0 0.0
    %4291 = vmatprep.subr.mxu0 0.0
    %4292 = vmatpush1.msra.mxu0 0.0
    %4293 = vmatprep.subr.mxu0 0.0
    %4294 = vmatpush1.msra.mxu0 0.0
    %4295 = vmatprep.subr.mxu0 0.0
    %4296 = vmatpush1.msra.mxu0 0.0
    %4297 = vmatprep.subr.mxu0 0.0
    %4298 = vmatpush1.msra.mxu0 0.0
    %4299 = vmatprep.subr.mxu0 0.0
    %4300 = vmatpush1.msra.mxu0 0.0
    %4301 = vmatprep.subr.mxu0 0.0
    %4302 = vmatpush1.msra.mxu0 0.0
    %4303 = vmatprep.subr.mxu0 0.0
    %4304 = vmatpush1.msra.mxu0 0.0
    %4305 = vmatprep.subr.mxu0 0.0
    %4306 = vmatpush1.msra.mxu0 0.0
    %4307 = vmatprep.subr.mxu0 0.0
    %4308 = vmatpush1.msra.mxu0 0.0
    %4309 = vmatprep.subr.mxu0 0.0
    %4310 = vmatpush1.msra.mxu0 0.0
    %4311 = vmatprep.subr.mxu0 0.0
    %4312 = vmatpush1.msra.mxu0 0.0
    %4313 = vmatprep.subr.mxu0 0.0
    %4314 = vmatpush1.msra.mxu0 0.0
    %4315 = vmatprep.subr.mxu0 0.0
    %4316 = vmatpush1.msra.mxu0 0.0
    %4317 = vmatprep.subr.mxu0 0.0
    %4318 = vmatpush1.msra.mxu0 0.0
    %4319 = vmatprep.subr.mxu0 0.0
    %4320 = vmatpush1.msra.mxu0 0.0
    %4321 = vmatprep.subr.mxu0 0.0
    %4322 = vmatpush1.msra.mxu0 0.0
    %4323 = vmatprep.subr.mxu0 0.0
    %4324 = vmatpush1.msra.mxu0 0.0
    %4325 = vmatprep.subr.mxu0 0.0
    %4326 = vmatpush1.msra.mxu0 0.0
    %4327 = vmatprep.subr.mxu0 0.0
    %4328 = vmatpush1.msra.mxu0 0.0
    %4329 = vmatprep.subr.mxu0 0.0
    %4330 = vmatpush1.msra.mxu0 0.0
    %4331 = vmatprep.subr.mxu0 0.0
    %4332 = vmatpush1.msra.mxu0 0.0
    %4333 = vmatprep.subr.mxu0 0.0
    %4334 = vmatpush1.msra.mxu0 0.0
    %4335 = vmatprep.subr.mxu0 0.0
    %4336 = vmatpush1.msra.mxu0 0.0
    %4337 = vmatprep.subr.mxu0 0.0
    %4338 = vmatpush1.msra.mxu0 0.0
    %4339 = vmatprep.subr.mxu0 0.0
    %4340 = vmatpush1.msra.mxu0 0.0
    %4341 = vmatprep.mubr.f32.mxu0 0.0
    %4342 = vmatmul.mubr.f32.gmra.mrb[0].mxu0 %v4275
    %v4343 = vpop.f32.mrb[0].mxu0
    %v4344 = vadd.f32 0.0, %v4343
    %v4345 = vpop.f32.mrb[0].mxu0
    %4346 = vdwg.mxu0
    %s4347 = scalar_lea.vmem %s5, 160
    %v4348 = vld [vmem:[%s4347] sm:$0xff]
    %v4349 = vld [vmem:[%s4347 + $0x8] sm:$0xff]
    %v4350 = vld [vmem:[%s4347 + $0x10] sm:$0xff]
    %v4351 = vld [vmem:[%s4347 + $0x18] sm:$0xff]
    %v4353 = vsel %vm1787, %v4344, 0
    %4355 = vmatprep.subr.mxu0 0.0
    %4356 = vmatpush1.msra.mxu0 %v4348
    %4357 = vmatprep.subr.mxu0 0.0
    %4358 = vmatpush1.msra.mxu0 %v4349
    %4359 = vmatprep.subr.mxu0 0.0
    %4360 = vmatpush1.msra.mxu0 %v4350
    %4361 = vmatprep.subr.mxu0 0.0
    %4362 = vmatpush1.msra.mxu0 %v4351
    %4363 = vmatprep.subr.mxu0 0.0
    %4364 = vmatpush1.msra.mxu0 0.0
    %4365 = vmatprep.subr.mxu0 0.0
    %4366 = vmatpush1.msra.mxu0 0.0
    %4367 = vmatprep.subr.mxu0 0.0
    %4368 = vmatpush1.msra.mxu0 0.0
    %4369 = vmatprep.subr.mxu0 0.0
    %4370 = vmatpush1.msra.mxu0 0.0
    %4371 = vmatprep.subr.mxu0 0.0
    %4372 = vmatpush1.msra.mxu0 0.0
    %4373 = vmatprep.subr.mxu0 0.0
    %4374 = vmatpush1.msra.mxu0 0.0
    %4375 = vmatprep.subr.mxu0 0.0
    %4376 = vmatpush1.msra.mxu0 0.0
    %4377 = vmatprep.subr.mxu0 0.0
    %4378 = vmatpush1.msra.mxu0 0.0
    %4379 = vmatprep.subr.mxu0 0.0
    %4380 = vmatpush1.msra.mxu0 0.0
    %4381 = vmatprep.subr.mxu0 0.0
    %4382 = vmatpush1.msra.mxu0 0.0
    %4383 = vmatprep.subr.mxu0 0.0
    %4384 = vmatpush1.msra.mxu0 0.0
    %4385 = vmatprep.subr.mxu0 0.0
    %4386 = vmatpush1.msra.mxu0 0.0
    %4387 = vmatprep.subr.mxu0 0.0
    %4388 = vmatpush1.msra.mxu0 0.0
    %4389 = vmatprep.subr.mxu0 0.0
    %4390 = vmatpush1.msra.mxu0 0.0
    %4391 = vmatprep.subr.mxu0 0.0
    %4392 = vmatpush1.msra.mxu0 0.0
    %4393 = vmatprep.subr.mxu0 0.0
    %4394 = vmatpush1.msra.mxu0 0.0
    %4395 = vmatprep.subr.mxu0 0.0
    %4396 = vmatpush1.msra.mxu0 0.0
    %4397 = vmatprep.subr.mxu0 0.0
    %4398 = vmatpush1.msra.mxu0 0.0
    %4399 = vmatprep.subr.mxu0 0.0
    %4400 = vmatpush1.msra.mxu0 0.0
    %4401 = vmatprep.subr.mxu0 0.0
    %4402 = vmatpush1.msra.mxu0 0.0
    %4403 = vmatprep.subr.mxu0 0.0
    %4404 = vmatpush1.msra.mxu0 0.0
    %4405 = vmatprep.subr.mxu0 0.0
    %4406 = vmatpush1.msra.mxu0 0.0
    %4407 = vmatprep.subr.mxu0 0.0
    %4408 = vmatpush1.msra.mxu0 0.0
    %4409 = vmatprep.subr.mxu0 0.0
    %4410 = vmatpush1.msra.mxu0 0.0
    %4411 = vmatprep.subr.mxu0 0.0
    %4412 = vmatpush1.msra.mxu0 0.0
    %4413 = vmatprep.subr.mxu0 0.0
    %4414 = vmatpush1.msra.mxu0 0.0
    %4415 = vmatprep.subr.mxu0 0.0
    %4416 = vmatpush1.msra.mxu0 0.0
    %4417 = vmatprep.subr.mxu0 0.0
    %4418 = vmatpush1.msra.mxu0 0.0
    %4419 = vmatprep.mubr.f32.mxu0 0.0
    %4420 = vmatmul.mubr.f32.gmra.mrb[0].mxu0 %v4353
    %v4421 = vpop.f32.mrb[0].mxu0
    %v4422 = vadd.f32 0.0, %v4421
    %v4423 = vpop.f32.mrb[0].mxu0
    %4424 = vdwg.mxu0
    %v4425 = vadd.f32 %v4271, %v4422
    %s4426 = scalar_lea.vmem %s2, 12
    %v4427 = vld [vmem:[%s4426] sm:$0x3]
    %v4429 = vsel %vm36, %v4427, 0
    %4431 = vmatprep.subr.mxu0 0.0
    %4432 = vmatpush1.msra.mxu0 %v3492
    %4433 = vmatprep.subr.mxu0 0.0
    %4434 = vmatpush1.msra.mxu0 %v3493
    %4435 = vmatprep.subr.mxu0 0.0
    %4436 = vmatpush1.msra.mxu0 %v3506
    %4437 = vmatprep.subr.mxu0 0.0
    %4438 = vmatpush1.msra.mxu0 0.0
    %4439 = vmatprep.subr.mxu0 0.0
    %4440 = vmatpush1.msra.mxu0 0.0
    %4441 = vmatprep.subr.mxu0 0.0
    %4442 = vmatpush1.msra.mxu0 0.0
    %4443 = vmatprep.subr.mxu0 0.0
    %4444 = vmatpush1.msra.mxu0 0.0
    %4445 = vmatprep.subr.mxu0 0.0
    %4446 = vmatpush1.msra.mxu0 0.0
    %4447 = vmatprep.subr.mxu0 0.0
    %4448 = vmatpush1.msra.mxu0 0.0
    %4449 = vmatprep.subr.mxu0 0.0
    %4450 = vmatpush1.msra.mxu0 0.0
    %4451 = vmatprep.subr.mxu0 0.0
    %4452 = vmatpush1.msra.mxu0 0.0
    %4453 = vmatprep.subr.mxu0 0.0
    %4454 = vmatpush1.msra.mxu0 0.0
    %4455 = vmatprep.subr.mxu0 0.0
    %4456 = vmatpush1.msra.mxu0 0.0
    %4457 = vmatprep.subr.mxu0 0.0
    %4458 = vmatpush1.msra.mxu0 0.0
    %4459 = vmatprep.subr.mxu0 0.0
    %4460 = vmatpush1.msra.mxu0 0.0
    %4461 = vmatprep.subr.mxu0 0.0
    %4462 = vmatpush1.msra.mxu0 0.0
    %4463 = vmatprep.subr.mxu0 0.0
    %4464 = vmatpush1.msra.mxu0 0.0
    %4465 = vmatprep.subr.mxu0 0.0
    %4466 = vmatpush1.msra.mxu0 0.0
    %4467 = vmatprep.subr.mxu0 0.0
    %4468 = vmatpush1.msra.mxu0 0.0
    %4469 = vmatprep.subr.mxu0 0.0
    %4470 = vmatpush1.msra.mxu0 0.0
    %4471 = vmatprep.subr.mxu0 0.0
    %4472 = vmatpush1.msra.mxu0 0.0
    %4473 = vmatprep.subr.mxu0 0.0
    %4474 = vmatpush1.msra.mxu0 0.0
    %4475 = vmatprep.subr.mxu0 0.0
    %4476 = vmatpush1.msra.mxu0 0.0
    %4477 = vmatprep.subr.mxu0 0.0
    %4478 = vmatpush1.msra.mxu0 0.0
    %4479 = vmatprep.subr.mxu0 0.0
    %4480 = vmatpush1.msra.mxu0 0.0
    %4481 = vmatprep.subr.mxu0 0.0
    %4482 = vmatpush1.msra.mxu0 0.0
    %4483 = vmatprep.subr.mxu0 0.0
    %4484 = vmatpush1.msra.mxu0 0.0
    %4485 = vmatprep.subr.mxu0 0.0
    %4486 = vmatpush1.msra.mxu0 0.0
    %4487 = vmatprep.subr.mxu0 0.0
    %4488 = vmatpush1.msra.mxu0 0.0
    %4489 = vmatprep.subr.mxu0 0.0
    %4490 = vmatpush1.msra.mxu0 0.0
    %4491 = vmatprep.subr.mxu0 0.0
    %4492 = vmatpush1.msra.mxu0 0.0
    %4493 = vmatprep.subr.mxu0 0.0
    %4494 = vmatpush1.msra.mxu0 0.0
    %4495 = vmatprep.mubr.f32.mxu0 0.0
    %4496 = vmatmul.mubr.f32.gmra.mrb[0].mxu0 %v4429
    %v4497 = vpop.f32.mrb[0].mxu0
    %v4498 = vadd.f32 0.0, %v4497
    %v4499 = vpop.f32.mrb[0].mxu0
    %4500 = vdwg.mxu0
    %s4501 = scalar_lea.vmem %s5, 192
    %v4502 = vld [vmem:[%s4501] sm:$0xff]
    %v4503 = vld [vmem:[%s4501 + $0x8] sm:$0xff]
    %v4504 = vld [vmem:[%s4501 + $0x10] sm:$0xff]
    %v4505 = vld [vmem:[%s4501 + $0x18] sm:$0xff]
    %v4507 = vsel %vm1787, %v4498, 0
    %4509 = vmatprep.subr.mxu0 0.0
    %4510 = vmatpush1.msra.mxu0 %v4502
    %4511 = vmatprep.subr.mxu0 0.0
    %4512 = vmatpush1.msra.mxu0 %v4503
    %4513 = vmatprep.subr.mxu0 0.0
    %4514 = vmatpush1.msra.mxu0 %v4504
    %4515 = vmatprep.subr.mxu0 0.0
    %4516 = vmatpush1.msra.mxu0 %v4505
    %4517 = vmatprep.subr.mxu0 0.0
    %4518 = vmatpush1.msra.mxu0 0.0
    %4519 = vmatprep.subr.mxu0 0.0
    %4520 = vmatpush1.msra.mxu0 0.0
    %4521 = vmatprep.subr.mxu0 0.0
    %4522 = vmatpush1.msra.mxu0 0.0
    %4523 = vmatprep.subr.mxu0 0.0
    %4524 = vmatpush1.msra.mxu0 0.0
    %4525 = vmatprep.subr.mxu0 0.0
    %4526 = vmatpush1.msra.mxu0 0.0
    %4527 = vmatprep.subr.mxu0 0.0
    %4528 = vmatpush1.msra.mxu0 0.0
    %4529 = vmatprep.subr.mxu0 0.0
    %4530 = vmatpush1.msra.mxu0 0.0
    %4531 = vmatprep.subr.mxu0 0.0
    %4532 = vmatpush1.msra.mxu0 0.0
    %4533 = vmatprep.subr.mxu0 0.0
    %4534 = vmatpush1.msra.mxu0 0.0
    %4535 = vmatprep.subr.mxu0 0.0
    %4536 = vmatpush1.msra.mxu0 0.0
    %4537 = vmatprep.subr.mxu0 0.0
    %4538 = vmatpush1.msra.mxu0 0.0
    %4539 = vmatprep.subr.mxu0 0.0
    %4540 = vmatpush1.msra.mxu0 0.0
    %4541 = vmatprep.subr.mxu0 0.0
    %4542 = vmatpush1.msra.mxu0 0.0
    %4543 = vmatprep.subr.mxu0 0.0
    %4544 = vmatpush1.msra.mxu0 0.0
    %4545 = vmatprep.subr.mxu0 0.0
    %4546 = vmatpush1.msra.mxu0 0.0
    %4547 = vmatprep.subr.mxu0 0.0
    %4548 = vmatpush1.msra.mxu0 0.0
    %4549 = vmatprep.subr.mxu0 0.0
    %4550 = vmatpush1.msra.mxu0 0.0
    %4551 = vmatprep.subr.mxu0 0.0
    %4552 = vmatpush1.msra.mxu0 0.0
    %4553 = vmatprep.subr.mxu0 0.0
    %4554 = vmatpush1.msra.mxu0 0.0
    %4555 = vmatprep.subr.mxu0 0.0
    %4556 = vmatpush1.msra.mxu0 0.0
    %4557 = vmatprep.subr.mxu0 0.0
    %4558 = vmatpush1.msra.mxu0 0.0
    %4559 = vmatprep.subr.mxu0 0.0
    %4560 = vmatpush1.msra.mxu0 0.0
    %4561 = vmatprep.subr.mxu0 0.0
    %4562 = vmatpush1.msra.mxu0 0.0
    %4563 = vmatprep.subr.mxu0 0.0
    %4564 = vmatpush1.msra.mxu0 0.0
    %4565 = vmatprep.subr.mxu0 0.0
    %4566 = vmatpush1.msra.mxu0 0.0
    %4567 = vmatprep.subr.mxu0 0.0
    %4568 = vmatpush1.msra.mxu0 0.0
    %4569 = vmatprep.subr.mxu0 0.0
    %4570 = vmatpush1.msra.mxu0 0.0
    %4571 = vmatprep.subr.mxu0 0.0
    %4572 = vmatpush1.msra.mxu0 0.0
    %4573 = vmatprep.mubr.f32.mxu0 0.0
    %4574 = vmatmul.mubr.f32.gmra.mrb[0].mxu0 %v4507
    %v4575 = vpop.f32.mrb[0].mxu0
    %v4576 = vadd.f32 0.0, %v4575
    %v4577 = vpop.f32.mrb[0].mxu0
    %4578 = vdwg.mxu0
    %v4579 = vadd.f32 %v4425, %v4576
    %s4580 = scalar_lea.vmem %s2, 14
    %v4581 = vld [vmem:[%s4580] sm:$0x3]
    %v4583 = vsel %vm36, %v4581, 0
    %4585 = vmatprep.subr.mxu0 0.0
    %4586 = vmatpush1.msra.mxu0 %v3492
    %4587 = vmatprep.subr.mxu0 0.0
    %4588 = vmatpush1.msra.mxu0 %v3493
    %4589 = vmatprep.subr.mxu0 0.0
    %4590 = vmatpush1.msra.mxu0 %v3506
    %4591 = vmatprep.subr.mxu0 0.0
    %4592 = vmatpush1.msra.mxu0 0.0
    %4593 = vmatprep.subr.mxu0 0.0
    %4594 = vmatpush1.msra.mxu0 0.0
    %4595 = vmatprep.subr.mxu0 0.0
    %4596 = vmatpush1.msra.mxu0 0.0
    %4597 = vmatprep.subr.mxu0 0.0
    %4598 = vmatpush1.msra.mxu0 0.0
    %4599 = vmatprep.subr.mxu0 0.0
    %4600 = vmatpush1.msra.mxu0 0.0
    %4601 = vmatprep.subr.mxu0 0.0
    %4602 = vmatpush1.msra.mxu0 0.0
    %4603 = vmatprep.subr.mxu0 0.0
    %4604 = vmatpush1.msra.mxu0 0.0
    %4605 = vmatprep.subr.mxu0 0.0
    %4606 = vmatpush1.msra.mxu0 0.0
    %4607 = vmatprep.subr.mxu0 0.0
    %4608 = vmatpush1.msra.mxu0 0.0
    %4609 = vmatprep.subr.mxu0 0.0
    %4610 = vmatpush1.msra.mxu0 0.0
    %4611 = vmatprep.subr.mxu0 0.0
    %4612 = vmatpush1.msra.mxu0 0.0
    %4613 = vmatprep.subr.mxu0 0.0
    %4614 = vmatpush1.msra.mxu0 0.0
    %4615 = vmatprep.subr.mxu0 0.0
    %4616 = vmatpush1.msra.mxu0 0.0
    %4617 = vmatprep.subr.mxu0 0.0
    %4618 = vmatpush1.msra.mxu0 0.0
    %4619 = vmatprep.subr.mxu0 0.0
    %4620 = vmatpush1.msra.mxu0 0.0
    %4621 = vmatprep.subr.mxu0 0.0
    %4622 = vmatpush1.msra.mxu0 0.0
    %4623 = vmatprep.subr.mxu0 0.0
    %4624 = vmatpush1.msra.mxu0 0.0
    %4625 = vmatprep.subr.mxu0 0.0
    %4626 = vmatpush1.msra.mxu0 0.0
    %4627 = vmatprep.subr.mxu0 0.0
    %4628 = vmatpush1.msra.mxu0 0.0
    %4629 = vmatprep.subr.mxu0 0.0
    %4630 = vmatpush1.msra.mxu0 0.0
    %4631 = vmatprep.subr.mxu0 0.0
    %4632 = vmatpush1.msra.mxu0 0.0
    %4633 = vmatprep.subr.mxu0 0.0
    %4634 = vmatpush1.msra.mxu0 0.0
    %4635 = vmatprep.subr.mxu0 0.0
    %4636 = vmatpush1.msra.mxu0 0.0
    %4637 = vmatprep.subr.mxu0 0.0
    %4638 = vmatpush1.msra.mxu0 0.0
    %4639 = vmatprep.subr.mxu0 0.0
    %4640 = vmatpush1.msra.mxu0 0.0
    %4641 = vmatprep.subr.mxu0 0.0
    %4642 = vmatpush1.msra.mxu0 0.0
    %4643 = vmatprep.subr.mxu0 0.0
    %4644 = vmatpush1.msra.mxu0 0.0
    %4645 = vmatprep.subr.mxu0 0.0
    %4646 = vmatpush1.msra.mxu0 0.0
    %4647 = vmatprep.subr.mxu0 0.0
    %4648 = vmatpush1.msra.mxu0 0.0
    %4649 = vmatprep.mubr.f32.mxu0 0.0
    %4650 = vmatmul.mubr.f32.gmra.mrb[0].mxu0 %v4583
    %v4651 = vpop.f32.mrb[0].mxu0
    %v4652 = vadd.f32 0.0, %v4651
    %v4653 = vpop.f32.mrb[0].mxu0
    %4654 = vdwg.mxu0
    %s4655 = scalar_lea.vmem %s5, 224
    %v4656 = vld [vmem:[%s4655] sm:$0xff]
    %v4657 = vld [vmem:[%s4655 + $0x8] sm:$0xff]
    %v4658 = vld [vmem:[%s4655 + $0x10] sm:$0xff]
    %v4659 = vld [vmem:[%s4655 + $0x18] sm:$0xff]
    %v4661 = vsel %vm1787, %v4652, 0
    %4663 = vmatprep.subr.mxu0 0.0
    %4664 = vmatpush1.msra.mxu0 %v4656
    %4665 = vmatprep.subr.mxu0 0.0
    %4666 = vmatpush1.msra.mxu0 %v4657
    %4667 = vmatprep.subr.mxu0 0.0
    %4668 = vmatpush1.msra.mxu0 %v4658
    %4669 = vmatprep.subr.mxu0 0.0
    %4670 = vmatpush1.msra.mxu0 %v4659
    %4671 = vmatprep.subr.mxu0 0.0
    %4672 = vmatpush1.msra.mxu0 0.0
    %4673 = vmatprep.subr.mxu0 0.0
    %4674 = vmatpush1.msra.mxu0 0.0
    %4675 = vmatprep.subr.mxu0 0.0
    %4676 = vmatpush1.msra.mxu0 0.0
    %4677 = vmatprep.subr.mxu0 0.0
    %4678 = vmatpush1.msra.mxu0 0.0
    %4679 = vmatprep.subr.mxu0 0.0
    %4680 = vmatpush1.msra.mxu0 0.0
    %4681 = vmatprep.subr.mxu0 0.0
    %4682 = vmatpush1.msra.mxu0 0.0
    %4683 = vmatprep.subr.mxu0 0.0
    %4684 = vmatpush1.msra.mxu0 0.0
    %4685 = vmatprep.subr.mxu0 0.0
    %4686 = vmatpush1.msra.mxu0 0.0
    %4687 = vmatprep.subr.mxu0 0.0
    %4688 = vmatpush1.msra.mxu0 0.0
    %4689 = vmatprep.subr.mxu0 0.0
    %4690 = vmatpush1.msra.mxu0 0.0
    %4691 = vmatprep.subr.mxu0 0.0
    %4692 = vmatpush1.msra.mxu0 0.0
    %4693 = vmatprep.subr.mxu0 0.0
    %4694 = vmatpush1.msra.mxu0 0.0
    %4695 = vmatprep.subr.mxu0 0.0
    %4696 = vmatpush1.msra.mxu0 0.0
    %4697 = vmatprep.subr.mxu0 0.0
    %4698 = vmatpush1.msra.mxu0 0.0
    %4699 = vmatprep.subr.mxu0 0.0
    %4700 = vmatpush1.msra.mxu0 0.0
    %4701 = vmatprep.subr.mxu0 0.0
    %4702 = vmatpush1.msra.mxu0 0.0
    %4703 = vmatprep.subr.mxu0 0.0
    %4704 = vmatpush1.msra.mxu0 0.0
    %4705 = vmatprep.subr.mxu0 0.0
    %4706 = vmatpush1.msra.mxu0 0.0
    %4707 = vmatprep.subr.mxu0 0.0
    %4708 = vmatpush1.msra.mxu0 0.0
    %4709 = vmatprep.subr.mxu0 0.0
    %4710 = vmatpush1.msra.mxu0 0.0
    %4711 = vmatprep.subr.mxu0 0.0
    %4712 = vmatpush1.msra.mxu0 0.0
    %4713 = vmatprep.subr.mxu0 0.0
    %4714 = vmatpush1.msra.mxu0 0.0
    %4715 = vmatprep.subr.mxu0 0.0
    %4716 = vmatpush1.msra.mxu0 0.0
    %4717 = vmatprep.subr.mxu0 0.0
    %4718 = vmatpush1.msra.mxu0 0.0
    %4719 = vmatprep.subr.mxu0 0.0
    %4720 = vmatpush1.msra.mxu0 0.0
    %4721 = vmatprep.subr.mxu0 0.0
    %4722 = vmatpush1.msra.mxu0 0.0
    %4723 = vmatprep.subr.mxu0 0.0
    %4724 = vmatpush1.msra.mxu0 0.0
    %4725 = vmatprep.subr.mxu0 0.0
    %4726 = vmatpush1.msra.mxu0 0.0
    %4727 = vmatprep.mubr.f32.mxu0 0.0
    %4728 = vmatmul.mubr.f32.gmra.mrb[0].mxu0 %v4661
    %v4729 = vpop.f32.mrb[0].mxu0
    %v4730 = vadd.f32 0.0, %v4729
    %v4731 = vpop.f32.mrb[0].mxu0
    %4732 = vdwg.mxu0
    %v4733 = vadd.f32 %v4579, %v4730
    %s4734 = scalar_lea.vmem %s2, 16
    %v4735 = vld [vmem:[%s4734] sm:$0x3]
    %v4737 = vsel %vm36, %v4735, 0
    %4739 = vmatprep.subr.mxu0 0.0
    %4740 = vmatpush1.msra.mxu0 %v3492
    %4741 = vmatprep.subr.mxu0 0.0
    %4742 = vmatpush1.msra.mxu0 %v3493
    %4743 = vmatprep.subr.mxu0 0.0
    %4744 = vmatpush1.msra.mxu0 %v3506
    %4745 = vmatprep.subr.mxu0 0.0
    %4746 = vmatpush1.msra.mxu0 0.0
    %4747 = vmatprep.subr.mxu0 0.0
    %4748 = vmatpush1.msra.mxu0 0.0
    %4749 = vmatprep.subr.mxu0 0.0
    %4750 = vmatpush1.msra.mxu0 0.0
    %4751 = vmatprep.subr.mxu0 0.0
    %4752 = vmatpush1.msra.mxu0 0.0
    %4753 = vmatprep.subr.mxu0 0.0
    %4754 = vmatpush1.msra.mxu0 0.0
    %4755 = vmatprep.subr.mxu0 0.0
    %4756 = vmatpush1.msra.mxu0 0.0
    %4757 = vmatprep.subr.mxu0 0.0
    %4758 = vmatpush1.msra.mxu0 0.0
    %4759 = vmatprep.subr.mxu0 0.0
    %4760 = vmatpush1.msra.mxu0 0.0
    %4761 = vmatprep.subr.mxu0 0.0
    %4762 = vmatpush1.msra.mxu0 0.0
    %4763 = vmatprep.subr.mxu0 0.0
    %4764 = vmatpush1.msra.mxu0 0.0
    %4765 = vmatprep.subr.mxu0 0.0
    %4766 = vmatpush1.msra.mxu0 0.0
    %4767 = vmatprep.subr.mxu0 0.0
    %4768 = vmatpush1.msra.mxu0 0.0
    %4769 = vmatprep.subr.mxu0 0.0
    %4770 = vmatpush1.msra.mxu0 0.0
    %4771 = vmatprep.subr.mxu0 0.0
    %4772 = vmatpush1.msra.mxu0 0.0
    %4773 = vmatprep.subr.mxu0 0.0
    %4774 = vmatpush1.msra.mxu0 0.0
    %4775 = vmatprep.subr.mxu0 0.0
    %4776 = vmatpush1.msra.mxu0 0.0
    %4777 = vmatprep.subr.mxu0 0.0
    %4778 = vmatpush1.msra.mxu0 0.0
    %4779 = vmatprep.subr.mxu0 0.0
    %4780 = vmatpush1.msra.mxu0 0.0
    %4781 = vmatprep.subr.mxu0 0.0
    %4782 = vmatpush1.msra.mxu0 0.0
    %4783 = vmatprep.subr.mxu0 0.0
    %4784 = vmatpush1.msra.mxu0 0.0
    %4785 = vmatprep.subr.mxu0 0.0
    %4786 = vmatpush1.msra.mxu0 0.0
    %4787 = vmatprep.subr.mxu0 0.0
    %4788 = vmatpush1.msra.mxu0 0.0
    %4789 = vmatprep.subr.mxu0 0.0
    %4790 = vmatpush1.msra.mxu0 0.0
    %4791 = vmatprep.subr.mxu0 0.0
    %4792 = vmatpush1.msra.mxu0 0.0
    %4793 = vmatprep.subr.mxu0 0.0
    %4794 = vmatpush1.msra.mxu0 0.0
    %4795 = vmatprep.subr.mxu0 0.0
    %4796 = vmatpush1.msra.mxu0 0.0
    %4797 = vmatprep.subr.mxu0 0.0
    %4798 = vmatpush1.msra.mxu0 0.0
    %4799 = vmatprep.subr.mxu0 0.0
    %4800 = vmatpush1.msra.mxu0 0.0
    %4801 = vmatprep.subr.mxu0 0.0
    %4802 = vmatpush1.msra.mxu0 0.0
    %4803 = vmatprep.mubr.f32.mxu0 0.0
    %4804 = vmatmul.mubr.f32.gmra.mrb[0].mxu0 %v4737
    %v4805 = vpop.f32.mrb[0].mxu0
    %v4806 = vadd.f32 0.0, %v4805
    %v4807 = vpop.f32.mrb[0].mxu0
    %4808 = vdwg.mxu0
    %s4809 = scalar_lea.vmem %s5, 256
    %v4810 = vld [vmem:[%s4809] sm:$0xff]
    %v4811 = vld [vmem:[%s4809 + $0x8] sm:$0xff]
    %v4812 = vld [vmem:[%s4809 + $0x10] sm:$0xff]
    %v4813 = vld [vmem:[%s4809 + $0x18] sm:$0xff]
    %v4815 = vsel %vm1787, %v4806, 0
    %4817 = vmatprep.subr.mxu0 0.0
    %4818 = vmatpush1.msra.mxu0 %v4810
    %4819 = vmatprep.subr.mxu0 0.0
    %4820 = vmatpush1.msra.mxu0 %v4811
    %4821 = vmatprep.subr.mxu0 0.0
    %4822 = vmatpush1.msra.mxu0 %v4812
    %4823 = vmatprep.subr.mxu0 0.0
    %4824 = vmatpush1.msra.mxu0 %v4813
    %4825 = vmatprep.subr.mxu0 0.0
    %4826 = vmatpush1.msra.mxu0 0.0
    %4827 = vmatprep.subr.mxu0 0.0
    %4828 = vmatpush1.msra.mxu0 0.0
    %4829 = vmatprep.subr.mxu0 0.0
    %4830 = vmatpush1.msra.mxu0 0.0
    %4831 = vmatprep.subr.mxu0 0.0
    %4832 = vmatpush1.msra.mxu0 0.0
    %4833 = vmatprep.subr.mxu0 0.0
    %4834 = vmatpush1.msra.mxu0 0.0
    %4835 = vmatprep.subr.mxu0 0.0
    %4836 = vmatpush1.msra.mxu0 0.0
    %4837 = vmatprep.subr.mxu0 0.0
    %4838 = vmatpush1.msra.mxu0 0.0
    %4839 = vmatprep.subr.mxu0 0.0
    %4840 = vmatpush1.msra.mxu0 0.0
    %4841 = vmatprep.subr.mxu0 0.0
    %4842 = vmatpush1.msra.mxu0 0.0
    %4843 = vmatprep.subr.mxu0 0.0
    %4844 = vmatpush1.msra.mxu0 0.0
    %4845 = vmatprep.subr.mxu0 0.0
    %4846 = vmatpush1.msra.mxu0 0.0
    %4847 = vmatprep.subr.mxu0 0.0
    %4848 = vmatpush1.msra.mxu0 0.0
    %4849 = vmatprep.subr.mxu0 0.0
    %4850 = vmatpush1.msra.mxu0 0.0
    %4851 = vmatprep.subr.mxu0 0.0
    %4852 = vmatpush1.msra.mxu0 0.0
    %4853 = vmatprep.subr.mxu0 0.0
    %4854 = vmatpush1.msra.mxu0 0.0
    %4855 = vmatprep.subr.mxu0 0.0
    %4856 = vmatpush1.msra.mxu0 0.0
    %4857 = vmatprep.subr.mxu0 0.0
    %4858 = vmatpush1.msra.mxu0 0.0
    %4859 = vmatprep.subr.mxu0 0.0
    %4860 = vmatpush1.msra.mxu0 0.0
    %4861 = vmatprep.subr.mxu0 0.0
    %4862 = vmatpush1.msra.mxu0 0.0
    %4863 = vmatprep.subr.mxu0 0.0
    %4864 = vmatpush1.msra.mxu0 0.0
    %4865 = vmatprep.subr.mxu0 0.0
    %4866 = vmatpush1.msra.mxu0 0.0
    %4867 = vmatprep.subr.mxu0 0.0
    %4868 = vmatpush1.msra.mxu0 0.0
    %4869 = vmatprep.subr.mxu0 0.0
    %4870 = vmatpush1.msra.mxu0 0.0
    %4871 = vmatprep.subr.mxu0 0.0
    %4872 = vmatpush1.msra.mxu0 0.0
    %4873 = vmatprep.subr.mxu0 0.0
    %4874 = vmatpush1.msra.mxu0 0.0
    %4875 = vmatprep.subr.mxu0 0.0
    %4876 = vmatpush1.msra.mxu0 0.0
    %4877 = vmatprep.subr.mxu0 0.0
    %4878 = vmatpush1.msra.mxu0 0.0
    %4879 = vmatprep.subr.mxu0 0.0
    %4880 = vmatpush1.msra.mxu0 0.0
    %4881 = vmatprep.mubr.f32.mxu0 0.0
    %4882 = vmatmul.mubr.f32.gmra.mrb[0].mxu0 %v4815
    %v4883 = vpop.f32.mrb[0].mxu0
    %v4884 = vadd.f32 0.0, %v4883
    %v4885 = vpop.f32.mrb[0].mxu0
    %4886 = vdwg.mxu0
    %v4887 = vadd.f32 %v4733, %v4884
    %vm4888 = vcmask 9216
    %v4889 = vsel %vm4888, %v4887, -inf
    %4890 = vmax.xlane.f32.xlu0 %v4889
    %v4891 = vpop.xlane.xlu0 %4890
    %v4892 = vsub.f32 %v4887, %v4891
    %v4893 = vmul.f32 %v4892, 1.442695
    %v4894 = vpow.pop %v4893
    %v4895 = vsel %vm4888, %v4894, 0.0
    %4896 = vadd.xlane.f32.xlu0 %v4895
    %v4897 = vpop.xlane.xlu0 %4896
    %v4898 = vlog2.pop %v4897
    %v4899 = vmul.f32 %v4898, 0.6931472
    %v4900 = vadd.f32 %v4891, %v4899
    %v4901 = vsub.f32 %v4887, %v4900
    %4902 = vst.msk [vmem:[#allocation2] sm:$0x3] %vm4888, %v4901
    // Predicated region
    $region30: #{dann_conv_source_discriminator_forward.1} parent=1 // pred_check
      _
    $region31: #{dann_conv_source_discriminator_forward.1} parent=1 // pred_check_branch
      %4904 = sbr.rel (0) target = $region33
    $region32: #{dann_conv_source_discriminator_forward.1} parent=1 // pred_region
      %s4906 = ssub.s32 32, 32
      %4907 = vsyncadd [#allocation3], %s4906
      %s4909 = sshll.u32 [#allocation2], 4
      %s4910 = int_to_ptr.vmem [resolvable:$true] %s4909
      %4912 = dma.vmem_to_hbm [thread:$0]  %s4910, 32, %s7, [#allocation3]
    $region33: #{dann_conv_source_discriminator_forward.1} parent=1 // pred_fallthru
      _
    // Predicated region
    $region34: #{dann_conv_source_discriminator_forward.1} parent=1 // pred_check
      _
    $region35: #{dann_conv_source_discriminator_forward.1} parent=1 // pred_check_branch
      %4914 = sbr.rel (0) target = $region37
    $region36: #{dann_conv_source_discriminator_forward.1} parent=1 // pred_region
      %4915 = dma.done [#allocation3], 32
    $region37: #{dann_conv_source_discriminator_forward.1} parent=1 // pred_fallthru
      _
    %4916 = vsyncpa [#allocation3], 1

</llo_original>
